<compile_context>
chip_gen: v6e
topology: v6e:2x2x1
jax: 0.10.0
libtpu: 0.0.40
codegen_flags: <defaults>
</compile_context>

<pallas_src>
import jax
import jax.numpy as jnp
from jax.experimental import pallas as pl
from jax.experimental.pallas import tpu as pltpu

# ---- small, TPU-friendly problem sizes (128-lane embed dim) -----------------
B, N, D = 2, 16, 128          # batch, tokens, hidden_size (== style/content embed)
NUM_HEADS = 4
HEAD_DIM = D // NUM_HEADS
MLP_HIDDEN = 4 * D            # block MLP and FeedForward hidden = 4 * emb
BN = B * N                    # tokens per stream
T = 2 * BN                    # stacked slab rows (style half + content half)
NSEQ = 2 * B                  # independent attention sequences inside the slab

# rows of the packed small-parameter matrix (all (D,)-sized vectors)
ROW_SN_G, ROW_SN_B = 0, 1       # style_norm
ROW_CN_G, ROW_CN_B = 2, 3       # content_norm
ROW_LN1_G, ROW_LN1_B = 4, 5     # block norm1
ROW_LN2_G, ROW_LN2_B = 6, 7     # block norm2
ROW_FUS_G, ROW_FUS_B = 8, 9     # fusion_norm
ROW_FLN_G, ROW_FLN_B = 10, 11   # FeedForward LayerNorm
ROW_AP_B = 12                   # attn proj bias
ROW_MFC2_B = 13                 # block mlp fc2 bias
ROW_SP_B = 14                   # style_proj bias
ROW_CP_B = 15                   # content_proj bias
ROW_FFC2_B = 16                 # ffn fc2 bias
N_SMALL = 17

# column offsets inside the (D, 6D) bf16 attention/projection weight slab
COL_QKV = 0                     # [0, 3D)   : Wq*scale | Wk | Wv
COL_AP = 3 * D                  # [3D, 4D)  : attn output proj
COL_SP = 4 * D                  # [4D, 5D)  : style_proj
COL_CP = 5 * D                  # [5D, 6D)  : content_proj
ATTN_SLAB_COLS = 6 * D


# ---------------------------- the fused kernel --------------------------------
def fusion_kernel(
    x_ref,          # (T, D) f32  stacked [style; content] activations (VMEM)
    small_ref,      # (N_SMALL, D) f32 packed LN params / D-wide biases (VMEM)
    wideb_ref,      # (3, MLP_HIDDEN) f32: [mlp fc1 bias; ffn fc1 bias; qkv bias padded] (VMEM)
    attn_w_ref,     # (D, 6D) bf16 [Wq*scale|Wk|Wv|ap_w|sp_w|cp_w] (VMEM)
    w1_hbm,         # (D, 2*MLP_HIDDEN) bf16 [mlp fc1 | ffn fc1]  (ANY / HBM)
    w2_hbm,         # (2*MLP_HIDDEN, D) bf16 [mlp fc2 ; ffn fc2]  (ANY / HBM)
    out_ref,        # (T, D) f32  [style_out ; content_out]
    w1_buf, w2_buf, # VMEM scratch for the streamed weights
    dma_sem,        # (2,) DMA semaphores
):
    # Start streaming the MLP/FFN weights right away; they are only needed after
    # attention, so their HBM->VMEM latency hides behind the attention compute.
    cp_w1 = pltpu.make_async_copy(w1_hbm, w1_buf, dma_sem.at[0])
    cp_w2 = pltpu.make_async_copy(w2_hbm, w2_buf, dma_sem.at[1])
    cp_w1.start()
    cp_w2.start()

    smalls = small_ref[...]            # (N_SMALL, D)
    wideb = wideb_ref[...]             # (3, MLP_HIDDEN)

    def srow(i):                       # (1, D) packed-parameter row
        return smalls[i:i + 1, :]

    def layernorm(x, g_row, b_row, eps):
        mu = jnp.mean(x, axis=-1, keepdims=True)
        xc = x - mu
        var = jnp.mean(xc * xc, axis=-1, keepdims=True)
        return xc * jax.lax.rsqrt(var + eps) * srow(g_row) + srow(b_row)

    def gelu(x):
        # tanh-approximate GELU: the transcendental lands on the (otherwise idle) EUP slot.
        return 0.5 * x * (1.0 + jnp.tanh(0.7978845608028654 * (x + 0.044715 * x * x * x)))

    def mm(a, w_bf16):                 # bf16 operands, f32 MXU accumulation
        return jnp.dot(a.astype(jnp.bfloat16), w_bf16,
                       preferred_element_type=jnp.float32)

    # ---- outer norms (eps = 1e-5) on the pre-stacked slab halves -------------
    x_all = x_ref[...]
    xs = layernorm(x_all[:BN], ROW_SN_G, ROW_SN_B, 1e-5)
    xc = layernorm(x_all[BN:], ROW_CN_G, ROW_CN_B, 1e-5)
    x = jnp.concatenate([xs, xc], axis=0)                          # (T, D)

    # ---- shared pre-norm ViT transformer block (fused QKV, head-batched) -----
    h_bf = layernorm(x, ROW_LN1_G, ROW_LN1_B, 1e-6).astype(jnp.bfloat16)
    # single (T,D)x(D,3D) matmul; q scale is folded into Wq and the q bias at pack time
    qkv = mm(h_bf, attn_w_ref[:, COL_QKV:COL_AP]) + wideb[2:3, :3 * D]   # (T, 3D) f32

    def to_heads(x2d):                 # (T, D) -> (H*NSEQ, N, HEAD_DIM), head-major
        return jnp.concatenate(
            [x2d[:, h * HEAD_DIM:(h + 1) * HEAD_DIM].reshape(NSEQ, N, HEAD_DIM)
             for h in range(NUM_HEADS)], axis=0).astype(jnp.bfloat16)

    q = to_heads(qkv[:, 0:D])
    k = to_heads(qkv[:, D:2 * D])
    v = to_heads(qkv[:, 2 * D:3 * D])

    # one score einsum / one softmax / one AV einsum for ALL heads and sequences
    s = jnp.einsum('bnk,bmk->bnm', q, k, preferred_element_type=jnp.float32)
    s = s - jnp.max(s, axis=-1, keepdims=True)
    e = jnp.exp(s)
    a = e * pl.reciprocal(jnp.sum(e, axis=-1, keepdims=True), approx=True)
    o = jnp.einsum('bnm,bmk->bnk', a.astype(jnp.bfloat16), v,
                   preferred_element_type=jnp.float32)             # (H*NSEQ, N, Hd)

    # merge heads back onto lanes, then ONE K=128 output projection
    attn_cat = jnp.concatenate(
        [o[h * NSEQ:(h + 1) * NSEQ].reshape(T, HEAD_DIM) for h in range(NUM_HEADS)],
        axis=-1)                                                   # (T, D)
    x = x + mm(attn_cat, attn_w_ref[:, COL_AP:COL_SP]) + srow(ROW_AP_B)

    # ---- block MLP (weights were streamed in behind attention) ---------------
    h2 = layernorm(x, ROW_LN2_G, ROW_LN2_B, 1e-6)
    cp_w1.wait()
    m = gelu(mm(h2, w1_buf[:, :MLP_HIDDEN]) + wideb[0:1, :])
    cp_w2.wait()
    m = mm(m, w2_buf[:MLP_HIDDEN, :]) + srow(ROW_MFC2_B)
    y = x + m                                                      # (T, D)

    # ---- style / content projections: one lane-dense (T,D)x(D,2D) matmul -----
    proj = mm(y, attn_w_ref[:, COL_SP:ATTN_SLAB_COLS])             # (T, 2D)
    s_proj = proj[:BN, :D] + srow(ROW_SP_B)                        # style half  x sp_w
    c_proj = proj[BN:, D:] + srow(ROW_CP_B)                        # content half x cp_w

    # ---- fusion + FeedForward (fusion_norm applied twice, as in the reference)
    fusion = layernorm(s_proj + c_proj, ROW_FUS_G, ROW_FUS_B, 1e-5)
    fn = layernorm(fusion, ROW_FUS_G, ROW_FUS_B, 1e-5)
    hh = gelu(mm(fn, w1_buf[:, MLP_HIDDEN:]) + wideb[1:2, :])
    hh = mm(hh, w2_buf[MLP_HIDDEN:, :]) + srow(ROW_FFC2_B)
    ffn_out = layernorm(fn + hh, ROW_FLN_G, ROW_FLN_B, 1e-6)       # FeedForward add_norm

    out_ref[:BN, :] = s_proj.astype(out_ref.dtype)
    out_ref[BN:, :] = (c_proj + ffn_out).astype(out_ref.dtype)


# ------------------------------ wrapper ---------------------------------------
def fusion_block(style, content, packed):
    small, wideb, attn_slab, w1_slab, w2_slab = packed
    # Host-side stacking (free layout plumbing): one lane-dense (T, D) activation slab.
    x = jnp.concatenate([style.reshape(BN, D), content.reshape(BN, D)], axis=0)

    vmem = lambda: pl.BlockSpec(memory_space=pltpu.MemorySpace.VMEM)
    hbm = lambda: pl.BlockSpec(memory_space=pl.ANY)

    out = pl.pallas_call(
        fusion_kernel,
        out_shape=jax.ShapeDtypeStruct((T, D), jnp.float32),
        in_specs=[vmem(), vmem(), vmem(), vmem(), hbm(), hbm()],
        out_specs=vmem(),
        scratch_shapes=[
            pltpu.VMEM((D, 2 * MLP_HIDDEN), jnp.bfloat16),   # streamed fc1 weights
            pltpu.VMEM((2 * MLP_HIDDEN, D), jnp.bfloat16),   # streamed fc2 weights
            pltpu.SemaphoreType.DMA((2,)),
        ],
    )(x, small, wideb, attn_slab, w1_slab, w2_slab)
    return out[:BN].reshape(B, N, D), out[BN:].reshape(B, N, D)


# --------------------------- deterministic params ------------------------------
def init_params(key):
    ks = iter(jax.random.split(key, 16))

    def lin(din, dout):
        w = jax.random.normal(next(ks), (din, dout), jnp.float32) * 0.02
        b = jnp.zeros((dout,), jnp.float32)
        return w, b

    def ln(d):
        return jnp.ones((d,), jnp.float32), jnp.zeros((d,), jnp.float32)

    p = {}
    p['sn_g'], p['sn_b'] = ln(D)                      # style_norm
    p['cn_g'], p['cn_b'] = ln(D)                      # content_norm
    p['ln1_g'], p['ln1_b'] = ln(D)                    # block norm1
    p['qkv_w'], p['qkv_b'] = lin(D, 3 * D)            # block attn qkv
    p['ap_w'], p['ap_b'] = lin(D, D)                  # block attn proj
    p['ln2_g'], p['ln2_b'] = ln(D)                    # block norm2
    p['mfc1_w'], p['mfc1_b'] = lin(D, MLP_HIDDEN)     # block mlp fc1
    p['mfc2_w'], p['mfc2_b'] = lin(MLP_HIDDEN, D)     # block mlp fc2
    p['sp_w'], p['sp_b'] = lin(D, D)                  # style_proj
    p['cp_w'], p['cp_b'] = lin(D, D)                  # content_proj
    p['fus_g'], p['fus_b'] = ln(D)                    # fusion_norm
    p['ffc1_w'], p['ffc1_b'] = lin(D, MLP_HIDDEN)     # ffn fc1
    p['ffc2_w'], p['ffc2_b'] = lin(MLP_HIDDEN, D)     # ffn fc2
    p['fln_g'], p['fln_b'] = ln(D)                    # ffn LayerNorm (eps=1e-6)
    return p


def pack_params(p):
    """Host-side packing: slab construction, scale folding, bf16 casts (one-time cost)."""
    small = jnp.stack([
        p['sn_g'], p['sn_b'], p['cn_g'], p['cn_b'],
        p['ln1_g'], p['ln1_b'], p['ln2_g'], p['ln2_b'],
        p['fus_g'], p['fus_b'], p['fln_g'], p['fln_b'],
        p['ap_b'], p['mfc2_b'], p['sp_b'], p['cp_b'], p['ffc2_b'],
    ], axis=0)                                                     # (N_SMALL, D) f32

    scale = HEAD_DIM ** -0.5
    qkv_w = p['qkv_w']                                             # (D, 3D): [Wq|Wk|Wv]
    wqkv = jnp.concatenate([qkv_w[:, :D] * scale, qkv_w[:, D:]], axis=1)
    attn_slab = jnp.concatenate(
        [wqkv, p['ap_w'], p['sp_w'], p['cp_w']], axis=1).astype(jnp.bfloat16)  # (D, 6D)

    qkv_b = jnp.concatenate([p['qkv_b'][:D] * scale, p['qkv_b'][D:]])          # (3D,)
    wideb = jnp.stack([p['mfc1_b'], p['ffc1_b'],
                       jnp.pad(qkv_b, (0, MLP_HIDDEN - 3 * D))], axis=0)       # (3, MLP_HIDDEN)

    w1_slab = jnp.concatenate([p['mfc1_w'], p['ffc1_w']], axis=1).astype(jnp.bfloat16)  # (D, 2H)
    w2_slab = jnp.concatenate([p['mfc2_w'], p['ffc2_w']], axis=0).astype(jnp.bfloat16)  # (2H, D)

    return [small, wideb, attn_slab, w1_slab, w2_slab]


if __name__ == "__main__":
    key = jax.random.PRNGKey(0)
    k_style, k_content, k_params = jax.random.split(key, 3)

    style_feats = jax.random.normal(k_style, (B, N, D), jnp.float32)
    content_feats = jax.random.normal(k_content, (B, N, D), jnp.float32)
    packed = pack_params(init_params(k_params))

    style_out, content_out = fusion_block(style_feats, content_feats, packed)
    jax.block_until_ready((style_out, content_out))

    assert style_out.shape == (B, N, D) and content_out.shape == (B, N, D)
    assert bool(jnp.isfinite(style_out).all()) and bool(jnp.isfinite(content_out).all())
    print("KERNEL_OK")
</pallas_src>

<mosaic_0001>
module attributes {stable_mosaic.version = 11 : i64} {
  func.func @fusion_kernel(%arg0: memref<64x128xf32, #tpu.memory_space<vmem>>, %arg1: memref<17x128xf32, #tpu.memory_space<vmem>>, %arg2: memref<3x512xf32, #tpu.memory_space<vmem>>, %arg3: memref<128x768xbf16, #tpu.memory_space<vmem>>, %arg4: memref<128x1024xbf16, #tpu.memory_space<any>>, %arg5: memref<1024x128xbf16, #tpu.memory_space<any>>, %arg6: memref<64x128xf32, #tpu.memory_space<vmem>>, %arg7: memref<128x1024xbf16, #tpu.memory_space<vmem>>, %arg8: memref<1024x128xbf16, #tpu.memory_space<vmem>>, %arg9: memref<2x!tpu.dma_semaphore, #tpu.memory_space<semaphore_mem>>) attributes {dimension_semantics = [], scalar_prefetch = 0 : i64, scratch_operands = 3 : i64, tpu.core_type = #tpu.core_type<tc>} {
    %c0_i32 = arith.constant 0 : i32
    %0 = tpu.memref_slice %arg9[%c0_i32] : memref<2x!tpu.dma_semaphore, #tpu.memory_space<semaphore_mem>> -> memref<1x!tpu.dma_semaphore, #tpu.memory_space<semaphore_mem>>
    %1 = tpu.memref_squeeze %0 : memref<1x!tpu.dma_semaphore, #tpu.memory_space<semaphore_mem>> -> memref<!tpu.dma_semaphore, #tpu.memory_space<semaphore_mem>>
    tpu.enqueue_dma source(%arg4 : memref<128x1024xbf16, #tpu.memory_space<any>>) target(%arg7 : memref<128x1024xbf16, #tpu.memory_space<vmem>>) target_semaphore(%1 : memref<!tpu.dma_semaphore, #tpu.memory_space<semaphore_mem>>)
    %c1_i32 = arith.constant 1 : i32
    %2 = tpu.memref_slice %arg9[%c1_i32] : memref<2x!tpu.dma_semaphore, #tpu.memory_space<semaphore_mem>> -> memref<1x!tpu.dma_semaphore, #tpu.memory_space<semaphore_mem>>
    %3 = tpu.memref_squeeze %2 : memref<1x!tpu.dma_semaphore, #tpu.memory_space<semaphore_mem>> -> memref<!tpu.dma_semaphore, #tpu.memory_space<semaphore_mem>>
    tpu.enqueue_dma source(%arg5 : memref<1024x128xbf16, #tpu.memory_space<any>>) target(%arg8 : memref<1024x128xbf16, #tpu.memory_space<vmem>>) target_semaphore(%3 : memref<!tpu.dma_semaphore, #tpu.memory_space<semaphore_mem>>)
    %c0 = arith.constant 0 : index
    %c0_0 = arith.constant 0 : index
    %4 = vector.load %arg1[%c0, %c0_0] : memref<17x128xf32, #tpu.memory_space<vmem>>, vector<17x128xf32>
    %c0_1 = arith.constant 0 : index
    %c0_2 = arith.constant 0 : index
    %5 = vector.load %arg2[%c0_1, %c0_2] : memref<3x512xf32, #tpu.memory_space<vmem>>, vector<3x512xf32>
    %c0_3 = arith.constant 0 : index
    %c0_4 = arith.constant 0 : index
    %6 = vector.load %arg0[%c0_3, %c0_4] : memref<64x128xf32, #tpu.memory_space<vmem>>, vector<64x128xf32>
    %7 = vector.extract_strided_slice %6 {offsets = [0, 0], sizes = [32, 128], strides = [1, 1]} : vector<64x128xf32> to vector<32x128xf32>
    %cst = arith.constant dense<0.000000e+00> : vector<32xf32>
    %8 = vector.multi_reduction <add>, %7, %cst [1] : vector<32x128xf32> to vector<32xf32>
    %9 = vector.shape_cast %8 : vector<32xf32> to vector<32x1xf32>
    %cst_5 = arith.constant 1.280000e+02 : f32
    %10 = vector.broadcast %cst_5 : f32 to vector<32x1xf32>
    %11 = arith.divf %9, %10 : vector<32x1xf32>
    %12 = vector.broadcast %11 : vector<32x1xf32> to vector<32x128xf32>
    %13 = arith.subf %7, %12 : vector<32x128xf32>
    %14 = arith.mulf %13, %13 : vector<32x128xf32>
    %cst_6 = arith.constant dense<0.000000e+00> : vector<32xf32>
    %15 = vector.multi_reduction <add>, %14, %cst_6 [1] : vector<32x128xf32> to vector<32xf32>
    %16 = vector.shape_cast %15 : vector<32xf32> to vector<32x1xf32>
    %cst_7 = arith.constant 1.280000e+02 : f32
    %17 = vector.broadcast %cst_7 : f32 to vector<32x1xf32>
    %18 = arith.divf %16, %17 : vector<32x1xf32>
    %cst_8 = arith.constant 9.99999974E-6 : f32
    %19 = vector.broadcast %cst_8 : f32 to vector<32x1xf32>
    %20 = arith.addf %18, %19 : vector<32x1xf32>
    %21 = math.rsqrt %20 : vector<32x1xf32>
    %22 = vector.broadcast %21 : vector<32x1xf32> to vector<32x128xf32>
    %23 = arith.mulf %13, %22 : vector<32x128xf32>
    %24 = vector.extract_strided_slice %4 {offsets = [0, 0], sizes = [1, 128], strides = [1, 1]} : vector<17x128xf32> to vector<1x128xf32>
    %25 = vector.broadcast %24 : vector<1x128xf32> to vector<32x128xf32>
    %26 = arith.mulf %23, %25 : vector<32x128xf32>
    %27 = vector.extract_strided_slice %4 {offsets = [1, 0], sizes = [1, 128], strides = [1, 1]} : vector<17x128xf32> to vector<1x128xf32>
    %28 = vector.broadcast %27 : vector<1x128xf32> to vector<32x128xf32>
    %29 = arith.addf %26, %28 : vector<32x128xf32>
    %30 = vector.extract_strided_slice %6 {offsets = [32, 0], sizes = [32, 128], strides = [1, 1]} : vector<64x128xf32> to vector<32x128xf32>
    %cst_9 = arith.constant dense<0.000000e+00> : vector<32xf32>
    %31 = vector.multi_reduction <add>, %30, %cst_9 [1] : vector<32x128xf32> to vector<32xf32>
    %32 = vector.shape_cast %31 : vector<32xf32> to vector<32x1xf32>
    %cst_10 = arith.constant 1.280000e+02 : f32
    %33 = vector.broadcast %cst_10 : f32 to vector<32x1xf32>
    %34 = arith.divf %32, %33 : vector<32x1xf32>
    %35 = vector.broadcast %34 : vector<32x1xf32> to vector<32x128xf32>
    %36 = arith.subf %30, %35 : vector<32x128xf32>
    %37 = arith.mulf %36, %36 : vector<32x128xf32>
    %cst_11 = arith.constant dense<0.000000e+00> : vector<32xf32>
    %38 = vector.multi_reduction <add>, %37, %cst_11 [1] : vector<32x128xf32> to vector<32xf32>
    %39 = vector.shape_cast %38 : vector<32xf32> to vector<32x1xf32>
    %cst_12 = arith.constant 1.280000e+02 : f32
    %40 = vector.broadcast %cst_12 : f32 to vector<32x1xf32>
    %41 = arith.divf %39, %40 : vector<32x1xf32>
    %cst_13 = arith.constant 9.99999974E-6 : f32
    %42 = vector.broadcast %cst_13 : f32 to vector<32x1xf32>
    %43 = arith.addf %41, %42 : vector<32x1xf32>
    %44 = math.rsqrt %43 : vector<32x1xf32>
    %45 = vector.broadcast %44 : vector<32x1xf32> to vector<32x128xf32>
    %46 = arith.mulf %36, %45 : vector<32x128xf32>
    %47 = vector.extract_strided_slice %4 {offsets = [2, 0], sizes = [1, 128], strides = [1, 1]} : vector<17x128xf32> to vector<1x128xf32>
    %48 = vector.broadcast %47 : vector<1x128xf32> to vector<32x128xf32>
    %49 = arith.mulf %46, %48 : vector<32x128xf32>
    %50 = vector.extract_strided_slice %4 {offsets = [3, 0], sizes = [1, 128], strides = [1, 1]} : vector<17x128xf32> to vector<1x128xf32>
    %51 = vector.broadcast %50 : vector<1x128xf32> to vector<32x128xf32>
    %52 = arith.addf %49, %51 : vector<32x128xf32>
    %53 = tpu.concatenate %29, %52 in 0 : vector<32x128xf32>, vector<32x128xf32> -> vector<64x128xf32>
    %cst_14 = arith.constant dense<0.000000e+00> : vector<64xf32>
    %54 = vector.multi_reduction <add>, %53, %cst_14 [1] : vector<64x128xf32> to vector<64xf32>
    %55 = vector.shape_cast %54 : vector<64xf32> to vector<64x1xf32>
    %cst_15 = arith.constant 1.280000e+02 : f32
    %56 = vector.broadcast %cst_15 : f32 to vector<64x1xf32>
    %57 = arith.divf %55, %56 : vector<64x1xf32>
    %58 = vector.broadcast %57 : vector<64x1xf32> to vector<64x128xf32>
    %59 = arith.subf %53, %58 : vector<64x128xf32>
    %60 = arith.mulf %59, %59 : vector<64x128xf32>
    %cst_16 = arith.constant dense<0.000000e+00> : vector<64xf32>
    %61 = vector.multi_reduction <add>, %60, %cst_16 [1] : vector<64x128xf32> to vector<64xf32>
    %62 = vector.shape_cast %61 : vector<64xf32> to vector<64x1xf32>
    %cst_17 = arith.constant 1.280000e+02 : f32
    %63 = vector.broadcast %cst_17 : f32 to vector<64x1xf32>
    %64 = arith.divf %62, %63 : vector<64x1xf32>
    %cst_18 = arith.constant 9.99999997E-7 : f32
    %65 = vector.broadcast %cst_18 : f32 to vector<64x1xf32>
    %66 = arith.addf %64, %65 : vector<64x1xf32>
    %67 = math.rsqrt %66 : vector<64x1xf32>
    %68 = vector.broadcast %67 : vector<64x1xf32> to vector<64x128xf32>
    %69 = arith.mulf %59, %68 : vector<64x128xf32>
    %70 = vector.extract_strided_slice %4 {offsets = [4, 0], sizes = [1, 128], strides = [1, 1]} : vector<17x128xf32> to vector<1x128xf32>
    %71 = vector.broadcast %70 : vector<1x128xf32> to vector<64x128xf32>
    %72 = arith.mulf %69, %71 : vector<64x128xf32>
    %73 = vector.extract_strided_slice %4 {offsets = [5, 0], sizes = [1, 128], strides = [1, 1]} : vector<17x128xf32> to vector<1x128xf32>
    %74 = vector.broadcast %73 : vector<1x128xf32> to vector<64x128xf32>
    %75 = arith.addf %72, %74 : vector<64x128xf32>
    %76 = arith.truncf %75 : vector<64x128xf32> to vector<64x128xbf16>
    %c0_19 = arith.constant 0 : index
    %c0_20 = arith.constant 0 : index
    %77 = vector.load %arg3[%c0_19, %c0_20] : memref<128x768xbf16, #tpu.memory_space<vmem>>, vector<128x384xbf16>
    %cst_21 = arith.constant dense<0.000000e+00> : vector<64x384xf32>
    %78 = tpu.matmul %76, %77, %cst_21 {dimension_numbers = #tpu.dot_dimension_numbers<[1], [0], [0], [1], [0, 0, 1, 1], [], []>} : vector<64x128xbf16>, vector<128x384xbf16>, vector<64x384xf32> -> vector<64x384xf32>
    %79 = vector.extract_strided_slice %5 {offsets = [2, 0], sizes = [1, 384], strides = [1, 1]} : vector<3x512xf32> to vector<1x384xf32>
    %80 = vector.broadcast %79 : vector<1x384xf32> to vector<64x384xf32>
    %81 = arith.addf %78, %80 : vector<64x384xf32>
    %82 = vector.extract_strided_slice %81 {offsets = [0, 0], sizes = [64, 128], strides = [1, 1]} : vector<64x384xf32> to vector<64x128xf32>
    %83 = vector.extract_strided_slice %82 {offsets = [0, 0], sizes = [64, 32], strides = [1, 1]} : vector<64x128xf32> to vector<64x32xf32>
    %84 = vector.shape_cast %83 : vector<64x32xf32> to vector<4x16x32xf32>
    %85 = vector.extract_strided_slice %82 {offsets = [0, 32], sizes = [64, 32], strides = [1, 1]} : vector<64x128xf32> to vector<64x32xf32>
    %86 = vector.shape_cast %85 : vector<64x32xf32> to vector<4x16x32xf32>
    %87 = vector.extract_strided_slice %82 {offsets = [0, 64], sizes = [64, 32], strides = [1, 1]} : vector<64x128xf32> to vector<64x32xf32>
    %88 = vector.shape_cast %87 : vector<64x32xf32> to vector<4x16x32xf32>
    %89 = vector.extract_strided_slice %82 {offsets = [0, 96], sizes = [64, 32], strides = [1, 1]} : vector<64x128xf32> to vector<64x32xf32>
    %90 = vector.shape_cast %89 : vector<64x32xf32> to vector<4x16x32xf32>
    %91 = tpu.concatenate %84, %86, %88, %90 in 0 : vector<4x16x32xf32>, vector<4x16x32xf32>, vector<4x16x32xf32>, vector<4x16x32xf32> -> vector<16x16x32xf32>
    %92 = arith.truncf %91 : vector<16x16x32xf32> to vector<16x16x32xbf16>
    %93 = vector.extract_strided_slice %81 {offsets = [0, 128], sizes = [64, 128], strides = [1, 1]} : vector<64x384xf32> to vector<64x128xf32>
    %94 = vector.extract_strided_slice %93 {offsets = [0, 0], sizes = [64, 32], strides = [1, 1]} : vector<64x128xf32> to vector<64x32xf32>
    %95 = vector.shape_cast %94 : vector<64x32xf32> to vector<4x16x32xf32>
    %96 = vector.extract_strided_slice %93 {offsets = [0, 32], sizes = [64, 32], strides = [1, 1]} : vector<64x128xf32> to vector<64x32xf32>
    %97 = vector.shape_cast %96 : vector<64x32xf32> to vector<4x16x32xf32>
    %98 = vector.extract_strided_slice %93 {offsets = [0, 64], sizes = [64, 32], strides = [1, 1]} : vector<64x128xf32> to vector<64x32xf32>
    %99 = vector.shape_cast %98 : vector<64x32xf32> to vector<4x16x32xf32>
    %100 = vector.extract_strided_slice %93 {offsets = [0, 96], sizes = [64, 32], strides = [1, 1]} : vector<64x128xf32> to vector<64x32xf32>
    %101 = vector.shape_cast %100 : vector<64x32xf32> to vector<4x16x32xf32>
    %102 = tpu.concatenate %95, %97, %99, %101 in 0 : vector<4x16x32xf32>, vector<4x16x32xf32>, vector<4x16x32xf32>, vector<4x16x32xf32> -> vector<16x16x32xf32>
    %103 = arith.truncf %102 : vector<16x16x32xf32> to vector<16x16x32xbf16>
    %104 = vector.extract_strided_slice %81 {offsets = [0, 256], sizes = [64, 128], strides = [1, 1]} : vector<64x384xf32> to vector<64x128xf32>
    %105 = vector.extract_strided_slice %104 {offsets = [0, 0], sizes = [64, 32], strides = [1, 1]} : vector<64x128xf32> to vector<64x32xf32>
    %106 = vector.shape_cast %105 : vector<64x32xf32> to vector<4x16x32xf32>
    %107 = vector.extract_strided_slice %104 {offsets = [0, 32], sizes = [64, 32], strides = [1, 1]} : vector<64x128xf32> to vector<64x32xf32>
    %108 = vector.shape_cast %107 : vector<64x32xf32> to vector<4x16x32xf32>
    %109 = vector.extract_strided_slice %104 {offsets = [0, 64], sizes = [64, 32], strides = [1, 1]} : vector<64x128xf32> to vector<64x32xf32>
    %110 = vector.shape_cast %109 : vector<64x32xf32> to vector<4x16x32xf32>
    %111 = vector.extract_strided_slice %104 {offsets = [0, 96], sizes = [64, 32], strides = [1, 1]} : vector<64x128xf32> to vector<64x32xf32>
    %112 = vector.shape_cast %111 : vector<64x32xf32> to vector<4x16x32xf32>
    %113 = tpu.concatenate %106, %108, %110, %112 in 0 : vector<4x16x32xf32>, vector<4x16x32xf32>, vector<4x16x32xf32>, vector<4x16x32xf32> -> vector<16x16x32xf32>
    %114 = arith.truncf %113 : vector<16x16x32xf32> to vector<16x16x32xbf16>
    "tpu.trace_start"() <{level = 10 : i32, message = "bnk,bmk->bnm"}> : () -> ()
    %cst_22 = arith.constant dense<0.000000e+00> : vector<16x16x16xf32>
    %115 = tpu.matmul %92, %103, %cst_22 {dimension_numbers = #tpu.dot_dimension_numbers<[2], [2], [1], [1], [0, 0, 0, 1, 1, 1], [0], [0]>} : vector<16x16x32xbf16>, vector<16x16x32xbf16>, vector<16x16x16xf32> -> vector<16x16x16xf32>
    "tpu.trace_stop"() : () -> ()
    %cst_23 = arith.constant dense<0xFF800000> : vector<16x16xf32>
    %116 = vector.multi_reduction <maximumf>, %115, %cst_23 [2] : vector<16x16x16xf32> to vector<16x16xf32>
    %117 = vector.shape_cast %116 : vector<16x16xf32> to vector<16x16x1xf32>
    %118 = vector.broadcast %117 : vector<16x16x1xf32> to vector<16x16x16xf32>
    %119 = arith.subf %115, %118 : vector<16x16x16xf32>
    %120 = math.exp %119 : vector<16x16x16xf32>
    %cst_24 = arith.constant dense<0.000000e+00> : vector<16x16xf32>
    %121 = vector.multi_reduction <add>, %120, %cst_24 [2] : vector<16x16x16xf32> to vector<16x16xf32>
    %122 = vector.shape_cast %121 : vector<16x16xf32> to vector<16x16x1xf32>
    %123 = tpu.reciprocal %122 {approx = true} : vector<16x16x1xf32> -> vector<16x16x1xf32>
    %124 = vector.broadcast %123 : vector<16x16x1xf32> to vector<16x16x16xf32>
    %125 = arith.mulf %120, %124 : vector<16x16x16xf32>
    %126 = arith.truncf %125 : vector<16x16x16xf32> to vector<16x16x16xbf16>
    "tpu.trace_start"() <{level = 10 : i32, message = "bnm,bmk->bnk"}> : () -> ()
    %cst_25 = arith.constant dense<0.000000e+00> : vector<16x16x32xf32>
    %127 = tpu.matmul %126, %114, %cst_25 {dimension_numbers = #tpu.dot_dimension_numbers<[2], [1], [1], [2], [0, 0, 0, 1, 1, 2], [0], [0]>} : vector<16x16x16xbf16>, vector<16x16x32xbf16>, vector<16x16x32xf32> -> vector<16x16x32xf32>
    "tpu.trace_stop"() : () -> ()
    %128 = vector.extract_strided_slice %127 {offsets = [0, 0, 0], sizes = [4, 16, 32], strides = [1, 1, 1]} : vector<16x16x32xf32> to vector<4x16x32xf32>
    %129 = vector.shape_cast %128 : vector<4x16x32xf32> to vector<64x32xf32>
    %130 = vector.extract_strided_slice %127 {offsets = [4, 0, 0], sizes = [4, 16, 32], strides = [1, 1, 1]} : vector<16x16x32xf32> to vector<4x16x32xf32>
    %131 = vector.shape_cast %130 : vector<4x16x32xf32> to vector<64x32xf32>
    %132 = vector.extract_strided_slice %127 {offsets = [8, 0, 0], sizes = [4, 16, 32], strides = [1, 1, 1]} : vector<16x16x32xf32> to vector<4x16x32xf32>
    %133 = vector.shape_cast %132 : vector<4x16x32xf32> to vector<64x32xf32>
    %134 = vector.extract_strided_slice %127 {offsets = [12, 0, 0], sizes = [4, 16, 32], strides = [1, 1, 1]} : vector<16x16x32xf32> to vector<4x16x32xf32>
    %135 = vector.shape_cast %134 : vector<4x16x32xf32> to vector<64x32xf32>
    %136 = tpu.concatenate %129, %131, %133, %135 in 1 : vector<64x32xf32>, vector<64x32xf32>, vector<64x32xf32>, vector<64x32xf32> -> vector<64x128xf32>
    %c0_26 = arith.constant 0 : index
    %c384 = arith.constant 384 : index
    %137 = vector.load %arg3[%c0_26, %c384] : memref<128x768xbf16, #tpu.memory_space<vmem>>, vector<128x128xbf16>
    %138 = arith.truncf %136 : vector<64x128xf32> to vector<64x128xbf16>
    %cst_27 = arith.constant dense<0.000000e+00> : vector<64x128xf32>
    %139 = tpu.matmul %138, %137, %cst_27 {dimension_numbers = #tpu.dot_dimension_numbers<[1], [0], [0], [1], [0, 0, 1, 1], [], []>} : vector<64x128xbf16>, vector<128x128xbf16>, vector<64x128xf32> -> vector<64x128xf32>
    %140 = arith.addf %53, %139 : vector<64x128xf32>
    %141 = vector.extract_strided_slice %4 {offsets = [12, 0], sizes = [1, 128], strides = [1, 1]} : vector<17x128xf32> to vector<1x128xf32>
    %142 = vector.broadcast %141 : vector<1x128xf32> to vector<64x128xf32>
    %143 = arith.addf %140, %142 : vector<64x128xf32>
    %cst_28 = arith.constant dense<0.000000e+00> : vector<64xf32>
    %144 = vector.multi_reduction <add>, %143, %cst_28 [1] : vector<64x128xf32> to vector<64xf32>
    %145 = vector.shape_cast %144 : vector<64xf32> to vector<64x1xf32>
    %cst_29 = arith.constant 1.280000e+02 : f32
    %146 = vector.broadcast %cst_29 : f32 to vector<64x1xf32>
    %147 = arith.divf %145, %146 : vector<64x1xf32>
    %148 = vector.broadcast %147 : vector<64x1xf32> to vector<64x128xf32>
    %149 = arith.subf %143, %148 : vector<64x128xf32>
    %150 = arith.mulf %149, %149 : vector<64x128xf32>
    %cst_30 = arith.constant dense<0.000000e+00> : vector<64xf32>
    %151 = vector.multi_reduction <add>, %150, %cst_30 [1] : vector<64x128xf32> to vector<64xf32>
    %152 = vector.shape_cast %151 : vector<64xf32> to vector<64x1xf32>
    %cst_31 = arith.constant 1.280000e+02 : f32
    %153 = vector.broadcast %cst_31 : f32 to vector<64x1xf32>
    %154 = arith.divf %152, %153 : vector<64x1xf32>
    %cst_32 = arith.constant 9.99999997E-7 : f32
    %155 = vector.broadcast %cst_32 : f32 to vector<64x1xf32>
    %156 = arith.addf %154, %155 : vector<64x1xf32>
    %157 = math.rsqrt %156 : vector<64x1xf32>
    %158 = vector.broadcast %157 : vector<64x1xf32> to vector<64x128xf32>
    %159 = arith.mulf %149, %158 : vector<64x128xf32>
    %160 = vector.extract_strided_slice %4 {offsets = [6, 0], sizes = [1, 128], strides = [1, 1]} : vector<17x128xf32> to vector<1x128xf32>
    %161 = vector.broadcast %160 : vector<1x128xf32> to vector<64x128xf32>
    %162 = arith.mulf %159, %161 : vector<64x128xf32>
    %163 = vector.extract_strided_slice %4 {offsets = [7, 0], sizes = [1, 128], strides = [1, 1]} : vector<17x128xf32> to vector<1x128xf32>
    %164 = vector.broadcast %163 : vector<1x128xf32> to vector<64x128xf32>
    %165 = arith.addf %162, %164 : vector<64x128xf32>
    %c0_i32_33 = arith.constant 0 : i32
    %166 = tpu.memref_slice %arg9[%c0_i32_33] : memref<2x!tpu.dma_semaphore, #tpu.memory_space<semaphore_mem>> -> memref<1x!tpu.dma_semaphore, #tpu.memory_space<semaphore_mem>>
    %167 = tpu.memref_squeeze %166 : memref<1x!tpu.dma_semaphore, #tpu.memory_space<semaphore_mem>> -> memref<!tpu.dma_semaphore, #tpu.memory_space<semaphore_mem>>
    tpu.wait_dma2 semaphore(%167 : memref<!tpu.dma_semaphore, #tpu.memory_space<semaphore_mem>>) src(%arg4 : memref<128x1024xbf16, #tpu.memory_space<any>>) dst(%arg7 : memref<128x1024xbf16, #tpu.memory_space<vmem>>)
    %c0_34 = arith.constant 0 : index
    %c0_35 = arith.constant 0 : index
    %168 = vector.load %arg7[%c0_34, %c0_35] : memref<128x1024xbf16, #tpu.memory_space<vmem>>, vector<128x512xbf16>
    %169 = arith.truncf %165 : vector<64x128xf32> to vector<64x128xbf16>
    %cst_36 = arith.constant dense<0.000000e+00> : vector<64x512xf32>
    %170 = tpu.matmul %169, %168, %cst_36 {dimension_numbers = #tpu.dot_dimension_numbers<[1], [0], [0], [1], [0, 0, 1, 1], [], []>} : vector<64x128xbf16>, vector<128x512xbf16>, vector<64x512xf32> -> vector<64x512xf32>
    %171 = vector.extract_strided_slice %5 {offsets = [0, 0], sizes = [1, 512], strides = [1, 1]} : vector<3x512xf32> to vector<1x512xf32>
    %172 = vector.broadcast %171 : vector<1x512xf32> to vector<64x512xf32>
    %173 = arith.addf %170, %172 : vector<64x512xf32>
    %cst_37 = arith.constant 5.000000e-01 : f32
    %174 = vector.broadcast %cst_37 : f32 to vector<64x512xf32>
    %175 = arith.mulf %174, %173 : vector<64x512xf32>
    %cst_38 = arith.constant 4.471500e-02 : f32
    %176 = vector.broadcast %cst_38 : f32 to vector<64x512xf32>
    %177 = arith.mulf %176, %173 : vector<64x512xf32>
    %178 = arith.mulf %177, %173 : vector<64x512xf32>
    %179 = arith.mulf %178, %173 : vector<64x512xf32>
    %180 = arith.addf %173, %179 : vector<64x512xf32>
    %cst_39 = arith.constant 0.797884583 : f32
    %181 = vector.broadcast %cst_39 : f32 to vector<64x512xf32>
    %182 = arith.mulf %181, %180 : vector<64x512xf32>
    %183 = math.tanh %182 : vector<64x512xf32>
    %cst_40 = arith.constant 1.000000e+00 : f32
    %184 = vector.broadcast %cst_40 : f32 to vector<64x512xf32>
    %185 = arith.addf %184, %183 : vector<64x512xf32>
    %186 = arith.mulf %175, %185 : vector<64x512xf32>
    %c1_i32_41 = arith.constant 1 : i32
    %187 = tpu.memref_slice %arg9[%c1_i32_41] : memref<2x!tpu.dma_semaphore, #tpu.memory_space<semaphore_mem>> -> memref<1x!tpu.dma_semaphore, #tpu.memory_space<semaphore_mem>>
    %188 = tpu.memref_squeeze %187 : memref<1x!tpu.dma_semaphore, #tpu.memory_space<semaphore_mem>> -> memref<!tpu.dma_semaphore, #tpu.memory_space<semaphore_mem>>
    tpu.wait_dma2 semaphore(%188 : memref<!tpu.dma_semaphore, #tpu.memory_space<semaphore_mem>>) src(%arg5 : memref<1024x128xbf16, #tpu.memory_space<any>>) dst(%arg8 : memref<1024x128xbf16, #tpu.memory_space<vmem>>)
    %c0_42 = arith.constant 0 : index
    %c0_43 = arith.constant 0 : index
    %189 = vector.load %arg8[%c0_42, %c0_43] : memref<1024x128xbf16, #tpu.memory_space<vmem>>, vector<512x128xbf16>
    %190 = arith.truncf %186 : vector<64x512xf32> to vector<64x512xbf16>
    %cst_44 = arith.constant dense<0.000000e+00> : vector<64x128xf32>
    %191 = tpu.matmul %190, %189, %cst_44 {dimension_numbers = #tpu.dot_dimension_numbers<[1], [0], [0], [1], [0, 0, 1, 1], [], []>} : vector<64x512xbf16>, vector<512x128xbf16>, vector<64x128xf32> -> vector<64x128xf32>
    %192 = vector.extract_strided_slice %4 {offsets = [13, 0], sizes = [1, 128], strides = [1, 1]} : vector<17x128xf32> to vector<1x128xf32>
    %193 = vector.broadcast %192 : vector<1x128xf32> to vector<64x128xf32>
    %194 = arith.addf %191, %193 : vector<64x128xf32>
    %195 = arith.addf %143, %194 : vector<64x128xf32>
    %c0_45 = arith.constant 0 : index
    %c512 = arith.constant 512 : index
    %196 = vector.load %arg3[%c0_45, %c512] : memref<128x768xbf16, #tpu.memory_space<vmem>>, vector<128x256xbf16>
    %197 = arith.truncf %195 : vector<64x128xf32> to vector<64x128xbf16>
    %cst_46 = arith.constant dense<0.000000e+00> : vector<64x256xf32>
    %198 = tpu.matmul %197, %196, %cst_46 {dimension_numbers = #tpu.dot_dimension_numbers<[1], [0], [0], [1], [0, 0, 1, 1], [], []>} : vector<64x128xbf16>, vector<128x256xbf16>, vector<64x256xf32> -> vector<64x256xf32>
    %199 = vector.extract_strided_slice %198 {offsets = [0, 0], sizes = [32, 128], strides = [1, 1]} : vector<64x256xf32> to vector<32x128xf32>
    %200 = vector.extract_strided_slice %4 {offsets = [14, 0], sizes = [1, 128], strides = [1, 1]} : vector<17x128xf32> to vector<1x128xf32>
    %201 = vector.broadcast %200 : vector<1x128xf32> to vector<32x128xf32>
    %202 = arith.addf %199, %201 : vector<32x128xf32>
    %203 = vector.extract_strided_slice %198 {offsets = [32, 128], sizes = [32, 128], strides = [1, 1]} : vector<64x256xf32> to vector<32x128xf32>
    %204 = vector.extract_strided_slice %4 {offsets = [15, 0], sizes = [1, 128], strides = [1, 1]} : vector<17x128xf32> to vector<1x128xf32>
    %205 = vector.broadcast %204 : vector<1x128xf32> to vector<32x128xf32>
    %206 = arith.addf %203, %205 : vector<32x128xf32>
    %207 = arith.addf %202, %206 : vector<32x128xf32>
    %cst_47 = arith.constant dense<0.000000e+00> : vector<32xf32>
    %208 = vector.multi_reduction <add>, %207, %cst_47 [1] : vector<32x128xf32> to vector<32xf32>
    %209 = vector.shape_cast %208 : vector<32xf32> to vector<32x1xf32>
    %cst_48 = arith.constant 1.280000e+02 : f32
    %210 = vector.broadcast %cst_48 : f32 to vector<32x1xf32>
    %211 = arith.divf %209, %210 : vector<32x1xf32>
    %212 = vector.broadcast %211 : vector<32x1xf32> to vector<32x128xf32>
    %213 = arith.subf %207, %212 : vector<32x128xf32>
    %214 = arith.mulf %213, %213 : vector<32x128xf32>
    %cst_49 = arith.constant dense<0.000000e+00> : vector<32xf32>
    %215 = vector.multi_reduction <add>, %214, %cst_49 [1] : vector<32x128xf32> to vector<32xf32>
    %216 = vector.shape_cast %215 : vector<32xf32> to vector<32x1xf32>
    %cst_50 = arith.constant 1.280000e+02 : f32
    %217 = vector.broadcast %cst_50 : f32 to vector<32x1xf32>
    %218 = arith.divf %216, %217 : vector<32x1xf32>
    %cst_51 = arith.constant 9.99999974E-6 : f32
    %219 = vector.broadcast %cst_51 : f32 to vector<32x1xf32>
    %220 = arith.addf %218, %219 : vector<32x1xf32>
    %221 = math.rsqrt %220 : vector<32x1xf32>
    %222 = vector.broadcast %221 : vector<32x1xf32> to vector<32x128xf32>
    %223 = arith.mulf %213, %222 : vector<32x128xf32>
    %224 = vector.extract_strided_slice %4 {offsets = [8, 0], sizes = [1, 128], strides = [1, 1]} : vector<17x128xf32> to vector<1x128xf32>
    %225 = vector.broadcast %224 : vector<1x128xf32> to vector<32x128xf32>
    %226 = arith.mulf %223, %225 : vector<32x128xf32>
    %227 = vector.extract_strided_slice %4 {offsets = [9, 0], sizes = [1, 128], strides = [1, 1]} : vector<17x128xf32> to vector<1x128xf32>
    %228 = vector.broadcast %227 : vector<1x128xf32> to vector<32x128xf32>
    %229 = arith.addf %226, %228 : vector<32x128xf32>
    %cst_52 = arith.constant dense<0.000000e+00> : vector<32xf32>
    %230 = vector.multi_reduction <add>, %229, %cst_52 [1] : vector<32x128xf32> to vector<32xf32>
    %231 = vector.shape_cast %230 : vector<32xf32> to vector<32x1xf32>
    %cst_53 = arith.constant 1.280000e+02 : f32
    %232 = vector.broadcast %cst_53 : f32 to vector<32x1xf32>
    %233 = arith.divf %231, %232 : vector<32x1xf32>
    %234 = vector.broadcast %233 : vector<32x1xf32> to vector<32x128xf32>
    %235 = arith.subf %229, %234 : vector<32x128xf32>
    %236 = arith.mulf %235, %235 : vector<32x128xf32>
    %cst_54 = arith.constant dense<0.000000e+00> : vector<32xf32>
    %237 = vector.multi_reduction <add>, %236, %cst_54 [1] : vector<32x128xf32> to vector<32xf32>
    %238 = vector.shape_cast %237 : vector<32xf32> to vector<32x1xf32>
    %cst_55 = arith.constant 1.280000e+02 : f32
    %239 = vector.broadcast %cst_55 : f32 to vector<32x1xf32>
    %240 = arith.divf %238, %239 : vector<32x1xf32>
    %cst_56 = arith.constant 9.99999974E-6 : f32
    %241 = vector.broadcast %cst_56 : f32 to vector<32x1xf32>
    %242 = arith.addf %240, %241 : vector<32x1xf32>
    %243 = math.rsqrt %242 : vector<32x1xf32>
    %244 = vector.broadcast %243 : vector<32x1xf32> to vector<32x128xf32>
    %245 = arith.mulf %235, %244 : vector<32x128xf32>
    %246 = vector.extract_strided_slice %4 {offsets = [8, 0], sizes = [1, 128], strides = [1, 1]} : vector<17x128xf32> to vector<1x128xf32>
    %247 = vector.broadcast %246 : vector<1x128xf32> to vector<32x128xf32>
    %248 = arith.mulf %245, %247 : vector<32x128xf32>
    %249 = vector.extract_strided_slice %4 {offsets = [9, 0], sizes = [1, 128], strides = [1, 1]} : vector<17x128xf32> to vector<1x128xf32>
    %250 = vector.broadcast %249 : vector<1x128xf32> to vector<32x128xf32>
    %251 = arith.addf %248, %250 : vector<32x128xf32>
    %c0_57 = arith.constant 0 : index
    %c512_58 = arith.constant 512 : index
    %252 = vector.load %arg7[%c0_57, %c512_58] : memref<128x1024xbf16, #tpu.memory_space<vmem>>, vector<128x512xbf16>
    %253 = arith.truncf %251 : vector<32x128xf32> to vector<32x128xbf16>
    %cst_59 = arith.constant dense<0.000000e+00> : vector<32x512xf32>
    %254 = tpu.matmul %253, %252, %cst_59 {dimension_numbers = #tpu.dot_dimension_numbers<[1], [0], [0], [1], [0, 0, 1, 1], [], []>} : vector<32x128xbf16>, vector<128x512xbf16>, vector<32x512xf32> -> vector<32x512xf32>
    %255 = vector.extract_strided_slice %5 {offsets = [1, 0], sizes = [1, 512], strides = [1, 1]} : vector<3x512xf32> to vector<1x512xf32>
    %256 = vector.broadcast %255 : vector<1x512xf32> to vector<32x512xf32>
    %257 = arith.addf %254, %256 : vector<32x512xf32>
    %cst_60 = arith.constant 5.000000e-01 : f32
    %258 = vector.broadcast %cst_60 : f32 to vector<32x512xf32>
    %259 = arith.mulf %258, %257 : vector<32x512xf32>
    %cst_61 = arith.constant 4.471500e-02 : f32
    %260 = vector.broadcast %cst_61 : f32 to vector<32x512xf32>
    %261 = arith.mulf %260, %257 : vector<32x512xf32>
    %262 = arith.mulf %261, %257 : vector<32x512xf32>
    %263 = arith.mulf %262, %257 : vector<32x512xf32>
    %264 = arith.addf %257, %263 : vector<32x512xf32>
    %cst_62 = arith.constant 0.797884583 : f32
    %265 = vector.broadcast %cst_62 : f32 to vector<32x512xf32>
    %266 = arith.mulf %265, %264 : vector<32x512xf32>
    %267 = math.tanh %266 : vector<32x512xf32>
    %cst_63 = arith.constant 1.000000e+00 : f32
    %268 = vector.broadcast %cst_63 : f32 to vector<32x512xf32>
    %269 = arith.addf %268, %267 : vector<32x512xf32>
    %270 = arith.mulf %259, %269 : vector<32x512xf32>
    %c512_64 = arith.constant 512 : index
    %c0_65 = arith.constant 0 : index
    %271 = vector.load %arg8[%c512_64, %c0_65] : memref<1024x128xbf16, #tpu.memory_space<vmem>>, vector<512x128xbf16>
    %272 = arith.truncf %270 : vector<32x512xf32> to vector<32x512xbf16>
    %cst_66 = arith.constant dense<0.000000e+00> : vector<32x128xf32>
    %273 = tpu.matmul %272, %271, %cst_66 {dimension_numbers = #tpu.dot_dimension_numbers<[1], [0], [0], [1], [0, 0, 1, 1], [], []>} : vector<32x512xbf16>, vector<512x128xbf16>, vector<32x128xf32> -> vector<32x128xf32>
    %274 = vector.extract_strided_slice %4 {offsets = [16, 0], sizes = [1, 128], strides = [1, 1]} : vector<17x128xf32> to vector<1x128xf32>
    %275 = vector.broadcast %274 : vector<1x128xf32> to vector<32x128xf32>
    %276 = arith.addf %273, %275 : vector<32x128xf32>
    %277 = arith.addf %251, %276 : vector<32x128xf32>
    %cst_67 = arith.constant dense<0.000000e+00> : vector<32xf32>
    %278 = vector.multi_reduction <add>, %277, %cst_67 [1] : vector<32x128xf32> to vector<32xf32>
    %279 = vector.shape_cast %278 : vector<32xf32> to vector<32x1xf32>
    %cst_68 = arith.constant 1.280000e+02 : f32
    %280 = vector.broadcast %cst_68 : f32 to vector<32x1xf32>
    %281 = arith.divf %279, %280 : vector<32x1xf32>
    %282 = vector.broadcast %281 : vector<32x1xf32> to vector<32x128xf32>
    %283 = arith.subf %277, %282 : vector<32x128xf32>
    %284 = arith.mulf %283, %283 : vector<32x128xf32>
    %cst_69 = arith.constant dense<0.000000e+00> : vector<32xf32>
    %285 = vector.multi_reduction <add>, %284, %cst_69 [1] : vector<32x128xf32> to vector<32xf32>
    %286 = vector.shape_cast %285 : vector<32xf32> to vector<32x1xf32>
    %cst_70 = arith.constant 1.280000e+02 : f32
    %287 = vector.broadcast %cst_70 : f32 to vector<32x1xf32>
    %288 = arith.divf %286, %287 : vector<32x1xf32>
    %cst_71 = arith.constant 9.99999997E-7 : f32
    %289 = vector.broadcast %cst_71 : f32 to vector<32x1xf32>
    %290 = arith.addf %288, %289 : vector<32x1xf32>
    %291 = math.rsqrt %290 : vector<32x1xf32>
    %292 = vector.broadcast %291 : vector<32x1xf32> to vector<32x128xf32>
    %293 = arith.mulf %283, %292 : vector<32x128xf32>
    %294 = vector.extract_strided_slice %4 {offsets = [10, 0], sizes = [1, 128], strides = [1, 1]} : vector<17x128xf32> to vector<1x128xf32>
    %295 = vector.broadcast %294 : vector<1x128xf32> to vector<32x128xf32>
    %296 = arith.mulf %293, %295 : vector<32x128xf32>
    %297 = vector.extract_strided_slice %4 {offsets = [11, 0], sizes = [1, 128], strides = [1, 1]} : vector<17x128xf32> to vector<1x128xf32>
    %298 = vector.broadcast %297 : vector<1x128xf32> to vector<32x128xf32>
    %299 = arith.addf %296, %298 : vector<32x128xf32>
    %c0_72 = arith.constant 0 : index
    %c0_73 = arith.constant 0 : index
    %300 = vector.load %arg6[%c0_72, %c0_73] : memref<64x128xf32, #tpu.memory_space<vmem>>, vector<32x128xf32>
    tpu.vector_store %arg6[%c0_72, %c0_73], %202 {strides = array<i32>} : memref<64x128xf32, #tpu.memory_space<vmem>>, vector<32x128xf32>,
    %301 = arith.addf %206, %299 : vector<32x128xf32>
    %c32 = arith.constant 32 : index
    %c0_74 = arith.constant 0 : index
    %302 = vector.load %arg6[%c32, %c0_74] : memref<64x128xf32, #tpu.memory_space<vmem>>, vector<32x128xf32>
    tpu.vector_store %arg6[%c32, %c0_74], %301 {strides = array<i32>} : memref<64x128xf32, #tpu.memory_space<vmem>>, vector<32x128xf32>,
    return
  }
}

</mosaic_0001>

<llo_original>
// kernel: tpu_custom_call.1
$region0: #{tpu_custom_call.1}
  #allocation0 [shape = 'u32[]', space=smem, size = 0x4, offset = 0x4, fixed_abs, tag = 'smem constant byte address 0x4 - core index']
  #allocation1 [shape = 'u32[144,128]{1,0:T(1,128)}', space=vmem, size = 0x12000, scoped, tag = 'internal scratch']
  #allocation2 [shape = 'bf16[128,1024]{1,0:T(8,128)(2,1)}', space=vmem, size = 0x40000, scoped, tag = 'scratch operand']
  #allocation3 [shape = 'bf16[1024,128]{1,0:T(8,128)(2,1)}', space=vmem, size = 0x40000, scoped, tag = 'scratch operand']
  #allocation4 [shape = 's32[2]{0}', space=sflag, size = 0x8, scoped, tag = 'scratch operand']
  #allocation14 [shape = 's32[]', space=sflag, size = 0x4, offset = 0, fixed_abs, tag = 'sflag constant byte address 0x0 - dummy sync flag']
  #allocation15 [shape = 's32[]', space=sflag, size = 0x4, offset = 0, fixed_abs, tag = 'sflag constant byte address 0x0 - dummy sync flag']
  #allocation16 [shape = 'u32[]', space=smem, size = 0x4, offset = 0x44, fixed_abs, tag = 'smem constant byte address 0x44 - assertion arg 0']
  #allocation17 [shape = 'u32[]', space=smem, size = 0x4, offset = 0x48, fixed_abs, tag = 'smem constant byte address 0x48 - assertion arg 1']
  #allocation18 [shape = 's32[]', space=sflag, size = 0x4, offset = 0, fixed_abs, tag = 'sflag constant byte address 0x0 - dummy sync flag']
  #allocation19 [shape = 's32[]', space=sflag, size = 0x4, offset = 0, fixed_abs, tag = 'sflag constant byte address 0x0 - dummy sync flag']
  %s0 = inlined_call_operand.hbm [shape: f32[64,128], index: 0, kind: input, shape index: {}]
  %s1 = inlined_call_operand.hbm [shape: f32[17,128], index: 1, kind: input, shape index: {}]
  %s2 = inlined_call_operand.hbm [shape: f32[3,512], index: 2, kind: input, shape index: {}]
  %s3 = inlined_call_operand.hbm [shape: bf16[128,768], index: 3, kind: input, shape index: {}]
  %s4 = inlined_call_operand.hbm [shape: bf16[128,1024], index: 4, kind: input, shape index: {}]
  %s5 = inlined_call_operand.hbm [shape: bf16[1024,128], index: 5, kind: input, shape index: {}]
  %s6 = inlined_call_operand.hbm [shape: f32[64,128], index: 6, kind: output, shape index: {}]
  %s7 = sld [smem:[#allocation0]]
  $region50: #{tpu_custom_call.1} parent=0
    _
  %s9 = ssub.s32 1, %s7
  %s10 = scalar_select 0, %s9, %s7
  $region1: #{tpu_custom_call.1} parent=0
    #allocation5 [shape = 'u8[32768]{0}', space=vmem, size = 0x8000, scoped, tag = 'input window, operand 0, single buffered']
    #allocation6 [shape = 's32[1]{0}', space=sflag, size = 0x4, scoped, tag = 'scoped memory for tpu_custom_call.1']
    #allocation7 [shape = 's32[1]{0}', space=sflag, size = 0x4, scoped, tag = 'scoped memory for tpu_custom_call.1']
    #allocation8 [shape = 'u8[12288]{0}', space=vmem, size = 0x3000, scoped, tag = 'input window, operand 1, single buffered']
    #allocation9 [shape = 's32[1]{0}', space=sflag, size = 0x4, scoped, tag = 'scoped memory for tpu_custom_call.1']
    #allocation10 [shape = 'u8[8192]{0}', space=vmem, size = 0x2000, scoped, tag = 'input window, operand 2, single buffered']
    #allocation11 [shape = 'u8[196608]{0}', space=vmem, size = 0x30000, scoped, tag = 'input window, operand 3, single buffered']
    #allocation12 [shape = 's32[1]{0}', space=sflag, size = 0x4, scoped, tag = 'scoped memory for tpu_custom_call.1']
    #allocation13 [shape = 'u8[32768]{0}', space=vmem, size = 0x8000, scoped, tag = 'output window, operand 0, single buffered']
    %11 = vsyncpa [#allocation6], 0
    %12 = vsyncpa [#allocation9], 0
    %13 = vsyncpa [#allocation12], 0
    %14 = vsyncpa [#allocation7], 0
    // Predicated region
    $region2: #{tpu_custom_call.1} parent=1 // pred_check
      _
    $region3: #{tpu_custom_call.1} parent=1 // pred_check_branch
      %16 = sbr.rel (0) target = $region5
    $region4: #{tpu_custom_call.1} parent=1 // pred_region
      %s18 = ssub.s32 1024, 1024
      %19 = vsyncadd [#allocation6], %s18
      %s20 = sshll.u32 [#allocation5], 4
      %s21 = int_to_ptr.vmem [resolvable:$true] %s20
      %26 = dma.hbm_to_vmem [thread:$0]  %s0, 1024, %s21, [#allocation6], 128, 128, 8
    $region5: #{tpu_custom_call.1} parent=1 // pred_fallthru
      _
    // Predicated region
    $region6: #{tpu_custom_call.1} parent=1 // pred_check
      _
    $region7: #{tpu_custom_call.1} parent=1 // pred_check_branch
      %28 = sbr.rel (0) target = $region9
    $region8: #{tpu_custom_call.1} parent=1 // pred_region
      %s30 = ssub.s32 384, 384
      %31 = vsyncadd [#allocation9], %s30
      %s32 = sshll.u32 [#allocation8], 4
      %s33 = int_to_ptr.vmem [resolvable:$true] %s32
      %38 = dma.hbm_to_vmem [thread:$0]  %s1, 384, %s33, [#allocation9], 128, 128, 8
    $region9: #{tpu_custom_call.1} parent=1 // pred_fallthru
      _
    // Predicated region
    $region10: #{tpu_custom_call.1} parent=1 // pred_check
      _
    $region11: #{tpu_custom_call.1} parent=1 // pred_check_branch
      %40 = sbr.rel (0) target = $region13
    $region12: #{tpu_custom_call.1} parent=1 // pred_region
      %s42 = ssub.s32 256, 256
      %43 = vsyncadd [#allocation9], %s42
      %s45 = sshll.u32 [#allocation10], 4
      %s46 = int_to_ptr.vmem [resolvable:$true] %s45
      %48 = dma.hbm_to_vmem [thread:$0]  %s2, 256, %s46, [#allocation9]
    $region13: #{tpu_custom_call.1} parent=1 // pred_fallthru
      _
    // Predicated region
    $region14: #{tpu_custom_call.1} parent=1 // pred_check
      _
    $region15: #{tpu_custom_call.1} parent=1 // pred_check_branch
      %50 = sbr.rel (0) target = $region17
    $region16: #{tpu_custom_call.1} parent=1 // pred_region
      %s52 = ssub.s32 6144, 6144
      %53 = vsyncadd [#allocation12], %s52
      %s54 = sshll.u32 [#allocation11], 4
      %s55 = int_to_ptr.vmem [resolvable:$true] %s54
      %60 = dma.hbm_to_vmem [thread:$0]  %s3, 6144, %s55, [#allocation12], 384, 384, 24
    $region17: #{tpu_custom_call.1} parent=1 // pred_fallthru
      _
    // Predicated region
    $region18: #{tpu_custom_call.1} parent=1 // pred_check
      _
    $region19: #{tpu_custom_call.1} parent=1 // pred_check_branch
      %62 = sbr.rel (0) target = $region21
    $region20: #{tpu_custom_call.1} parent=1 // pred_region
      %63 = dma.done [#allocation6], 1024
    $region21: #{tpu_custom_call.1} parent=1 // pred_fallthru
      _
    // Predicated region
    $region22: #{tpu_custom_call.1} parent=1 // pred_check
      _
    $region23: #{tpu_custom_call.1} parent=1 // pred_check_branch
      %65 = sbr.rel (0) target = $region25
    $region24: #{tpu_custom_call.1} parent=1 // pred_region
      %66 = dma.done [#allocation9], 384
    $region25: #{tpu_custom_call.1} parent=1 // pred_fallthru
      _
    // Predicated region
    $region26: #{tpu_custom_call.1} parent=1 // pred_check
      _
    $region27: #{tpu_custom_call.1} parent=1 // pred_check_branch
      %68 = sbr.rel (0) target = $region29
    $region28: #{tpu_custom_call.1} parent=1 // pred_region
      %69 = dma.done [#allocation9], 256
    $region29: #{tpu_custom_call.1} parent=1 // pred_fallthru
      _
    // Predicated region
    $region30: #{tpu_custom_call.1} parent=1 // pred_check
      _
    $region31: #{tpu_custom_call.1} parent=1 // pred_check_branch
      %71 = sbr.rel (0) target = $region33
    $region32: #{tpu_custom_call.1} parent=1 // pred_region
      %72 = dma.done [#allocation12], 6144
    $region33: #{tpu_custom_call.1} parent=1 // pred_fallthru
      _
    // Predicated region
    $region34: #{tpu_custom_call.1} parent=1 // pred_check
      _
    $region35: #{tpu_custom_call.1} parent=1 // pred_check_branch
      %75 = sbr.rel target = $region37
    $region36: #{tpu_custom_call.1} parent=1 // pred_region
      %76 = sst [smem:[#allocation16]] [#allocation15]
      %77 = sst [smem:[#allocation17]] [#allocation14]
    $region37: #{tpu_custom_call.1} parent=1 // pred_fallthru
      _
    %79 = shalt.err (0)
    %s81 = sshll.u32 [#allocation2], 4
    %s82 = int_to_ptr.vmem [resolvable:$true] %s81
    %84 = dma.hbm_to_vmem [thread:$0]  %s4, 8192, %s82, [#allocation4]
    %s85 = scalar_lea.sflag [#allocation4], 1
    // Predicated region
    $region38: #{tpu_custom_call.1} parent=1 // pred_check
      _
    $region39: #{tpu_custom_call.1} parent=1 // pred_check_branch
      %87 = sbr.rel target = $region41
    $region40: #{tpu_custom_call.1} parent=1 // pred_region
      %88 = sst [smem:[#allocation16]] [#allocation19]
      %89 = sst [smem:[#allocation17]] [#allocation18]
    $region41: #{tpu_custom_call.1} parent=1 // pred_fallthru
      _
    %91 = shalt.err (0)
    %s93 = sshll.u32 [#allocation3], 4
    %s94 = int_to_ptr.vmem [resolvable:$true] %s93
    %96 = dma.hbm_to_vmem [thread:$0]  %s5, 8192, %s94, %s85
    %v97 = vld [vmem:[#allocation8] sm:$0xff]
    %v98 = vld [vmem:[#allocation8 + $0x8] sm:$0xff]
    %v99 = vld [vmem:[#allocation8 + $0x10] sm:$0x1]
    %v100 = vld [vmem:[#allocation10] sm:$0x77]
    %v101 = vld [vmem:[#allocation10 + $0x8] sm:$0x77]
    %v102 = vld [vmem:[#allocation5] sm:$0xff]
    %v103 = vld [vmem:[#allocation5 + $0x8] sm:$0xff]
    %v104 = vld [vmem:[#allocation5 + $0x10] sm:$0xff]
    %v105 = vld [vmem:[#allocation5 + $0x18] sm:$0xff]
    %v106 = vld [vmem:[#allocation5 + $0x20] sm:$0xff]
    %v107 = vld [vmem:[#allocation5 + $0x28] sm:$0xff]
    %v108 = vld [vmem:[#allocation5 + $0x30] sm:$0xff]
    %v109 = vld [vmem:[#allocation5 + $0x38] sm:$0xff]
    %110 = vadd.xlane.f32.xlu0 %v102
    %v111 = vpop.xlane.xlu0 %110
    %112 = vadd.xlane.f32.xlu0 %v103
    %v113 = vpop.xlane.xlu0 %112
    %114 = vadd.xlane.f32.xlu0 %v104
    %v115 = vpop.xlane.xlu0 %114
    %116 = vadd.xlane.f32.xlu0 %v105
    %v117 = vpop.xlane.xlu0 %116
    %v118 = vrcp.pop 128.0
    %v119 = vmul.f32 %v111, %v118
    %v120 = vmul.f32 %v113, %v118
    %v121 = vmul.f32 %v115, %v118
    %v122 = vmul.f32 %v117, %v118
    %v123 = vsub.f32 %v102, %v119
    %v124 = vsub.f32 %v103, %v120
    %v125 = vsub.f32 %v104, %v121
    %v126 = vsub.f32 %v105, %v122
    %v127 = vmul.f32 %v123, %v123
    %v128 = vmul.f32 %v124, %v124
    %v129 = vmul.f32 %v125, %v125
    %v130 = vmul.f32 %v126, %v126
    %131 = vadd.xlane.f32.xlu0 %v127
    %v132 = vpop.xlane.xlu0 %131
    %133 = vadd.xlane.f32.xlu0 %v128
    %v134 = vpop.xlane.xlu0 %133
    %135 = vadd.xlane.f32.xlu0 %v129
    %v136 = vpop.xlane.xlu0 %135
    %137 = vadd.xlane.f32.xlu0 %v130
    %v138 = vpop.xlane.xlu0 %137
    %v139 = vmul.f32 %v132, %v118
    %v140 = vmul.f32 %v134, %v118
    %v141 = vmul.f32 %v136, %v118
    %v142 = vmul.f32 %v138, %v118
    %v143 = vadd.f32 %v139, 1e-05
    %v144 = vadd.f32 %v140, 1e-05
    %v145 = vadd.f32 %v141, 1e-05
    %v146 = vadd.f32 %v142, 1e-05
    %v147 = vrsqrt.pop %v143
    %v148 = vrsqrt.pop %v144
    %v149 = vrsqrt.pop %v145
    %v150 = vrsqrt.pop %v146
    %v151 = vmul.f32 %v123, %v147
    %v152 = vmul.f32 %v124, %v148
    %v153 = vmul.f32 %v125, %v149
    %v154 = vmul.f32 %v126, %v150
    %v155 = vlaneseq
    %v156 = vshrl.u32 %v155, 7
    %v157 = vsub.s32 0, %v156
    %v158 = vrot.slane %v97, %v157
    %v159 = vmul.f32 %v151, %v158
    %v160 = vmul.f32 %v152, %v158
    %v161 = vmul.f32 %v153, %v158
    %v162 = vmul.f32 %v154, %v158
    %v163 = vlaneseq
    %v164 = vshrl.u32 %v163, 7
    %v165 = vsub.s32 1, %v164
    %v166 = vrot.slane %v97, %v165
    %v167 = vadd.f32 %v159, %v166
    %v168 = vadd.f32 %v160, %v166
    %v169 = vadd.f32 %v161, %v166
    %v170 = vadd.f32 %v162, %v166
    %171 = vadd.xlane.f32.xlu0 %v106
    %v172 = vpop.xlane.xlu0 %171
    %173 = vadd.xlane.f32.xlu0 %v107
    %v174 = vpop.xlane.xlu0 %173
    %175 = vadd.xlane.f32.xlu0 %v108
    %v176 = vpop.xlane.xlu0 %175
    %177 = vadd.xlane.f32.xlu0 %v109
    %v178 = vpop.xlane.xlu0 %177
    %v179 = vmul.f32 %v172, %v118
    %v180 = vmul.f32 %v174, %v118
    %v181 = vmul.f32 %v176, %v118
    %v182 = vmul.f32 %v178, %v118
    %v183 = vsub.f32 %v106, %v179
    %v184 = vsub.f32 %v107, %v180
    %v185 = vsub.f32 %v108, %v181
    %v186 = vsub.f32 %v109, %v182
    %v187 = vmul.f32 %v183, %v183
    %v188 = vmul.f32 %v184, %v184
    %v189 = vmul.f32 %v185, %v185
    %v190 = vmul.f32 %v186, %v186
    %191 = vadd.xlane.f32.xlu0 %v187
    %v192 = vpop.xlane.xlu0 %191
    %193 = vadd.xlane.f32.xlu0 %v188
    %v194 = vpop.xlane.xlu0 %193
    %195 = vadd.xlane.f32.xlu0 %v189
    %v196 = vpop.xlane.xlu0 %195
    %197 = vadd.xlane.f32.xlu0 %v190
    %v198 = vpop.xlane.xlu0 %197
    %v199 = vmul.f32 %v192, %v118
    %v200 = vmul.f32 %v194, %v118
    %v201 = vmul.f32 %v196, %v118
    %v202 = vmul.f32 %v198, %v118
    %v203 = vadd.f32 %v199, 1e-05
    %v204 = vadd.f32 %v200, 1e-05
    %v205 = vadd.f32 %v201, 1e-05
    %v206 = vadd.f32 %v202, 1e-05
    %v207 = vrsqrt.pop %v203
    %v208 = vrsqrt.pop %v204
    %v209 = vrsqrt.pop %v205
    %v210 = vrsqrt.pop %v206
    %v211 = vmul.f32 %v183, %v207
    %v212 = vmul.f32 %v184, %v208
    %v213 = vmul.f32 %v185, %v209
    %v214 = vmul.f32 %v186, %v210
    %v215 = vlaneseq
    %v216 = vshrl.u32 %v215, 7
    %v217 = vsub.s32 2, %v216
    %v218 = vrot.slane %v97, %v217
    %v219 = vmul.f32 %v211, %v218
    %v220 = vmul.f32 %v212, %v218
    %v221 = vmul.f32 %v213, %v218
    %v222 = vmul.f32 %v214, %v218
    %v223 = vlaneseq
    %v224 = vshrl.u32 %v223, 7
    %v225 = vsub.s32 3, %v224
    %v226 = vrot.slane %v97, %v225
    %v227 = vadd.f32 %v219, %v226
    %v228 = vadd.f32 %v220, %v226
    %v229 = vadd.f32 %v221, %v226
    %v230 = vadd.f32 %v222, %v226
    %231 = vadd.xlane.f32.xlu0 %v167
    %v232 = vpop.xlane.xlu0 %231
    %233 = vadd.xlane.f32.xlu0 %v168
    %v234 = vpop.xlane.xlu0 %233
    %235 = vadd.xlane.f32.xlu0 %v169
    %v236 = vpop.xlane.xlu0 %235
    %237 = vadd.xlane.f32.xlu0 %v170
    %v238 = vpop.xlane.xlu0 %237
    %239 = vadd.xlane.f32.xlu0 %v227
    %v240 = vpop.xlane.xlu0 %239
    %241 = vadd.xlane.f32.xlu0 %v228
    %v242 = vpop.xlane.xlu0 %241
    %243 = vadd.xlane.f32.xlu0 %v229
    %v244 = vpop.xlane.xlu0 %243
    %245 = vadd.xlane.f32.xlu0 %v230
    %v246 = vpop.xlane.xlu0 %245
    %v247 = vmul.f32 %v232, %v118
    %v248 = vmul.f32 %v234, %v118
    %v249 = vmul.f32 %v236, %v118
    %v250 = vmul.f32 %v238, %v118
    %v251 = vmul.f32 %v240, %v118
    %v252 = vmul.f32 %v242, %v118
    %v253 = vmul.f32 %v244, %v118
    %v254 = vmul.f32 %v246, %v118
    %v255 = vsub.f32 %v167, %v247
    %v256 = vsub.f32 %v168, %v248
    %v257 = vsub.f32 %v169, %v249
    %v258 = vsub.f32 %v170, %v250
    %v259 = vsub.f32 %v227, %v251
    %v260 = vsub.f32 %v228, %v252
    %v261 = vsub.f32 %v229, %v253
    %v262 = vsub.f32 %v230, %v254
    %v263 = vmul.f32 %v255, %v255
    %v264 = vmul.f32 %v256, %v256
    %v265 = vmul.f32 %v257, %v257
    %v266 = vmul.f32 %v258, %v258
    %v267 = vmul.f32 %v259, %v259
    %v268 = vmul.f32 %v260, %v260
    %v269 = vmul.f32 %v261, %v261
    %v270 = vmul.f32 %v262, %v262
    %271 = vadd.xlane.f32.xlu0 %v263
    %v272 = vpop.xlane.xlu0 %271
    %273 = vadd.xlane.f32.xlu0 %v264
    %v274 = vpop.xlane.xlu0 %273
    %275 = vadd.xlane.f32.xlu0 %v265
    %v276 = vpop.xlane.xlu0 %275
    %277 = vadd.xlane.f32.xlu0 %v266
    %v278 = vpop.xlane.xlu0 %277
    %279 = vadd.xlane.f32.xlu0 %v267
    %v280 = vpop.xlane.xlu0 %279
    %281 = vadd.xlane.f32.xlu0 %v268
    %v282 = vpop.xlane.xlu0 %281
    %283 = vadd.xlane.f32.xlu0 %v269
    %v284 = vpop.xlane.xlu0 %283
    %285 = vadd.xlane.f32.xlu0 %v270
    %v286 = vpop.xlane.xlu0 %285
    %v287 = vmul.f32 %v272, %v118
    %v288 = vmul.f32 %v274, %v118
    %v289 = vmul.f32 %v276, %v118
    %v290 = vmul.f32 %v278, %v118
    %v291 = vmul.f32 %v280, %v118
    %v292 = vmul.f32 %v282, %v118
    %v293 = vmul.f32 %v284, %v118
    %v294 = vmul.f32 %v286, %v118
    %v295 = vadd.f32 %v287, 1e-06
    %v296 = vadd.f32 %v288, 1e-06
    %v297 = vadd.f32 %v289, 1e-06
    %v298 = vadd.f32 %v290, 1e-06
    %v299 = vadd.f32 %v291, 1e-06
    %v300 = vadd.f32 %v292, 1e-06
    %v301 = vadd.f32 %v293, 1e-06
    %v302 = vadd.f32 %v294, 1e-06
    %v303 = vrsqrt.pop %v295
    %v304 = vrsqrt.pop %v296
    %v305 = vrsqrt.pop %v297
    %v306 = vrsqrt.pop %v298
    %v307 = vrsqrt.pop %v299
    %v308 = vrsqrt.pop %v300
    %v309 = vrsqrt.pop %v301
    %v310 = vrsqrt.pop %v302
    %v311 = vmul.f32 %v255, %v303
    %v312 = vmul.f32 %v256, %v304
    %v313 = vmul.f32 %v257, %v305
    %v314 = vmul.f32 %v258, %v306
    %v315 = vmul.f32 %v259, %v307
    %v316 = vmul.f32 %v260, %v308
    %v317 = vmul.f32 %v261, %v309
    %v318 = vmul.f32 %v262, %v310
    %v319 = vlaneseq
    %v320 = vshrl.u32 %v319, 7
    %v321 = vsub.s32 4, %v320
    %v322 = vrot.slane %v97, %v321
    %v323 = vmul.f32 %v311, %v322
    %v324 = vmul.f32 %v312, %v322
    %v325 = vmul.f32 %v313, %v322
    %v326 = vmul.f32 %v314, %v322
    %v327 = vmul.f32 %v315, %v322
    %v328 = vmul.f32 %v316, %v322
    %v329 = vmul.f32 %v317, %v322
    %v330 = vmul.f32 %v318, %v322
    %v331 = vlaneseq
    %v332 = vshrl.u32 %v331, 7
    %v333 = vsub.s32 5, %v332
    %v334 = vrot.slane %v97, %v333
    %v335 = vadd.f32 %v323, %v334
    %v336 = vadd.f32 %v324, %v334
    %v337 = vadd.f32 %v325, %v334
    %v338 = vadd.f32 %v326, %v334
    %v339 = vadd.f32 %v327, %v334
    %v340 = vadd.f32 %v328, %v334
    %v341 = vadd.f32 %v329, %v334
    %v342 = vadd.f32 %v330, %v334
    %v343 = vpack.c.bf16 %v336, %v335
    %v344 = vpack.c.bf16 %v338, %v337
    %v345 = vpack.c.bf16 %v340, %v339
    %v346 = vpack.c.bf16 %v342, %v341
    %v347 = vld [vmem:[#allocation11] sm:$0xff]
    %v348 = vld [vmem:[#allocation11 + $0x8] sm:$0xf]
    %v349 = vld [vmem:[#allocation11 + $0x18] sm:$0xff]
    %v350 = vld [vmem:[#allocation11 + $0x20] sm:$0xf]
    %v351 = vld [vmem:[#allocation11 + $0x30] sm:$0xff]
    %v352 = vld [vmem:[#allocation11 + $0x38] sm:$0xf]
    %v353 = vld [vmem:[#allocation11 + $0x48] sm:$0xff]
    %v354 = vld [vmem:[#allocation11 + $0x50] sm:$0xf]
    %v355 = vld [vmem:[#allocation11 + $0x60] sm:$0xff]
    %v356 = vld [vmem:[#allocation11 + $0x68] sm:$0xf]
    %v357 = vld [vmem:[#allocation11 + $0x78] sm:$0xff]
    %v358 = vld [vmem:[#allocation11 + $0x80] sm:$0xf]
    %v359 = vld [vmem:[#allocation11 + $0x90] sm:$0xff]
    %v360 = vld [vmem:[#allocation11 + $0x98] sm:$0xf]
    %v361 = vld [vmem:[#allocation11 + $0xa8] sm:$0xff]
    %v362 = vld [vmem:[#allocation11 + $0xb0] sm:$0xf]
    %v363 = vld [vmem:[#allocation11 + $0xc0] sm:$0xff]
    %v364 = vld [vmem:[#allocation11 + $0xc8] sm:$0xf]
    %v365 = vld [vmem:[#allocation11 + $0xd8] sm:$0xff]
    %v366 = vld [vmem:[#allocation11 + $0xe0] sm:$0xf]
    %v367 = vld [vmem:[#allocation11 + $0xf0] sm:$0xff]
    %v368 = vld [vmem:[#allocation11 + $0xf8] sm:$0xf]
    %v369 = vld [vmem:[#allocation11 + $0x108] sm:$0xff]
    %v370 = vld [vmem:[#allocation11 + $0x110] sm:$0xf]
    %v371 = vld [vmem:[#allocation11 + $0x120] sm:$0xff]
    %v372 = vld [vmem:[#allocation11 + $0x128] sm:$0xf]
    %v373 = vld [vmem:[#allocation11 + $0x138] sm:$0xff]
    %v374 = vld [vmem:[#allocation11 + $0x140] sm:$0xf]
    %v375 = vld [vmem:[#allocation11 + $0x150] sm:$0xff]
    %v376 = vld [vmem:[#allocation11 + $0x158] sm:$0xf]
    %v377 = vld [vmem:[#allocation11 + $0x168] sm:$0xff]
    %v378 = vld [vmem:[#allocation11 + $0x170] sm:$0xf]
    %v381 = vlaneseq
    %v382 = vshrl.u32 %v381, 7
    %v383 = vsub.s32 2, %v382
    %v384 = vrot.slane %v100, %v383
    %v385 = vlaneseq
    %v386 = vshrl.u32 %v385, 7
    %v387 = vsub.s32 6, %v386
    %v388 = vrot.slane %v100, %v387
    %v389 = vlaneseq
    %v390 = vshrl.u32 %v389, 7
    %v391 = vsub.s32 2, %v390
    %v392 = vrot.slane %v101, %v391
    %v396 = vlaneseq
    %v397 = vshrl.u32 %v396, 7
    %v398 = vsub.s32 2, %v397
    %v399 = vrot.slane %v384, %v398
    %v400 = vlaneseq
    %v401 = vshrl.u32 %v400, 7
    %v402 = vsub.s32 2, %v401
    %v403 = vrot.slane %v388, %v402
    %v404 = vlaneseq
    %v405 = vshrl.u32 %v404, 7
    %v406 = vsub.s32 2, %v405
    %v407 = vrot.slane %v392, %v406
    %v440 = vunpack.c.l.b16 %v347
    %v441 = vunpack.c.h.b16 %v347
    %v442 = vunpack.c.l.b16 %v348
    %v443 = vunpack.c.l.b16 %v349
    %v444 = vunpack.c.h.b16 %v349
    %v445 = vunpack.c.l.b16 %v350
    %v446 = vunpack.c.l.b16 %v351
    %v447 = vunpack.c.h.b16 %v351
    %v448 = vunpack.c.l.b16 %v352
    %v449 = vunpack.c.l.b16 %v353
    %v450 = vunpack.c.h.b16 %v353
    %v451 = vunpack.c.l.b16 %v354
    %v452 = vunpack.c.l.b16 %v355
    %v453 = vunpack.c.h.b16 %v355
    %v454 = vunpack.c.l.b16 %v356
    %v455 = vunpack.c.l.b16 %v357
    %v456 = vunpack.c.h.b16 %v357
    %v457 = vunpack.c.l.b16 %v358
    %v458 = vunpack.c.l.b16 %v359
    %v459 = vunpack.c.h.b16 %v359
    %v460 = vunpack.c.l.b16 %v360
    %v461 = vunpack.c.l.b16 %v361
    %v462 = vunpack.c.h.b16 %v361
    %v463 = vunpack.c.l.b16 %v362
    %v464 = vunpack.c.l.b16 %v363
    %v465 = vunpack.c.h.b16 %v363
    %v466 = vunpack.c.l.b16 %v364
    %v467 = vunpack.c.l.b16 %v365
    %v468 = vunpack.c.h.b16 %v365
    %v469 = vunpack.c.l.b16 %v366
    %v470 = vunpack.c.l.b16 %v367
    %v471 = vunpack.c.h.b16 %v367
    %v472 = vunpack.c.l.b16 %v368
    %v473 = vunpack.c.l.b16 %v369
    %v474 = vunpack.c.h.b16 %v369
    %v475 = vunpack.c.l.b16 %v370
    %v476 = vunpack.c.l.b16 %v371
    %v477 = vunpack.c.h.b16 %v371
    %v478 = vunpack.c.l.b16 %v372
    %v479 = vunpack.c.l.b16 %v373
    %v480 = vunpack.c.h.b16 %v373
    %v481 = vunpack.c.l.b16 %v374
    %v482 = vunpack.c.l.b16 %v375
    %v483 = vunpack.c.h.b16 %v375
    %v484 = vunpack.c.l.b16 %v376
    %v485 = vunpack.c.l.b16 %v377
    %v486 = vunpack.c.h.b16 %v377
    %v487 = vunpack.c.l.b16 %v378
    %v488 = vpack.c.b16 %v443, %v440
    %v489 = vpack.c.b16 %v444, %v441
    %v490 = vpack.c.b16 %v445, %v442
    %v491 = vpack.c.b16 %v449, %v446
    %v492 = vpack.c.b16 %v450, %v447
    %v493 = vpack.c.b16 %v451, %v448
    %v494 = vpack.c.b16 %v455, %v452
    %v495 = vpack.c.b16 %v456, %v453
    %v496 = vpack.c.b16 %v457, %v454
    %v497 = vpack.c.b16 %v461, %v458
    %v498 = vpack.c.b16 %v462, %v459
    %v499 = vpack.c.b16 %v463, %v460
    %v500 = vpack.c.b16 %v467, %v464
    %v501 = vpack.c.b16 %v468, %v465
    %v502 = vpack.c.b16 %v469, %v466
    %v503 = vpack.c.b16 %v473, %v470
    %v504 = vpack.c.b16 %v474, %v471
    %v505 = vpack.c.b16 %v475, %v472
    %v506 = vpack.c.b16 %v479, %v476
    %v507 = vpack.c.b16 %v480, %v477
    %v508 = vpack.c.b16 %v481, %v478
    %v509 = vpack.c.b16 %v485, %v482
    %v510 = vpack.c.b16 %v486, %v483
    %v511 = vpack.c.b16 %v487, %v484
    %536 = vmatprep.subr.bf16.mxu0 %v510
    %537 = vmatpush1.bf16.msra.mxu0 %v509
    %538 = vmatprep.subr.bf16.mxu0 %v507
    %539 = vmatpush1.bf16.msra.mxu0 %v506
    %540 = vmatprep.subr.bf16.mxu0 %v504
    %541 = vmatpush1.bf16.msra.mxu0 %v503
    %542 = vmatprep.subr.bf16.mxu0 %v501
    %543 = vmatpush1.bf16.msra.mxu0 %v500
    %544 = vmatprep.subr.bf16.mxu0 %v498
    %545 = vmatpush1.bf16.msra.mxu0 %v497
    %546 = vmatprep.subr.bf16.mxu0 %v495
    %547 = vmatpush1.bf16.msra.mxu0 %v494
    %548 = vmatprep.subr.bf16.mxu0 %v492
    %549 = vmatpush1.bf16.msra.mxu0 %v491
    %550 = vmatprep.subr.bf16.mxu0 %v489
    %551 = vmatpush1.bf16.msra.mxu0 %v488
    %552 = vmatprep.subr.bf16.mxu0 0
    %553 = vmatpush2.bf16.msra.mxu0 0
    %554 = vmatprep.subr.bf16.mxu0 0
    %555 = vmatpush2.bf16.msra.mxu0 0
    %556 = vmatprep.subr.bf16.mxu0 0
    %557 = vmatpush2.bf16.msra.mxu0 0
    %558 = vmatprep.subr.bf16.mxu0 0
    %559 = vmatpush2.bf16.msra.mxu0 0
    %560 = vmatprep.subr.bf16.mxu0 0
    %561 = vmatpush2.bf16.msra.mxu0 0
    %562 = vmatprep.subr.bf16.mxu0 0
    %563 = vmatpush2.bf16.msra.mxu0 0
    %564 = vmatprep.subr.bf16.mxu0 0
    %565 = vmatpush2.bf16.msra.mxu0 0
    %566 = vmatprep.subr.bf16.mxu0 0
    %567 = vmatpush2.bf16.msra.mxu0 0
    %568 = vmatprep.mubr.bf16.mxu0 0
    %569 = vmatmul.mubr.bf16.gmra.mxu0 %v343
    %v570 = vpop.f32.mrf.mxu0
    %v571 = vadd.f32 %v399, %v570
    %v572 = vpop.f32.mrf.mxu0
    %v573 = vadd.f32 %v403, %v572
    %v574 = vpop.f32.mrf.mxu0
    %v575 = vadd.f32 %v399, %v574
    %v576 = vpop.f32.mrf.mxu0
    %v577 = vadd.f32 %v403, %v576
    %578 = vmatprep.mubr.bf16.mxu0 0
    %579 = vmatmul.mubr.bf16.gmra.mxu0 %v344
    %v580 = vpop.f32.mrf.mxu0
    %v581 = vadd.f32 %v399, %v580
    %v582 = vpop.f32.mrf.mxu0
    %v583 = vadd.f32 %v403, %v582
    %v584 = vpop.f32.mrf.mxu0
    %v585 = vadd.f32 %v399, %v584
    %v586 = vpop.f32.mrf.mxu0
    %v587 = vadd.f32 %v403, %v586
    %588 = vmatprep.mubr.bf16.mxu0 0
    %589 = vmatmul.mubr.bf16.gmra.mxu0 %v345
    %v590 = vpop.f32.mrf.mxu0
    %v591 = vadd.f32 %v399, %v590
    %v592 = vpop.f32.mrf.mxu0
    %v593 = vadd.f32 %v403, %v592
    %v594 = vpop.f32.mrf.mxu0
    %v595 = vadd.f32 %v399, %v594
    %v596 = vpop.f32.mrf.mxu0
    %v597 = vadd.f32 %v403, %v596
    %598 = vmatprep.mubr.bf16.mxu0 0
    %599 = vmatmul.mubr.bf16.gmra.mxu0 %v346
    %v600 = vpop.f32.mrf.mxu0
    %v601 = vadd.f32 %v399, %v600
    %v602 = vpop.f32.mrf.mxu0
    %v603 = vadd.f32 %v403, %v602
    %v604 = vpop.f32.mrf.mxu0
    %v605 = vadd.f32 %v399, %v604
    %v606 = vpop.f32.mrf.mxu0
    %v607 = vadd.f32 %v403, %v606
    %608 = vdwg.mxu0
    %609 = vmatprep.subr.bf16.mxu0 0
    %610 = vmatpush1.bf16.msra.mxu0 %v511
    %611 = vmatprep.subr.bf16.mxu0 0
    %612 = vmatpush1.bf16.msra.mxu0 %v508
    %613 = vmatprep.subr.bf16.mxu0 0
    %614 = vmatpush1.bf16.msra.mxu0 %v505
    %615 = vmatprep.subr.bf16.mxu0 0
    %616 = vmatpush1.bf16.msra.mxu0 %v502
    %617 = vmatprep.subr.bf16.mxu0 0
    %618 = vmatpush1.bf16.msra.mxu0 %v499
    %619 = vmatprep.subr.bf16.mxu0 0
    %620 = vmatpush1.bf16.msra.mxu0 %v496
    %621 = vmatprep.subr.bf16.mxu0 0
    %622 = vmatpush1.bf16.msra.mxu0 %v493
    %623 = vmatprep.subr.bf16.mxu0 0
    %624 = vmatpush1.bf16.msra.mxu0 %v490
    %625 = vmatprep.subr.bf16.mxu0 0
    %626 = vmatpush2.bf16.msra.mxu0 0
    %627 = vmatprep.subr.bf16.mxu0 0
    %628 = vmatpush2.bf16.msra.mxu0 0
    %629 = vmatprep.subr.bf16.mxu0 0
    %630 = vmatpush2.bf16.msra.mxu0 0
    %631 = vmatprep.subr.bf16.mxu0 0
    %632 = vmatpush2.bf16.msra.mxu0 0
    %633 = vmatprep.subr.bf16.mxu0 0
    %634 = vmatpush2.bf16.msra.mxu0 0
    %635 = vmatprep.subr.bf16.mxu0 0
    %636 = vmatpush2.bf16.msra.mxu0 0
    %637 = vmatprep.subr.bf16.mxu0 0
    %638 = vmatpush2.bf16.msra.mxu0 0
    %639 = vmatprep.subr.bf16.mxu0 0
    %640 = vmatpush2.bf16.msra.mxu0 0
    %641 = vmatprep.mubr.bf16.mxu0 0
    %642 = vmatmul.mubr.bf16.gmra.mxu0 %v343
    %v643 = vpop.f32.mrf.mxu0
    %v644 = vadd.f32 %v407, %v643
    %v645 = vpop.f32.mrf.mxu0
    %v646 = vpop.f32.mrf.mxu0
    %v647 = vadd.f32 %v407, %v646
    %v648 = vpop.f32.mrf.mxu0
    %649 = vmatprep.mubr.bf16.mxu0 0
    %650 = vmatmul.mubr.bf16.gmra.mxu0 %v344
    %v651 = vpop.f32.mrf.mxu0
    %v652 = vadd.f32 %v407, %v651
    %v653 = vpop.f32.mrf.mxu0
    %v654 = vpop.f32.mrf.mxu0
    %v655 = vadd.f32 %v407, %v654
    %v656 = vpop.f32.mrf.mxu0
    %657 = vmatprep.mubr.bf16.mxu0 0
    %658 = vmatmul.mubr.bf16.gmra.mxu0 %v345
    %v659 = vpop.f32.mrf.mxu0
    %v660 = vadd.f32 %v407, %v659
    %v661 = vpop.f32.mrf.mxu0
    %v662 = vpop.f32.mrf.mxu0
    %v663 = vadd.f32 %v407, %v662
    %v664 = vpop.f32.mrf.mxu0
    %665 = vmatprep.mubr.bf16.mxu0 0
    %666 = vmatmul.mubr.bf16.gmra.mxu0 %v346
    %v667 = vpop.f32.mrf.mxu0
    %v668 = vadd.f32 %v407, %v667
    %v669 = vpop.f32.mrf.mxu0
    %v670 = vpop.f32.mrf.mxu0
    %v671 = vadd.f32 %v407, %v670
    %v672 = vpop.f32.mrf.mxu0
    %673 = vdwg.mxu0
    %682 = vrot.lane.b32.xlu0 %v571, 96
    %v683 = vpop.permute.xlu0 %682
    %684 = vrot.lane.b32.xlu0 %v575, 96
    %v685 = vpop.permute.xlu0 %684
    %686 = vrot.lane.b32.xlu0 %v581, 96
    %v687 = vpop.permute.xlu0 %686
    %688 = vrot.lane.b32.xlu0 %v585, 96
    %v689 = vpop.permute.xlu0 %688
    %690 = vrot.lane.b32.xlu0 %v591, 96
    %v691 = vpop.permute.xlu0 %690
    %692 = vrot.lane.b32.xlu0 %v595, 96
    %v693 = vpop.permute.xlu0 %692
    %694 = vrot.lane.b32.xlu0 %v601, 96
    %v695 = vpop.permute.xlu0 %694
    %696 = vrot.lane.b32.xlu0 %v605, 96
    %v697 = vpop.permute.xlu0 %696
    %706 = vrot.lane.b32.xlu0 %v571, 64
    %v707 = vpop.permute.xlu0 %706
    %708 = vrot.lane.b32.xlu0 %v575, 64
    %v709 = vpop.permute.xlu0 %708
    %710 = vrot.lane.b32.xlu0 %v581, 64
    %v711 = vpop.permute.xlu0 %710
    %712 = vrot.lane.b32.xlu0 %v585, 64
    %v713 = vpop.permute.xlu0 %712
    %714 = vrot.lane.b32.xlu0 %v591, 64
    %v715 = vpop.permute.xlu0 %714
    %716 = vrot.lane.b32.xlu0 %v595, 64
    %v717 = vpop.permute.xlu0 %716
    %718 = vrot.lane.b32.xlu0 %v601, 64
    %v719 = vpop.permute.xlu0 %718
    %720 = vrot.lane.b32.xlu0 %v605, 64
    %v721 = vpop.permute.xlu0 %720
    %730 = vrot.lane.b32.xlu0 %v571, 32
    %v731 = vpop.permute.xlu0 %730
    %732 = vrot.lane.b32.xlu0 %v575, 32
    %v733 = vpop.permute.xlu0 %732
    %734 = vrot.lane.b32.xlu0 %v581, 32
    %v735 = vpop.permute.xlu0 %734
    %736 = vrot.lane.b32.xlu0 %v585, 32
    %v737 = vpop.permute.xlu0 %736
    %738 = vrot.lane.b32.xlu0 %v591, 32
    %v739 = vpop.permute.xlu0 %738
    %740 = vrot.lane.b32.xlu0 %v595, 32
    %v741 = vpop.permute.xlu0 %740
    %742 = vrot.lane.b32.xlu0 %v601, 32
    %v743 = vpop.permute.xlu0 %742
    %744 = vrot.lane.b32.xlu0 %v605, 32
    %v745 = vpop.permute.xlu0 %744
    %v754 = vpack.c.bf16 %v575, %v571
    %v755 = vpack.c.bf16 %v585, %v581
    %v756 = vpack.c.bf16 %v595, %v591
    %v757 = vpack.c.bf16 %v605, %v601
    %v758 = vpack.c.bf16 %v685, %v683
    %v759 = vpack.c.bf16 %v689, %v687
    %v760 = vpack.c.bf16 %v693, %v691
    %v761 = vpack.c.bf16 %v697, %v695
    %v762 = vpack.c.bf16 %v709, %v707
    %v763 = vpack.c.bf16 %v713, %v711
    %v764 = vpack.c.bf16 %v717, %v715
    %v765 = vpack.c.bf16 %v721, %v719
    %v766 = vpack.c.bf16 %v733, %v731
    %v767 = vpack.c.bf16 %v737, %v735
    %v768 = vpack.c.bf16 %v741, %v739
    %v769 = vpack.c.bf16 %v745, %v743
    %778 = vrot.lane.b32.xlu0 %v573, 96
    %v779 = vpop.permute.xlu0 %778
    %780 = vrot.lane.b32.xlu0 %v577, 96
    %v781 = vpop.permute.xlu0 %780
    %782 = vrot.lane.b32.xlu0 %v583, 96
    %v783 = vpop.permute.xlu0 %782
    %784 = vrot.lane.b32.xlu0 %v587, 96
    %v785 = vpop.permute.xlu0 %784
    %786 = vrot.lane.b32.xlu0 %v593, 96
    %v787 = vpop.permute.xlu0 %786
    %788 = vrot.lane.b32.xlu0 %v597, 96
    %v789 = vpop.permute.xlu0 %788
    %790 = vrot.lane.b32.xlu0 %v603, 96
    %v791 = vpop.permute.xlu0 %790
    %792 = vrot.lane.b32.xlu0 %v607, 96
    %v793 = vpop.permute.xlu0 %792
    %802 = vrot.lane.b32.xlu0 %v573, 64
    %v803 = vpop.permute.xlu0 %802
    %804 = vrot.lane.b32.xlu0 %v577, 64
    %v805 = vpop.permute.xlu0 %804
    %806 = vrot.lane.b32.xlu0 %v583, 64
    %v807 = vpop.permute.xlu0 %806
    %808 = vrot.lane.b32.xlu0 %v587, 64
    %v809 = vpop.permute.xlu0 %808
    %810 = vrot.lane.b32.xlu0 %v593, 64
    %v811 = vpop.permute.xlu0 %810
    %812 = vrot.lane.b32.xlu0 %v597, 64
    %v813 = vpop.permute.xlu0 %812
    %814 = vrot.lane.b32.xlu0 %v603, 64
    %v815 = vpop.permute.xlu0 %814
    %816 = vrot.lane.b32.xlu0 %v607, 64
    %v817 = vpop.permute.xlu0 %816
    %826 = vrot.lane.b32.xlu0 %v573, 32
    %v827 = vpop.permute.xlu0 %826
    %828 = vrot.lane.b32.xlu0 %v577, 32
    %v829 = vpop.permute.xlu0 %828
    %830 = vrot.lane.b32.xlu0 %v583, 32
    %v831 = vpop.permute.xlu0 %830
    %832 = vrot.lane.b32.xlu0 %v587, 32
    %v833 = vpop.permute.xlu0 %832
    %834 = vrot.lane.b32.xlu0 %v593, 32
    %v835 = vpop.permute.xlu0 %834
    %836 = vrot.lane.b32.xlu0 %v597, 32
    %v837 = vpop.permute.xlu0 %836
    %838 = vrot.lane.b32.xlu0 %v603, 32
    %v839 = vpop.permute.xlu0 %838
    %840 = vrot.lane.b32.xlu0 %v607, 32
    %v841 = vpop.permute.xlu0 %840
    %v850 = vpack.c.bf16 %v577, %v573
    %v851 = vpack.c.bf16 %v587, %v583
    %v852 = vpack.c.bf16 %v597, %v593
    %v853 = vpack.c.bf16 %v607, %v603
    %v854 = vpack.c.bf16 %v781, %v779
    %v855 = vpack.c.bf16 %v785, %v783
    %v856 = vpack.c.bf16 %v789, %v787
    %v857 = vpack.c.bf16 %v793, %v791
    %v858 = vpack.c.bf16 %v805, %v803
    %v859 = vpack.c.bf16 %v809, %v807
    %v860 = vpack.c.bf16 %v813, %v811
    %v861 = vpack.c.bf16 %v817, %v815
    %v862 = vpack.c.bf16 %v829, %v827
    %v863 = vpack.c.bf16 %v833, %v831
    %v864 = vpack.c.bf16 %v837, %v835
    %v865 = vpack.c.bf16 %v841, %v839
    %874 = vrot.lane.b32.xlu0 %v644, 96
    %v875 = vpop.permute.xlu0 %874
    %876 = vrot.lane.b32.xlu0 %v647, 96
    %v877 = vpop.permute.xlu0 %876
    %878 = vrot.lane.b32.xlu0 %v652, 96
    %v879 = vpop.permute.xlu0 %878
    %880 = vrot.lane.b32.xlu0 %v655, 96
    %v881 = vpop.permute.xlu0 %880
    %882 = vrot.lane.b32.xlu0 %v660, 96
    %v883 = vpop.permute.xlu0 %882
    %884 = vrot.lane.b32.xlu0 %v663, 96
    %v885 = vpop.permute.xlu0 %884
    %886 = vrot.lane.b32.xlu0 %v668, 96
    %v887 = vpop.permute.xlu0 %886
    %888 = vrot.lane.b32.xlu0 %v671, 96
    %v889 = vpop.permute.xlu0 %888
    %898 = vrot.lane.b32.xlu0 %v644, 64
    %v899 = vpop.permute.xlu0 %898
    %900 = vrot.lane.b32.xlu0 %v647, 64
    %v901 = vpop.permute.xlu0 %900
    %902 = vrot.lane.b32.xlu0 %v652, 64
    %v903 = vpop.permute.xlu0 %902
    %904 = vrot.lane.b32.xlu0 %v655, 64
    %v905 = vpop.permute.xlu0 %904
    %906 = vrot.lane.b32.xlu0 %v660, 64
    %v907 = vpop.permute.xlu0 %906
    %908 = vrot.lane.b32.xlu0 %v663, 64
    %v909 = vpop.permute.xlu0 %908
    %910 = vrot.lane.b32.xlu0 %v668, 64
    %v911 = vpop.permute.xlu0 %910
    %912 = vrot.lane.b32.xlu0 %v671, 64
    %v913 = vpop.permute.xlu0 %912
    %922 = vrot.lane.b32.xlu0 %v644, 32
    %v923 = vpop.permute.xlu0 %922
    %924 = vrot.lane.b32.xlu0 %v647, 32
    %v925 = vpop.permute.xlu0 %924
    %926 = vrot.lane.b32.xlu0 %v652, 32
    %v927 = vpop.permute.xlu0 %926
    %928 = vrot.lane.b32.xlu0 %v655, 32
    %v929 = vpop.permute.xlu0 %928
    %930 = vrot.lane.b32.xlu0 %v660, 32
    %v931 = vpop.permute.xlu0 %930
    %932 = vrot.lane.b32.xlu0 %v663, 32
    %v933 = vpop.permute.xlu0 %932
    %934 = vrot.lane.b32.xlu0 %v668, 32
    %v935 = vpop.permute.xlu0 %934
    %936 = vrot.lane.b32.xlu0 %v671, 32
    %v937 = vpop.permute.xlu0 %936
    %v946 = vpack.c.bf16 %v647, %v644
    %v947 = vpack.c.bf16 %v655, %v652
    %v948 = vpack.c.bf16 %v663, %v660
    %v949 = vpack.c.bf16 %v671, %v668
    %v950 = vpack.c.bf16 %v877, %v875
    %v951 = vpack.c.bf16 %v881, %v879
    %v952 = vpack.c.bf16 %v885, %v883
    %v953 = vpack.c.bf16 %v889, %v887
    %v954 = vpack.c.bf16 %v901, %v899
    %v955 = vpack.c.bf16 %v905, %v903
    %v956 = vpack.c.bf16 %v909, %v907
    %v957 = vpack.c.bf16 %v913, %v911
    %v958 = vpack.c.bf16 %v925, %v923
    %v959 = vpack.c.bf16 %v929, %v927
    %v960 = vpack.c.bf16 %v933, %v931
    %v961 = vpack.c.bf16 %v937, %v935
    %vm962 = vcmask 261120
    %v964 = vsel %vm962, %v754, 0
    %v967 = vsel %vm962, %v850, 0
    %969 = vmatprep.subr.bf16.mxu0 0
    %970 = vmatpush1.bf16.xpose.msra.mxu0 0
    %971 = vmatprep.subr.bf16.mxu0 0
    %972 = vmatpush1.bf16.xpose.msra.mxu0 0
    %973 = vmatprep.subr.bf16.mxu0 0
    %974 = vmatpush1.bf16.xpose.msra.mxu0 0
    %975 = vmatprep.subr.bf16.mxu0 0
    %976 = vmatpush1.bf16.xpose.msra.mxu0 0
    %977 = vmatprep.subr.bf16.mxu0 0
    %978 = vmatpush1.bf16.xpose.msra.mxu0 0
    %979 = vmatprep.subr.bf16.mxu0 0
    %980 = vmatpush1.bf16.xpose.msra.mxu0 0
    %981 = vmatprep.subr.bf16.mxu0 0
    %982 = vmatpush1.bf16.xpose.msra.mxu0 0
    %983 = vmatprep.subr.bf16.mxu0 0
    %984 = vmatpush1.bf16.xpose.msra.mxu0 %v967
    %985 = vmatprep.subr.bf16.mxu0 0
    %986 = vmatpush2.bf16.xpose.msra.mxu0 0
    %987 = vmatprep.subr.bf16.mxu0 0
    %988 = vmatpush2.bf16.xpose.msra.mxu0 0
    %989 = vmatprep.subr.bf16.mxu0 0
    %990 = vmatpush2.bf16.xpose.msra.mxu0 0
    %991 = vmatprep.subr.bf16.mxu0 0
    %992 = vmatpush2.bf16.xpose.msra.mxu0 0
    %993 = vmatprep.subr.bf16.mxu0 0
    %994 = vmatpush2.bf16.xpose.msra.mxu0 0
    %995 = vmatprep.subr.bf16.mxu0 0
    %996 = vmatpush2.bf16.xpose.msra.mxu0 0
    %997 = vmatprep.subr.bf16.mxu0 0
    %998 = vmatpush2.bf16.xpose.msra.mxu0 0
    %999 = vmatprep.subr.bf16.mxu0 0
    %1000 = vmatpush2.bf16.xpose.msra.mxu0 0
    %1001 = vmatprep.mubr.bf16.mxu0 0
    %1002 = vmatmul.mubr.bf16.gmra.mxu0 %v964
    %v1003 = vpop.f32.mrf.mxu0
    %v1004 = vadd.f32 0.0, %v1003
    %v1005 = vpop.f32.mrf.mxu0
    %v1006 = vpop.f32.mrf.mxu0
    %v1007 = vadd.f32 0.0, %v1006
    %v1008 = vpop.f32.mrf.mxu0
    %1009 = vdwg.mxu0
    %v1011 = vsel %vm962, %v755, 0
    %v1014 = vsel %vm962, %v851, 0
    %1016 = vmatprep.subr.bf16.mxu0 0
    %1017 = vmatpush1.bf16.xpose.msra.mxu0 0
    %1018 = vmatprep.subr.bf16.mxu0 0
    %1019 = vmatpush1.bf16.xpose.msra.mxu0 0
    %1020 = vmatprep.subr.bf16.mxu0 0
    %1021 = vmatpush1.bf16.xpose.msra.mxu0 0
    %1022 = vmatprep.subr.bf16.mxu0 0
    %1023 = vmatpush1.bf16.xpose.msra.mxu0 0
    %1024 = vmatprep.subr.bf16.mxu0 0
    %1025 = vmatpush1.bf16.xpose.msra.mxu0 0
    %1026 = vmatprep.subr.bf16.mxu0 0
    %1027 = vmatpush1.bf16.xpose.msra.mxu0 0
    %1028 = vmatprep.subr.bf16.mxu0 0
    %1029 = vmatpush1.bf16.xpose.msra.mxu0 0
    %1030 = vmatprep.subr.bf16.mxu0 0
    %1031 = vmatpush1.bf16.xpose.msra.mxu0 %v1014
    %1032 = vmatprep.subr.bf16.mxu0 0
    %1033 = vmatpush2.bf16.xpose.msra.mxu0 0
    %1034 = vmatprep.subr.bf16.mxu0 0
    %1035 = vmatpush2.bf16.xpose.msra.mxu0 0
    %1036 = vmatprep.subr.bf16.mxu0 0
    %1037 = vmatpush2.bf16.xpose.msra.mxu0 0
    %1038 = vmatprep.subr.bf16.mxu0 0
    %1039 = vmatpush2.bf16.xpose.msra.mxu0 0
    %1040 = vmatprep.subr.bf16.mxu0 0
    %1041 = vmatpush2.bf16.xpose.msra.mxu0 0
    %1042 = vmatprep.subr.bf16.mxu0 0
    %1043 = vmatpush2.bf16.xpose.msra.mxu0 0
    %1044 = vmatprep.subr.bf16.mxu0 0
    %1045 = vmatpush2.bf16.xpose.msra.mxu0 0
    %1046 = vmatprep.subr.bf16.mxu0 0
    %1047 = vmatpush2.bf16.xpose.msra.mxu0 0
    %1048 = vmatprep.mubr.bf16.mxu0 0
    %1049 = vmatmul.mubr.bf16.gmra.mxu0 %v1011
    %v1050 = vpop.f32.mrf.mxu0
    %v1051 = vadd.f32 0.0, %v1050
    %v1052 = vpop.f32.mrf.mxu0
    %v1053 = vpop.f32.mrf.mxu0
    %v1054 = vadd.f32 0.0, %v1053
    %v1055 = vpop.f32.mrf.mxu0
    %1056 = vdwg.mxu0
    %v1058 = vsel %vm962, %v756, 0
    %v1061 = vsel %vm962, %v852, 0
    %1063 = vmatprep.subr.bf16.mxu0 0
    %1064 = vmatpush1.bf16.xpose.msra.mxu0 0
    %1065 = vmatprep.subr.bf16.mxu0 0
    %1066 = vmatpush1.bf16.xpose.msra.mxu0 0
    %1067 = vmatprep.subr.bf16.mxu0 0
    %1068 = vmatpush1.bf16.xpose.msra.mxu0 0
    %1069 = vmatprep.subr.bf16.mxu0 0
    %1070 = vmatpush1.bf16.xpose.msra.mxu0 0
    %1071 = vmatprep.subr.bf16.mxu0 0
    %1072 = vmatpush1.bf16.xpose.msra.mxu0 0
    %1073 = vmatprep.subr.bf16.mxu0 0
    %1074 = vmatpush1.bf16.xpose.msra.mxu0 0
    %1075 = vmatprep.subr.bf16.mxu0 0
    %1076 = vmatpush1.bf16.xpose.msra.mxu0 0
    %1077 = vmatprep.subr.bf16.mxu0 0
    %1078 = vmatpush1.bf16.xpose.msra.mxu0 %v1061
    %1079 = vmatprep.subr.bf16.mxu0 0
    %1080 = vmatpush2.bf16.xpose.msra.mxu0 0
    %1081 = vmatprep.subr.bf16.mxu0 0
    %1082 = vmatpush2.bf16.xpose.msra.mxu0 0
    %1083 = vmatprep.subr.bf16.mxu0 0
    %1084 = vmatpush2.bf16.xpose.msra.mxu0 0
    %1085 = vmatprep.subr.bf16.mxu0 0
    %1086 = vmatpush2.bf16.xpose.msra.mxu0 0
    %1087 = vmatprep.subr.bf16.mxu0 0
    %1088 = vmatpush2.bf16.xpose.msra.mxu0 0
    %1089 = vmatprep.subr.bf16.mxu0 0
    %1090 = vmatpush2.bf16.xpose.msra.mxu0 0
    %1091 = vmatprep.subr.bf16.mxu0 0
    %1092 = vmatpush2.bf16.xpose.msra.mxu0 0
    %1093 = vmatprep.subr.bf16.mxu0 0
    %1094 = vmatpush2.bf16.xpose.msra.mxu0 0
    %1095 = vmatprep.mubr.bf16.mxu0 0
    %1096 = vmatmul.mubr.bf16.gmra.mxu0 %v1058
    %v1097 = vpop.f32.mrf.mxu0
    %v1098 = vadd.f32 0.0, %v1097
    %v1099 = vpop.f32.mrf.mxu0
    %v1100 = vpop.f32.mrf.mxu0
    %v1101 = vadd.f32 0.0, %v1100
    %v1102 = vpop.f32.mrf.mxu0
    %1103 = vdwg.mxu0
    %v1105 = vsel %vm962, %v757, 0
    %v1108 = vsel %vm962, %v853, 0
    %1110 = vmatprep.subr.bf16.mxu0 0
    %1111 = vmatpush1.bf16.xpose.msra.mxu0 0
    %1112 = vmatprep.subr.bf16.mxu0 0
    %1113 = vmatpush1.bf16.xpose.msra.mxu0 0
    %1114 = vmatprep.subr.bf16.mxu0 0
    %1115 = vmatpush1.bf16.xpose.msra.mxu0 0
    %1116 = vmatprep.subr.bf16.mxu0 0
    %1117 = vmatpush1.bf16.xpose.msra.mxu0 0
    %1118 = vmatprep.subr.bf16.mxu0 0
    %1119 = vmatpush1.bf16.xpose.msra.mxu0 0
    %1120 = vmatprep.subr.bf16.mxu0 0
    %1121 = vmatpush1.bf16.xpose.msra.mxu0 0
    %1122 = vmatprep.subr.bf16.mxu0 0
    %1123 = vmatpush1.bf16.xpose.msra.mxu0 0
    %1124 = vmatprep.subr.bf16.mxu0 0
    %1125 = vmatpush1.bf16.xpose.msra.mxu0 %v1108
    %1126 = vmatprep.subr.bf16.mxu0 0
    %1127 = vmatpush2.bf16.xpose.msra.mxu0 0
    %1128 = vmatprep.subr.bf16.mxu0 0
    %1129 = vmatpush2.bf16.xpose.msra.mxu0 0
    %1130 = vmatprep.subr.bf16.mxu0 0
    %1131 = vmatpush2.bf16.xpose.msra.mxu0 0
    %1132 = vmatprep.subr.bf16.mxu0 0
    %1133 = vmatpush2.bf16.xpose.msra.mxu0 0
    %1134 = vmatprep.subr.bf16.mxu0 0
    %1135 = vmatpush2.bf16.xpose.msra.mxu0 0
    %1136 = vmatprep.subr.bf16.mxu0 0
    %1137 = vmatpush2.bf16.xpose.msra.mxu0 0
    %1138 = vmatprep.subr.bf16.mxu0 0
    %1139 = vmatpush2.bf16.xpose.msra.mxu0 0
    %1140 = vmatprep.subr.bf16.mxu0 0
    %1141 = vmatpush2.bf16.xpose.msra.mxu0 0
    %1142 = vmatprep.mubr.bf16.mxu0 0
    %1143 = vmatmul.mubr.bf16.gmra.mxu0 %v1105
    %v1144 = vpop.f32.mrf.mxu0
    %v1145 = vadd.f32 0.0, %v1144
    %v1146 = vpop.f32.mrf.mxu0
    %v1147 = vpop.f32.mrf.mxu0
    %v1148 = vadd.f32 0.0, %v1147
    %v1149 = vpop.f32.mrf.mxu0
    %1150 = vdwg.mxu0
    %v1152 = vsel %vm962, %v758, 0
    %v1155 = vsel %vm962, %v854, 0
    %1157 = vmatprep.subr.bf16.mxu0 0
    %1158 = vmatpush1.bf16.xpose.msra.mxu0 0
    %1159 = vmatprep.subr.bf16.mxu0 0
    %1160 = vmatpush1.bf16.xpose.msra.mxu0 0
    %1161 = vmatprep.subr.bf16.mxu0 0
    %1162 = vmatpush1.bf16.xpose.msra.mxu0 0
    %1163 = vmatprep.subr.bf16.mxu0 0
    %1164 = vmatpush1.bf16.xpose.msra.mxu0 0
    %1165 = vmatprep.subr.bf16.mxu0 0
    %1166 = vmatpush1.bf16.xpose.msra.mxu0 0
    %1167 = vmatprep.subr.bf16.mxu0 0
    %1168 = vmatpush1.bf16.xpose.msra.mxu0 0
    %1169 = vmatprep.subr.bf16.mxu0 0
    %1170 = vmatpush1.bf16.xpose.msra.mxu0 0
    %1171 = vmatprep.subr.bf16.mxu0 0
    %1172 = vmatpush1.bf16.xpose.msra.mxu0 %v1155
    %1173 = vmatprep.subr.bf16.mxu0 0
    %1174 = vmatpush2.bf16.xpose.msra.mxu0 0
    %1175 = vmatprep.subr.bf16.mxu0 0
    %1176 = vmatpush2.bf16.xpose.msra.mxu0 0
    %1177 = vmatprep.subr.bf16.mxu0 0
    %1178 = vmatpush2.bf16.xpose.msra.mxu0 0
    %1179 = vmatprep.subr.bf16.mxu0 0
    %1180 = vmatpush2.bf16.xpose.msra.mxu0 0
    %1181 = vmatprep.subr.bf16.mxu0 0
    %1182 = vmatpush2.bf16.xpose.msra.mxu0 0
    %1183 = vmatprep.subr.bf16.mxu0 0
    %1184 = vmatpush2.bf16.xpose.msra.mxu0 0
    %1185 = vmatprep.subr.bf16.mxu0 0
    %1186 = vmatpush2.bf16.xpose.msra.mxu0 0
    %1187 = vmatprep.subr.bf16.mxu0 0
    %1188 = vmatpush2.bf16.xpose.msra.mxu0 0
    %1189 = vmatprep.mubr.bf16.mxu0 0
    %1190 = vmatmul.mubr.bf16.gmra.mxu0 %v1152
    %v1191 = vpop.f32.mrf.mxu0
    %v1192 = vadd.f32 0.0, %v1191
    %v1193 = vpop.f32.mrf.mxu0
    %v1194 = vpop.f32.mrf.mxu0
    %v1195 = vadd.f32 0.0, %v1194
    %v1196 = vpop.f32.mrf.mxu0
    %1197 = vdwg.mxu0
    %v1199 = vsel %vm962, %v759, 0
    %v1202 = vsel %vm962, %v855, 0
    %1204 = vmatprep.subr.bf16.mxu0 0
    %1205 = vmatpush1.bf16.xpose.msra.mxu0 0
    %1206 = vmatprep.subr.bf16.mxu0 0
    %1207 = vmatpush1.bf16.xpose.msra.mxu0 0
    %1208 = vmatprep.subr.bf16.mxu0 0
    %1209 = vmatpush1.bf16.xpose.msra.mxu0 0
    %1210 = vmatprep.subr.bf16.mxu0 0
    %1211 = vmatpush1.bf16.xpose.msra.mxu0 0
    %1212 = vmatprep.subr.bf16.mxu0 0
    %1213 = vmatpush1.bf16.xpose.msra.mxu0 0
    %1214 = vmatprep.subr.bf16.mxu0 0
    %1215 = vmatpush1.bf16.xpose.msra.mxu0 0
    %1216 = vmatprep.subr.bf16.mxu0 0
    %1217 = vmatpush1.bf16.xpose.msra.mxu0 0
    %1218 = vmatprep.subr.bf16.mxu0 0
    %1219 = vmatpush1.bf16.xpose.msra.mxu0 %v1202
    %1220 = vmatprep.subr.bf16.mxu0 0
    %1221 = vmatpush2.bf16.xpose.msra.mxu0 0
    %1222 = vmatprep.subr.bf16.mxu0 0
    %1223 = vmatpush2.bf16.xpose.msra.mxu0 0
    %1224 = vmatprep.subr.bf16.mxu0 0
    %1225 = vmatpush2.bf16.xpose.msra.mxu0 0
    %1226 = vmatprep.subr.bf16.mxu0 0
    %1227 = vmatpush2.bf16.xpose.msra.mxu0 0
    %1228 = vmatprep.subr.bf16.mxu0 0
    %1229 = vmatpush2.bf16.xpose.msra.mxu0 0
    %1230 = vmatprep.subr.bf16.mxu0 0
    %1231 = vmatpush2.bf16.xpose.msra.mxu0 0
    %1232 = vmatprep.subr.bf16.mxu0 0
    %1233 = vmatpush2.bf16.xpose.msra.mxu0 0
    %1234 = vmatprep.subr.bf16.mxu0 0
    %1235 = vmatpush2.bf16.xpose.msra.mxu0 0
    %1236 = vmatprep.mubr.bf16.mxu0 0
    %1237 = vmatmul.mubr.bf16.gmra.mxu0 %v1199
    %v1238 = vpop.f32.mrf.mxu0
    %v1239 = vadd.f32 0.0, %v1238
    %v1240 = vpop.f32.mrf.mxu0
    %v1241 = vpop.f32.mrf.mxu0
    %v1242 = vadd.f32 0.0, %v1241
    %v1243 = vpop.f32.mrf.mxu0
    %1244 = vdwg.mxu0
    %v1246 = vsel %vm962, %v760, 0
    %v1249 = vsel %vm962, %v856, 0
    %1251 = vmatprep.subr.bf16.mxu0 0
    %1252 = vmatpush1.bf16.xpose.msra.mxu0 0
    %1253 = vmatprep.subr.bf16.mxu0 0
    %1254 = vmatpush1.bf16.xpose.msra.mxu0 0
    %1255 = vmatprep.subr.bf16.mxu0 0
    %1256 = vmatpush1.bf16.xpose.msra.mxu0 0
    %1257 = vmatprep.subr.bf16.mxu0 0
    %1258 = vmatpush1.bf16.xpose.msra.mxu0 0
    %1259 = vmatprep.subr.bf16.mxu0 0
    %1260 = vmatpush1.bf16.xpose.msra.mxu0 0
    %1261 = vmatprep.subr.bf16.mxu0 0
    %1262 = vmatpush1.bf16.xpose.msra.mxu0 0
    %1263 = vmatprep.subr.bf16.mxu0 0
    %1264 = vmatpush1.bf16.xpose.msra.mxu0 0
    %1265 = vmatprep.subr.bf16.mxu0 0
    %1266 = vmatpush1.bf16.xpose.msra.mxu0 %v1249
    %1267 = vmatprep.subr.bf16.mxu0 0
    %1268 = vmatpush2.bf16.xpose.msra.mxu0 0
    %1269 = vmatprep.subr.bf16.mxu0 0
    %1270 = vmatpush2.bf16.xpose.msra.mxu0 0
    %1271 = vmatprep.subr.bf16.mxu0 0
    %1272 = vmatpush2.bf16.xpose.msra.mxu0 0
    %1273 = vmatprep.subr.bf16.mxu0 0
    %1274 = vmatpush2.bf16.xpose.msra.mxu0 0
    %1275 = vmatprep.subr.bf16.mxu0 0
    %1276 = vmatpush2.bf16.xpose.msra.mxu0 0
    %1277 = vmatprep.subr.bf16.mxu0 0
    %1278 = vmatpush2.bf16.xpose.msra.mxu0 0
    %1279 = vmatprep.subr.bf16.mxu0 0
    %1280 = vmatpush2.bf16.xpose.msra.mxu0 0
    %1281 = vmatprep.subr.bf16.mxu0 0
    %1282 = vmatpush2.bf16.xpose.msra.mxu0 0
    %1283 = vmatprep.mubr.bf16.mxu0 0
    %1284 = vmatmul.mubr.bf16.gmra.mxu0 %v1246
    %v1285 = vpop.f32.mrf.mxu0
    %v1286 = vadd.f32 0.0, %v1285
    %v1287 = vpop.f32.mrf.mxu0
    %v1288 = vpop.f32.mrf.mxu0
    %v1289 = vadd.f32 0.0, %v1288
    %v1290 = vpop.f32.mrf.mxu0
    %1291 = vdwg.mxu0
    %v1293 = vsel %vm962, %v761, 0
    %v1296 = vsel %vm962, %v857, 0
    %1298 = vmatprep.subr.bf16.mxu0 0
    %1299 = vmatpush1.bf16.xpose.msra.mxu0 0
    %1300 = vmatprep.subr.bf16.mxu0 0
    %1301 = vmatpush1.bf16.xpose.msra.mxu0 0
    %1302 = vmatprep.subr.bf16.mxu0 0
    %1303 = vmatpush1.bf16.xpose.msra.mxu0 0
    %1304 = vmatprep.subr.bf16.mxu0 0
    %1305 = vmatpush1.bf16.xpose.msra.mxu0 0
    %1306 = vmatprep.subr.bf16.mxu0 0
    %1307 = vmatpush1.bf16.xpose.msra.mxu0 0
    %1308 = vmatprep.subr.bf16.mxu0 0
    %1309 = vmatpush1.bf16.xpose.msra.mxu0 0
    %1310 = vmatprep.subr.bf16.mxu0 0
    %1311 = vmatpush1.bf16.xpose.msra.mxu0 0
    %1312 = vmatprep.subr.bf16.mxu0 0
    %1313 = vmatpush1.bf16.xpose.msra.mxu0 %v1296
    %1314 = vmatprep.subr.bf16.mxu0 0
    %1315 = vmatpush2.bf16.xpose.msra.mxu0 0
    %1316 = vmatprep.subr.bf16.mxu0 0
    %1317 = vmatpush2.bf16.xpose.msra.mxu0 0
    %1318 = vmatprep.subr.bf16.mxu0 0
    %1319 = vmatpush2.bf16.xpose.msra.mxu0 0
    %1320 = vmatprep.subr.bf16.mxu0 0
    %1321 = vmatpush2.bf16.xpose.msra.mxu0 0
    %1322 = vmatprep.subr.bf16.mxu0 0
    %1323 = vmatpush2.bf16.xpose.msra.mxu0 0
    %1324 = vmatprep.subr.bf16.mxu0 0
    %1325 = vmatpush2.bf16.xpose.msra.mxu0 0
    %1326 = vmatprep.subr.bf16.mxu0 0
    %1327 = vmatpush2.bf16.xpose.msra.mxu0 0
    %1328 = vmatprep.subr.bf16.mxu0 0
    %1329 = vmatpush2.bf16.xpose.msra.mxu0 0
    %1330 = vmatprep.mubr.bf16.mxu0 0
    %1331 = vmatmul.mubr.bf16.gmra.mxu0 %v1293
    %v1332 = vpop.f32.mrf.mxu0
    %v1333 = vadd.f32 0.0, %v1332
    %v1334 = vpop.f32.mrf.mxu0
    %v1335 = vpop.f32.mrf.mxu0
    %v1336 = vadd.f32 0.0, %v1335
    %v1337 = vpop.f32.mrf.mxu0
    %1338 = vdwg.mxu0
    %v1340 = vsel %vm962, %v762, 0
    %v1343 = vsel %vm962, %v858, 0
    %1345 = vmatprep.subr.bf16.mxu0 0
    %1346 = vmatpush1.bf16.xpose.msra.mxu0 0
    %1347 = vmatprep.subr.bf16.mxu0 0
    %1348 = vmatpush1.bf16.xpose.msra.mxu0 0
    %1349 = vmatprep.subr.bf16.mxu0 0
    %1350 = vmatpush1.bf16.xpose.msra.mxu0 0
    %1351 = vmatprep.subr.bf16.mxu0 0
    %1352 = vmatpush1.bf16.xpose.msra.mxu0 0
    %1353 = vmatprep.subr.bf16.mxu0 0
    %1354 = vmatpush1.bf16.xpose.msra.mxu0 0
    %1355 = vmatprep.subr.bf16.mxu0 0
    %1356 = vmatpush1.bf16.xpose.msra.mxu0 0
    %1357 = vmatprep.subr.bf16.mxu0 0
    %1358 = vmatpush1.bf16.xpose.msra.mxu0 0
    %1359 = vmatprep.subr.bf16.mxu0 0
    %1360 = vmatpush1.bf16.xpose.msra.mxu0 %v1343
    %1361 = vmatprep.subr.bf16.mxu0 0
    %1362 = vmatpush2.bf16.xpose.msra.mxu0 0
    %1363 = vmatprep.subr.bf16.mxu0 0
    %1364 = vmatpush2.bf16.xpose.msra.mxu0 0
    %1365 = vmatprep.subr.bf16.mxu0 0
    %1366 = vmatpush2.bf16.xpose.msra.mxu0 0
    %1367 = vmatprep.subr.bf16.mxu0 0
    %1368 = vmatpush2.bf16.xpose.msra.mxu0 0
    %1369 = vmatprep.subr.bf16.mxu0 0
    %1370 = vmatpush2.bf16.xpose.msra.mxu0 0
    %1371 = vmatprep.subr.bf16.mxu0 0
    %1372 = vmatpush2.bf16.xpose.msra.mxu0 0
    %1373 = vmatprep.subr.bf16.mxu0 0
    %1374 = vmatpush2.bf16.xpose.msra.mxu0 0
    %1375 = vmatprep.subr.bf16.mxu0 0
    %1376 = vmatpush2.bf16.xpose.msra.mxu0 0
    %1377 = vmatprep.mubr.bf16.mxu0 0
    %1378 = vmatmul.mubr.bf16.gmra.mxu0 %v1340
    %v1379 = vpop.f32.mrf.mxu0
    %v1380 = vadd.f32 0.0, %v1379
    %v1381 = vpop.f32.mrf.mxu0
    %v1382 = vpop.f32.mrf.mxu0
    %v1383 = vadd.f32 0.0, %v1382
    %v1384 = vpop.f32.mrf.mxu0
    %1385 = vdwg.mxu0
    %v1387 = vsel %vm962, %v763, 0
    %v1390 = vsel %vm962, %v859, 0
    %1392 = vmatprep.subr.bf16.mxu0 0
    %1393 = vmatpush1.bf16.xpose.msra.mxu0 0
    %1394 = vmatprep.subr.bf16.mxu0 0
    %1395 = vmatpush1.bf16.xpose.msra.mxu0 0
    %1396 = vmatprep.subr.bf16.mxu0 0
    %1397 = vmatpush1.bf16.xpose.msra.mxu0 0
    %1398 = vmatprep.subr.bf16.mxu0 0
    %1399 = vmatpush1.bf16.xpose.msra.mxu0 0
    %1400 = vmatprep.subr.bf16.mxu0 0
    %1401 = vmatpush1.bf16.xpose.msra.mxu0 0
    %1402 = vmatprep.subr.bf16.mxu0 0
    %1403 = vmatpush1.bf16.xpose.msra.mxu0 0
    %1404 = vmatprep.subr.bf16.mxu0 0
    %1405 = vmatpush1.bf16.xpose.msra.mxu0 0
    %1406 = vmatprep.subr.bf16.mxu0 0
    %1407 = vmatpush1.bf16.xpose.msra.mxu0 %v1390
    %1408 = vmatprep.subr.bf16.mxu0 0
    %1409 = vmatpush2.bf16.xpose.msra.mxu0 0
    %1410 = vmatprep.subr.bf16.mxu0 0
    %1411 = vmatpush2.bf16.xpose.msra.mxu0 0
    %1412 = vmatprep.subr.bf16.mxu0 0
    %1413 = vmatpush2.bf16.xpose.msra.mxu0 0
    %1414 = vmatprep.subr.bf16.mxu0 0
    %1415 = vmatpush2.bf16.xpose.msra.mxu0 0
    %1416 = vmatprep.subr.bf16.mxu0 0
    %1417 = vmatpush2.bf16.xpose.msra.mxu0 0
    %1418 = vmatprep.subr.bf16.mxu0 0
    %1419 = vmatpush2.bf16.xpose.msra.mxu0 0
    %1420 = vmatprep.subr.bf16.mxu0 0
    %1421 = vmatpush2.bf16.xpose.msra.mxu0 0
    %1422 = vmatprep.subr.bf16.mxu0 0
    %1423 = vmatpush2.bf16.xpose.msra.mxu0 0
    %1424 = vmatprep.mubr.bf16.mxu0 0
    %1425 = vmatmul.mubr.bf16.gmra.mxu0 %v1387
    %v1426 = vpop.f32.mrf.mxu0
    %v1427 = vadd.f32 0.0, %v1426
    %v1428 = vpop.f32.mrf.mxu0
    %v1429 = vpop.f32.mrf.mxu0
    %v1430 = vadd.f32 0.0, %v1429
    %v1431 = vpop.f32.mrf.mxu0
    %1432 = vdwg.mxu0
    %v1434 = vsel %vm962, %v764, 0
    %v1437 = vsel %vm962, %v860, 0
    %1439 = vmatprep.subr.bf16.mxu0 0
    %1440 = vmatpush1.bf16.xpose.msra.mxu0 0
    %1441 = vmatprep.subr.bf16.mxu0 0
    %1442 = vmatpush1.bf16.xpose.msra.mxu0 0
    %1443 = vmatprep.subr.bf16.mxu0 0
    %1444 = vmatpush1.bf16.xpose.msra.mxu0 0
    %1445 = vmatprep.subr.bf16.mxu0 0
    %1446 = vmatpush1.bf16.xpose.msra.mxu0 0
    %1447 = vmatprep.subr.bf16.mxu0 0
    %1448 = vmatpush1.bf16.xpose.msra.mxu0 0
    %1449 = vmatprep.subr.bf16.mxu0 0
    %1450 = vmatpush1.bf16.xpose.msra.mxu0 0
    %1451 = vmatprep.subr.bf16.mxu0 0
    %1452 = vmatpush1.bf16.xpose.msra.mxu0 0
    %1453 = vmatprep.subr.bf16.mxu0 0
    %1454 = vmatpush1.bf16.xpose.msra.mxu0 %v1437
    %1455 = vmatprep.subr.bf16.mxu0 0
    %1456 = vmatpush2.bf16.xpose.msra.mxu0 0
    %1457 = vmatprep.subr.bf16.mxu0 0
    %1458 = vmatpush2.bf16.xpose.msra.mxu0 0
    %1459 = vmatprep.subr.bf16.mxu0 0
    %1460 = vmatpush2.bf16.xpose.msra.mxu0 0
    %1461 = vmatprep.subr.bf16.mxu0 0
    %1462 = vmatpush2.bf16.xpose.msra.mxu0 0
    %1463 = vmatprep.subr.bf16.mxu0 0
    %1464 = vmatpush2.bf16.xpose.msra.mxu0 0
    %1465 = vmatprep.subr.bf16.mxu0 0
    %1466 = vmatpush2.bf16.xpose.msra.mxu0 0
    %1467 = vmatprep.subr.bf16.mxu0 0
    %1468 = vmatpush2.bf16.xpose.msra.mxu0 0
    %1469 = vmatprep.subr.bf16.mxu0 0
    %1470 = vmatpush2.bf16.xpose.msra.mxu0 0
    %1471 = vmatprep.mubr.bf16.mxu0 0
    %1472 = vmatmul.mubr.bf16.gmra.mxu0 %v1434
    %v1473 = vpop.f32.mrf.mxu0
    %v1474 = vadd.f32 0.0, %v1473
    %v1475 = vpop.f32.mrf.mxu0
    %v1476 = vpop.f32.mrf.mxu0
    %v1477 = vadd.f32 0.0, %v1476
    %v1478 = vpop.f32.mrf.mxu0
    %1479 = vdwg.mxu0
    %v1481 = vsel %vm962, %v765, 0
    %v1484 = vsel %vm962, %v861, 0
    %1486 = vmatprep.subr.bf16.mxu0 0
    %1487 = vmatpush1.bf16.xpose.msra.mxu0 0
    %1488 = vmatprep.subr.bf16.mxu0 0
    %1489 = vmatpush1.bf16.xpose.msra.mxu0 0
    %1490 = vmatprep.subr.bf16.mxu0 0
    %1491 = vmatpush1.bf16.xpose.msra.mxu0 0
    %1492 = vmatprep.subr.bf16.mxu0 0
    %1493 = vmatpush1.bf16.xpose.msra.mxu0 0
    %1494 = vmatprep.subr.bf16.mxu0 0
    %1495 = vmatpush1.bf16.xpose.msra.mxu0 0
    %1496 = vmatprep.subr.bf16.mxu0 0
    %1497 = vmatpush1.bf16.xpose.msra.mxu0 0
    %1498 = vmatprep.subr.bf16.mxu0 0
    %1499 = vmatpush1.bf16.xpose.msra.mxu0 0
    %1500 = vmatprep.subr.bf16.mxu0 0
    %1501 = vmatpush1.bf16.xpose.msra.mxu0 %v1484
    %1502 = vmatprep.subr.bf16.mxu0 0
    %1503 = vmatpush2.bf16.xpose.msra.mxu0 0
    %1504 = vmatprep.subr.bf16.mxu0 0
    %1505 = vmatpush2.bf16.xpose.msra.mxu0 0
    %1506 = vmatprep.subr.bf16.mxu0 0
    %1507 = vmatpush2.bf16.xpose.msra.mxu0 0
    %1508 = vmatprep.subr.bf16.mxu0 0
    %1509 = vmatpush2.bf16.xpose.msra.mxu0 0
    %1510 = vmatprep.subr.bf16.mxu0 0
    %1511 = vmatpush2.bf16.xpose.msra.mxu0 0
    %1512 = vmatprep.subr.bf16.mxu0 0
    %1513 = vmatpush2.bf16.xpose.msra.mxu0 0
    %1514 = vmatprep.subr.bf16.mxu0 0
    %1515 = vmatpush2.bf16.xpose.msra.mxu0 0
    %1516 = vmatprep.subr.bf16.mxu0 0
    %1517 = vmatpush2.bf16.xpose.msra.mxu0 0
    %1518 = vmatprep.mubr.bf16.mxu0 0
    %1519 = vmatmul.mubr.bf16.gmra.mxu0 %v1481
    %v1520 = vpop.f32.mrf.mxu0
    %v1521 = vadd.f32 0.0, %v1520
    %v1522 = vpop.f32.mrf.mxu0
    %v1523 = vpop.f32.mrf.mxu0
    %v1524 = vadd.f32 0.0, %v1523
    %v1525 = vpop.f32.mrf.mxu0
    %1526 = vdwg.mxu0
    %v1528 = vsel %vm962, %v766, 0
    %v1531 = vsel %vm962, %v862, 0
    %1533 = vmatprep.subr.bf16.mxu0 0
    %1534 = vmatpush1.bf16.xpose.msra.mxu0 0
    %1535 = vmatprep.subr.bf16.mxu0 0
    %1536 = vmatpush1.bf16.xpose.msra.mxu0 0
    %1537 = vmatprep.subr.bf16.mxu0 0
    %1538 = vmatpush1.bf16.xpose.msra.mxu0 0
    %1539 = vmatprep.subr.bf16.mxu0 0
    %1540 = vmatpush1.bf16.xpose.msra.mxu0 0
    %1541 = vmatprep.subr.bf16.mxu0 0
    %1542 = vmatpush1.bf16.xpose.msra.mxu0 0
    %1543 = vmatprep.subr.bf16.mxu0 0
    %1544 = vmatpush1.bf16.xpose.msra.mxu0 0
    %1545 = vmatprep.subr.bf16.mxu0 0
    %1546 = vmatpush1.bf16.xpose.msra.mxu0 0
    %1547 = vmatprep.subr.bf16.mxu0 0
    %1548 = vmatpush1.bf16.xpose.msra.mxu0 %v1531
    %1549 = vmatprep.subr.bf16.mxu0 0
    %1550 = vmatpush2.bf16.xpose.msra.mxu0 0
    %1551 = vmatprep.subr.bf16.mxu0 0
    %1552 = vmatpush2.bf16.xpose.msra.mxu0 0
    %1553 = vmatprep.subr.bf16.mxu0 0
    %1554 = vmatpush2.bf16.xpose.msra.mxu0 0
    %1555 = vmatprep.subr.bf16.mxu0 0
    %1556 = vmatpush2.bf16.xpose.msra.mxu0 0
    %1557 = vmatprep.subr.bf16.mxu0 0
    %1558 = vmatpush2.bf16.xpose.msra.mxu0 0
    %1559 = vmatprep.subr.bf16.mxu0 0
    %1560 = vmatpush2.bf16.xpose.msra.mxu0 0
    %1561 = vmatprep.subr.bf16.mxu0 0
    %1562 = vmatpush2.bf16.xpose.msra.mxu0 0
    %1563 = vmatprep.subr.bf16.mxu0 0
    %1564 = vmatpush2.bf16.xpose.msra.mxu0 0
    %1565 = vmatprep.mubr.bf16.mxu0 0
    %1566 = vmatmul.mubr.bf16.gmra.mxu0 %v1528
    %v1567 = vpop.f32.mrf.mxu0
    %v1568 = vadd.f32 0.0, %v1567
    %v1569 = vpop.f32.mrf.mxu0
    %v1570 = vpop.f32.mrf.mxu0
    %v1571 = vadd.f32 0.0, %v1570
    %v1572 = vpop.f32.mrf.mxu0
    %1573 = vdwg.mxu0
    %v1575 = vsel %vm962, %v767, 0
    %v1578 = vsel %vm962, %v863, 0
    %1580 = vmatprep.subr.bf16.mxu0 0
    %1581 = vmatpush1.bf16.xpose.msra.mxu0 0
    %1582 = vmatprep.subr.bf16.mxu0 0
    %1583 = vmatpush1.bf16.xpose.msra.mxu0 0
    %1584 = vmatprep.subr.bf16.mxu0 0
    %1585 = vmatpush1.bf16.xpose.msra.mxu0 0
    %1586 = vmatprep.subr.bf16.mxu0 0
    %1587 = vmatpush1.bf16.xpose.msra.mxu0 0
    %1588 = vmatprep.subr.bf16.mxu0 0
    %1589 = vmatpush1.bf16.xpose.msra.mxu0 0
    %1590 = vmatprep.subr.bf16.mxu0 0
    %1591 = vmatpush1.bf16.xpose.msra.mxu0 0
    %1592 = vmatprep.subr.bf16.mxu0 0
    %1593 = vmatpush1.bf16.xpose.msra.mxu0 0
    %1594 = vmatprep.subr.bf16.mxu0 0
    %1595 = vmatpush1.bf16.xpose.msra.mxu0 %v1578
    %1596 = vmatprep.subr.bf16.mxu0 0
    %1597 = vmatpush2.bf16.xpose.msra.mxu0 0
    %1598 = vmatprep.subr.bf16.mxu0 0
    %1599 = vmatpush2.bf16.xpose.msra.mxu0 0
    %1600 = vmatprep.subr.bf16.mxu0 0
    %1601 = vmatpush2.bf16.xpose.msra.mxu0 0
    %1602 = vmatprep.subr.bf16.mxu0 0
    %1603 = vmatpush2.bf16.xpose.msra.mxu0 0
    %1604 = vmatprep.subr.bf16.mxu0 0
    %1605 = vmatpush2.bf16.xpose.msra.mxu0 0
    %1606 = vmatprep.subr.bf16.mxu0 0
    %1607 = vmatpush2.bf16.xpose.msra.mxu0 0
    %1608 = vmatprep.subr.bf16.mxu0 0
    %1609 = vmatpush2.bf16.xpose.msra.mxu0 0
    %1610 = vmatprep.subr.bf16.mxu0 0
    %1611 = vmatpush2.bf16.xpose.msra.mxu0 0
    %1612 = vmatprep.mubr.bf16.mxu0 0
    %1613 = vmatmul.mubr.bf16.gmra.mxu0 %v1575
    %v1614 = vpop.f32.mrf.mxu0
    %v1615 = vadd.f32 0.0, %v1614
    %v1616 = vpop.f32.mrf.mxu0
    %v1617 = vpop.f32.mrf.mxu0
    %v1618 = vadd.f32 0.0, %v1617
    %v1619 = vpop.f32.mrf.mxu0
    %1620 = vdwg.mxu0
    %v1622 = vsel %vm962, %v768, 0
    %v1625 = vsel %vm962, %v864, 0
    %1627 = vmatprep.subr.bf16.mxu0 0
    %1628 = vmatpush1.bf16.xpose.msra.mxu0 0
    %1629 = vmatprep.subr.bf16.mxu0 0
    %1630 = vmatpush1.bf16.xpose.msra.mxu0 0
    %1631 = vmatprep.subr.bf16.mxu0 0
    %1632 = vmatpush1.bf16.xpose.msra.mxu0 0
    %1633 = vmatprep.subr.bf16.mxu0 0
    %1634 = vmatpush1.bf16.xpose.msra.mxu0 0
    %1635 = vmatprep.subr.bf16.mxu0 0
    %1636 = vmatpush1.bf16.xpose.msra.mxu0 0
    %1637 = vmatprep.subr.bf16.mxu0 0
    %1638 = vmatpush1.bf16.xpose.msra.mxu0 0
    %1639 = vmatprep.subr.bf16.mxu0 0
    %1640 = vmatpush1.bf16.xpose.msra.mxu0 0
    %1641 = vmatprep.subr.bf16.mxu0 0
    %1642 = vmatpush1.bf16.xpose.msra.mxu0 %v1625
    %1643 = vmatprep.subr.bf16.mxu0 0
    %1644 = vmatpush2.bf16.xpose.msra.mxu0 0
    %1645 = vmatprep.subr.bf16.mxu0 0
    %1646 = vmatpush2.bf16.xpose.msra.mxu0 0
    %1647 = vmatprep.subr.bf16.mxu0 0
    %1648 = vmatpush2.bf16.xpose.msra.mxu0 0
    %1649 = vmatprep.subr.bf16.mxu0 0
    %1650 = vmatpush2.bf16.xpose.msra.mxu0 0
    %1651 = vmatprep.subr.bf16.mxu0 0
    %1652 = vmatpush2.bf16.xpose.msra.mxu0 0
    %1653 = vmatprep.subr.bf16.mxu0 0
    %1654 = vmatpush2.bf16.xpose.msra.mxu0 0
    %1655 = vmatprep.subr.bf16.mxu0 0
    %1656 = vmatpush2.bf16.xpose.msra.mxu0 0
    %1657 = vmatprep.subr.bf16.mxu0 0
    %1658 = vmatpush2.bf16.xpose.msra.mxu0 0
    %1659 = vmatprep.mubr.bf16.mxu0 0
    %1660 = vmatmul.mubr.bf16.gmra.mxu0 %v1622
    %v1661 = vpop.f32.mrf.mxu0
    %v1662 = vadd.f32 0.0, %v1661
    %v1663 = vpop.f32.mrf.mxu0
    %v1664 = vpop.f32.mrf.mxu0
    %v1665 = vadd.f32 0.0, %v1664
    %v1666 = vpop.f32.mrf.mxu0
    %1667 = vdwg.mxu0
    %v1669 = vsel %vm962, %v769, 0
    %v1672 = vsel %vm962, %v865, 0
    %1674 = vmatprep.subr.bf16.mxu0 0
    %1675 = vmatpush1.bf16.xpose.msra.mxu0 0
    %1676 = vmatprep.subr.bf16.mxu0 0
    %1677 = vmatpush1.bf16.xpose.msra.mxu0 0
    %1678 = vmatprep.subr.bf16.mxu0 0
    %1679 = vmatpush1.bf16.xpose.msra.mxu0 0
    %1680 = vmatprep.subr.bf16.mxu0 0
    %1681 = vmatpush1.bf16.xpose.msra.mxu0 0
    %1682 = vmatprep.subr.bf16.mxu0 0
    %1683 = vmatpush1.bf16.xpose.msra.mxu0 0
    %1684 = vmatprep.subr.bf16.mxu0 0
    %1685 = vmatpush1.bf16.xpose.msra.mxu0 0
    %1686 = vmatprep.subr.bf16.mxu0 0
    %1687 = vmatpush1.bf16.xpose.msra.mxu0 0
    %1688 = vmatprep.subr.bf16.mxu0 0
    %1689 = vmatpush1.bf16.xpose.msra.mxu0 %v1672
    %1690 = vmatprep.subr.bf16.mxu0 0
    %1691 = vmatpush2.bf16.xpose.msra.mxu0 0
    %1692 = vmatprep.subr.bf16.mxu0 0
    %1693 = vmatpush2.bf16.xpose.msra.mxu0 0
    %1694 = vmatprep.subr.bf16.mxu0 0
    %1695 = vmatpush2.bf16.xpose.msra.mxu0 0
    %1696 = vmatprep.subr.bf16.mxu0 0
    %1697 = vmatpush2.bf16.xpose.msra.mxu0 0
    %1698 = vmatprep.subr.bf16.mxu0 0
    %1699 = vmatpush2.bf16.xpose.msra.mxu0 0
    %1700 = vmatprep.subr.bf16.mxu0 0
    %1701 = vmatpush2.bf16.xpose.msra.mxu0 0
    %1702 = vmatprep.subr.bf16.mxu0 0
    %1703 = vmatpush2.bf16.xpose.msra.mxu0 0
    %1704 = vmatprep.subr.bf16.mxu0 0
    %1705 = vmatpush2.bf16.xpose.msra.mxu0 0
    %1706 = vmatprep.mubr.bf16.mxu0 0
    %1707 = vmatmul.mubr.bf16.gmra.mxu0 %v1669
    %v1708 = vpop.f32.mrf.mxu0
    %v1709 = vadd.f32 0.0, %v1708
    %v1710 = vpop.f32.mrf.mxu0
    %v1711 = vpop.f32.mrf.mxu0
    %v1712 = vadd.f32 0.0, %v1711
    %v1713 = vpop.f32.mrf.mxu0
    %1714 = vdwg.mxu0
    %vm1715 = vcmask 130048
    %v1716 = vsel %vm1715, %v1004, -inf
    %1717 = vmax.xlane.f32.xlu0 %v1716
    %v1718 = vpop.xlane.xlu0 %1717
    %v1719 = vsel %vm1715, %v1007, -inf
    %1720 = vmax.xlane.f32.xlu0 %v1719
    %v1721 = vpop.xlane.xlu0 %1720
    %v1722 = vsel %vm1715, %v1051, -inf
    %1723 = vmax.xlane.f32.xlu0 %v1722
    %v1724 = vpop.xlane.xlu0 %1723
    %v1725 = vsel %vm1715, %v1054, -inf
    %1726 = vmax.xlane.f32.xlu0 %v1725
    %v1727 = vpop.xlane.xlu0 %1726
    %v1728 = vsel %vm1715, %v1098, -inf
    %1729 = vmax.xlane.f32.xlu0 %v1728
    %v1730 = vpop.xlane.xlu0 %1729
    %v1731 = vsel %vm1715, %v1101, -inf
    %1732 = vmax.xlane.f32.xlu0 %v1731
    %v1733 = vpop.xlane.xlu0 %1732
    %v1734 = vsel %vm1715, %v1145, -inf
    %1735 = vmax.xlane.f32.xlu0 %v1734
    %v1736 = vpop.xlane.xlu0 %1735
    %v1737 = vsel %vm1715, %v1148, -inf
    %1738 = vmax.xlane.f32.xlu0 %v1737
    %v1739 = vpop.xlane.xlu0 %1738
    %v1740 = vsel %vm1715, %v1192, -inf
    %1741 = vmax.xlane.f32.xlu0 %v1740
    %v1742 = vpop.xlane.xlu0 %1741
    %v1743 = vsel %vm1715, %v1195, -inf
    %1744 = vmax.xlane.f32.xlu0 %v1743
    %v1745 = vpop.xlane.xlu0 %1744
    %v1746 = vsel %vm1715, %v1239, -inf
    %1747 = vmax.xlane.f32.xlu0 %v1746
    %v1748 = vpop.xlane.xlu0 %1747
    %v1749 = vsel %vm1715, %v1242, -inf
    %1750 = vmax.xlane.f32.xlu0 %v1749
    %v1751 = vpop.xlane.xlu0 %1750
    %v1752 = vsel %vm1715, %v1286, -inf
    %1753 = vmax.xlane.f32.xlu0 %v1752
    %v1754 = vpop.xlane.xlu0 %1753
    %v1755 = vsel %vm1715, %v1289, -inf
    %1756 = vmax.xlane.f32.xlu0 %v1755
    %v1757 = vpop.xlane.xlu0 %1756
    %v1758 = vsel %vm1715, %v1333, -inf
    %1759 = vmax.xlane.f32.xlu0 %v1758
    %v1760 = vpop.xlane.xlu0 %1759
    %v1761 = vsel %vm1715, %v1336, -inf
    %1762 = vmax.xlane.f32.xlu0 %v1761
    %v1763 = vpop.xlane.xlu0 %1762
    %v1764 = vsel %vm1715, %v1380, -inf
    %1765 = vmax.xlane.f32.xlu0 %v1764
    %v1766 = vpop.xlane.xlu0 %1765
    %v1767 = vsel %vm1715, %v1383, -inf
    %1768 = vmax.xlane.f32.xlu0 %v1767
    %v1769 = vpop.xlane.xlu0 %1768
    %v1770 = vsel %vm1715, %v1427, -inf
    %1771 = vmax.xlane.f32.xlu0 %v1770
    %v1772 = vpop.xlane.xlu0 %1771
    %v1773 = vsel %vm1715, %v1430, -inf
    %1774 = vmax.xlane.f32.xlu0 %v1773
    %v1775 = vpop.xlane.xlu0 %1774
    %v1776 = vsel %vm1715, %v1474, -inf
    %1777 = vmax.xlane.f32.xlu0 %v1776
    %v1778 = vpop.xlane.xlu0 %1777
    %v1779 = vsel %vm1715, %v1477, -inf
    %1780 = vmax.xlane.f32.xlu0 %v1779
    %v1781 = vpop.xlane.xlu0 %1780
    %v1782 = vsel %vm1715, %v1521, -inf
    %1783 = vmax.xlane.f32.xlu0 %v1782
    %v1784 = vpop.xlane.xlu0 %1783
    %v1785 = vsel %vm1715, %v1524, -inf
    %1786 = vmax.xlane.f32.xlu0 %v1785
    %v1787 = vpop.xlane.xlu0 %1786
    %v1788 = vsel %vm1715, %v1568, -inf
    %1789 = vmax.xlane.f32.xlu0 %v1788
    %v1790 = vpop.xlane.xlu0 %1789
    %v1791 = vsel %vm1715, %v1571, -inf
    %1792 = vmax.xlane.f32.xlu0 %v1791
    %v1793 = vpop.xlane.xlu0 %1792
    %v1794 = vsel %vm1715, %v1615, -inf
    %1795 = vmax.xlane.f32.xlu0 %v1794
    %v1796 = vpop.xlane.xlu0 %1795
    %v1797 = vsel %vm1715, %v1618, -inf
    %1798 = vmax.xlane.f32.xlu0 %v1797
    %v1799 = vpop.xlane.xlu0 %1798
    %v1800 = vsel %vm1715, %v1662, -inf
    %1801 = vmax.xlane.f32.xlu0 %v1800
    %v1802 = vpop.xlane.xlu0 %1801
    %v1803 = vsel %vm1715, %v1665, -inf
    %1804 = vmax.xlane.f32.xlu0 %v1803
    %v1805 = vpop.xlane.xlu0 %1804
    %v1806 = vsel %vm1715, %v1709, -inf
    %1807 = vmax.xlane.f32.xlu0 %v1806
    %v1808 = vpop.xlane.xlu0 %1807
    %v1809 = vsel %vm1715, %v1712, -inf
    %1810 = vmax.xlane.f32.xlu0 %v1809
    %v1811 = vpop.xlane.xlu0 %1810
    %v1812 = vsub.f32 %v1004, %v1718
    %v1813 = vsub.f32 %v1007, %v1721
    %v1814 = vsub.f32 %v1051, %v1724
    %v1815 = vsub.f32 %v1054, %v1727
    %v1816 = vsub.f32 %v1098, %v1730
    %v1817 = vsub.f32 %v1101, %v1733
    %v1818 = vsub.f32 %v1145, %v1736
    %v1819 = vsub.f32 %v1148, %v1739
    %v1820 = vsub.f32 %v1192, %v1742
    %v1821 = vsub.f32 %v1195, %v1745
    %v1822 = vsub.f32 %v1239, %v1748
    %v1823 = vsub.f32 %v1242, %v1751
    %v1824 = vsub.f32 %v1286, %v1754
    %v1825 = vsub.f32 %v1289, %v1757
    %v1826 = vsub.f32 %v1333, %v1760
    %v1827 = vsub.f32 %v1336, %v1763
    %v1828 = vsub.f32 %v1380, %v1766
    %v1829 = vsub.f32 %v1383, %v1769
    %v1830 = vsub.f32 %v1427, %v1772
    %v1831 = vsub.f32 %v1430, %v1775
    %v1832 = vsub.f32 %v1474, %v1778
    %v1833 = vsub.f32 %v1477, %v1781
    %v1834 = vsub.f32 %v1521, %v1784
    %v1835 = vsub.f32 %v1524, %v1787
    %v1836 = vsub.f32 %v1568, %v1790
    %v1837 = vsub.f32 %v1571, %v1793
    %v1838 = vsub.f32 %v1615, %v1796
    %v1839 = vsub.f32 %v1618, %v1799
    %v1840 = vsub.f32 %v1662, %v1802
    %v1841 = vsub.f32 %v1665, %v1805
    %v1842 = vsub.f32 %v1709, %v1808
    %v1843 = vsub.f32 %v1712, %v1811
    %v1844 = vmul.f32 %v1812, 1.442695
    %v1845 = vpow.pop %v1844
    %v1846 = vmul.f32 %v1813, 1.442695
    %v1847 = vpow.pop %v1846
    %v1848 = vmul.f32 %v1814, 1.442695
    %v1849 = vpow.pop %v1848
    %v1850 = vmul.f32 %v1815, 1.442695
    %v1851 = vpow.pop %v1850
    %v1852 = vmul.f32 %v1816, 1.442695
    %v1853 = vpow.pop %v1852
    %v1854 = vmul.f32 %v1817, 1.442695
    %v1855 = vpow.pop %v1854
    %v1856 = vmul.f32 %v1818, 1.442695
    %v1857 = vpow.pop %v1856
    %v1858 = vmul.f32 %v1819, 1.442695
    %v1859 = vpow.pop %v1858
    %v1860 = vmul.f32 %v1820, 1.442695
    %v1861 = vpow.pop %v1860
    %v1862 = vmul.f32 %v1821, 1.442695
    %v1863 = vpow.pop %v1862
    %v1864 = vmul.f32 %v1822, 1.442695
    %v1865 = vpow.pop %v1864
    %v1866 = vmul.f32 %v1823, 1.442695
    %v1867 = vpow.pop %v1866
    %v1868 = vmul.f32 %v1824, 1.442695
    %v1869 = vpow.pop %v1868
    %v1870 = vmul.f32 %v1825, 1.442695
    %v1871 = vpow.pop %v1870
    %v1872 = vmul.f32 %v1826, 1.442695
    %v1873 = vpow.pop %v1872
    %v1874 = vmul.f32 %v1827, 1.442695
    %v1875 = vpow.pop %v1874
    %v1876 = vmul.f32 %v1828, 1.442695
    %v1877 = vpow.pop %v1876
    %v1878 = vmul.f32 %v1829, 1.442695
    %v1879 = vpow.pop %v1878
    %v1880 = vmul.f32 %v1830, 1.442695
    %v1881 = vpow.pop %v1880
    %v1882 = vmul.f32 %v1831, 1.442695
    %v1883 = vpow.pop %v1882
    %v1884 = vmul.f32 %v1832, 1.442695
    %v1885 = vpow.pop %v1884
    %v1886 = vmul.f32 %v1833, 1.442695
    %v1887 = vpow.pop %v1886
    %v1888 = vmul.f32 %v1834, 1.442695
    %v1889 = vpow.pop %v1888
    %v1890 = vmul.f32 %v1835, 1.442695
    %v1891 = vpow.pop %v1890
    %v1892 = vmul.f32 %v1836, 1.442695
    %v1893 = vpow.pop %v1892
    %v1894 = vmul.f32 %v1837, 1.442695
    %v1895 = vpow.pop %v1894
    %v1896 = vmul.f32 %v1838, 1.442695
    %v1897 = vpow.pop %v1896
    %v1898 = vmul.f32 %v1839, 1.442695
    %v1899 = vpow.pop %v1898
    %v1900 = vmul.f32 %v1840, 1.442695
    %v1901 = vpow.pop %v1900
    %v1902 = vmul.f32 %v1841, 1.442695
    %v1903 = vpow.pop %v1902
    %v1904 = vmul.f32 %v1842, 1.442695
    %v1905 = vpow.pop %v1904
    %v1906 = vmul.f32 %v1843, 1.442695
    %v1907 = vpow.pop %v1906
    %v1908 = vsel %vm1715, %v1845, 0.0
    %1909 = vadd.xlane.f32.xlu0 %v1908
    %v1910 = vpop.xlane.xlu0 %1909
    %v1911 = vsel %vm1715, %v1847, 0.0
    %1912 = vadd.xlane.f32.xlu0 %v1911
    %v1913 = vpop.xlane.xlu0 %1912
    %v1914 = vsel %vm1715, %v1849, 0.0
    %1915 = vadd.xlane.f32.xlu0 %v1914
    %v1916 = vpop.xlane.xlu0 %1915
    %v1917 = vsel %vm1715, %v1851, 0.0
    %1918 = vadd.xlane.f32.xlu0 %v1917
    %v1919 = vpop.xlane.xlu0 %1918
    %v1920 = vsel %vm1715, %v1853, 0.0
    %1921 = vadd.xlane.f32.xlu0 %v1920
    %v1922 = vpop.xlane.xlu0 %1921
    %v1923 = vsel %vm1715, %v1855, 0.0
    %1924 = vadd.xlane.f32.xlu0 %v1923
    %v1925 = vpop.xlane.xlu0 %1924
    %v1926 = vsel %vm1715, %v1857, 0.0
    %1927 = vadd.xlane.f32.xlu0 %v1926
    %v1928 = vpop.xlane.xlu0 %1927
    %v1929 = vsel %vm1715, %v1859, 0.0
    %1930 = vadd.xlane.f32.xlu0 %v1929
    %v1931 = vpop.xlane.xlu0 %1930
    %v1932 = vsel %vm1715, %v1861, 0.0
    %1933 = vadd.xlane.f32.xlu0 %v1932
    %v1934 = vpop.xlane.xlu0 %1933
    %v1935 = vsel %vm1715, %v1863, 0.0
    %1936 = vadd.xlane.f32.xlu0 %v1935
    %v1937 = vpop.xlane.xlu0 %1936
    %v1938 = vsel %vm1715, %v1865, 0.0
    %1939 = vadd.xlane.f32.xlu0 %v1938
    %v1940 = vpop.xlane.xlu0 %1939
    %v1941 = vsel %vm1715, %v1867, 0.0
    %1942 = vadd.xlane.f32.xlu0 %v1941
    %v1943 = vpop.xlane.xlu0 %1942
    %v1944 = vsel %vm1715, %v1869, 0.0
    %1945 = vadd.xlane.f32.xlu0 %v1944
    %v1946 = vpop.xlane.xlu0 %1945
    %v1947 = vsel %vm1715, %v1871, 0.0
    %1948 = vadd.xlane.f32.xlu0 %v1947
    %v1949 = vpop.xlane.xlu0 %1948
    %v1950 = vsel %vm1715, %v1873, 0.0
    %1951 = vadd.xlane.f32.xlu0 %v1950
    %v1952 = vpop.xlane.xlu0 %1951
    %v1953 = vsel %vm1715, %v1875, 0.0
    %1954 = vadd.xlane.f32.xlu0 %v1953
    %v1955 = vpop.xlane.xlu0 %1954
    %v1956 = vsel %vm1715, %v1877, 0.0
    %1957 = vadd.xlane.f32.xlu0 %v1956
    %v1958 = vpop.xlane.xlu0 %1957
    %v1959 = vsel %vm1715, %v1879, 0.0
    %1960 = vadd.xlane.f32.xlu0 %v1959
    %v1961 = vpop.xlane.xlu0 %1960
    %v1962 = vsel %vm1715, %v1881, 0.0
    %1963 = vadd.xlane.f32.xlu0 %v1962
    %v1964 = vpop.xlane.xlu0 %1963
    %v1965 = vsel %vm1715, %v1883, 0.0
    %1966 = vadd.xlane.f32.xlu0 %v1965
    %v1967 = vpop.xlane.xlu0 %1966
    %v1968 = vsel %vm1715, %v1885, 0.0
    %1969 = vadd.xlane.f32.xlu0 %v1968
    %v1970 = vpop.xlane.xlu0 %1969
    %v1971 = vsel %vm1715, %v1887, 0.0
    %1972 = vadd.xlane.f32.xlu0 %v1971
    %v1973 = vpop.xlane.xlu0 %1972
    %v1974 = vsel %vm1715, %v1889, 0.0
    %1975 = vadd.xlane.f32.xlu0 %v1974
    %v1976 = vpop.xlane.xlu0 %1975
    %v1977 = vsel %vm1715, %v1891, 0.0
    %1978 = vadd.xlane.f32.xlu0 %v1977
    %v1979 = vpop.xlane.xlu0 %1978
    %v1980 = vsel %vm1715, %v1893, 0.0
    %1981 = vadd.xlane.f32.xlu0 %v1980
    %v1982 = vpop.xlane.xlu0 %1981
    %v1983 = vsel %vm1715, %v1895, 0.0
    %1984 = vadd.xlane.f32.xlu0 %v1983
    %v1985 = vpop.xlane.xlu0 %1984
    %v1986 = vsel %vm1715, %v1897, 0.0
    %1987 = vadd.xlane.f32.xlu0 %v1986
    %v1988 = vpop.xlane.xlu0 %1987
    %v1989 = vsel %vm1715, %v1899, 0.0
    %1990 = vadd.xlane.f32.xlu0 %v1989
    %v1991 = vpop.xlane.xlu0 %1990
    %v1992 = vsel %vm1715, %v1901, 0.0
    %1993 = vadd.xlane.f32.xlu0 %v1992
    %v1994 = vpop.xlane.xlu0 %1993
    %v1995 = vsel %vm1715, %v1903, 0.0
    %1996 = vadd.xlane.f32.xlu0 %v1995
    %v1997 = vpop.xlane.xlu0 %1996
    %v1998 = vsel %vm1715, %v1905, 0.0
    %1999 = vadd.xlane.f32.xlu0 %v1998
    %v2000 = vpop.xlane.xlu0 %1999
    %v2001 = vsel %vm1715, %v1907, 0.0
    %2002 = vadd.xlane.f32.xlu0 %v2001
    %v2003 = vpop.xlane.xlu0 %2002
    %v2004 = vrcp.pop %v1910
    %v2005 = vrcp.pop %v1913
    %v2006 = vrcp.pop %v1916
    %v2007 = vrcp.pop %v1919
    %v2008 = vrcp.pop %v1922
    %v2009 = vrcp.pop %v1925
    %v2010 = vrcp.pop %v1928
    %v2011 = vrcp.pop %v1931
    %v2012 = vrcp.pop %v1934
    %v2013 = vrcp.pop %v1937
    %v2014 = vrcp.pop %v1940
    %v2015 = vrcp.pop %v1943
    %v2016 = vrcp.pop %v1946
    %v2017 = vrcp.pop %v1949
    %v2018 = vrcp.pop %v1952
    %v2019 = vrcp.pop %v1955
    %v2020 = vrcp.pop %v1958
    %v2021 = vrcp.pop %v1961
    %v2022 = vrcp.pop %v1964
    %v2023 = vrcp.pop %v1967
    %v2024 = vrcp.pop %v1970
    %v2025 = vrcp.pop %v1973
    %v2026 = vrcp.pop %v1976
    %v2027 = vrcp.pop %v1979
    %v2028 = vrcp.pop %v1982
    %v2029 = vrcp.pop %v1985
    %v2030 = vrcp.pop %v1988
    %v2031 = vrcp.pop %v1991
    %v2032 = vrcp.pop %v1994
    %v2033 = vrcp.pop %v1997
    %v2034 = vrcp.pop %v2000
    %v2035 = vrcp.pop %v2003
    %v2036 = vmul.f32 %v1845, %v2004
    %v2037 = vmul.f32 %v1847, %v2005
    %v2038 = vmul.f32 %v1849, %v2006
    %v2039 = vmul.f32 %v1851, %v2007
    %v2040 = vmul.f32 %v1853, %v2008
    %v2041 = vmul.f32 %v1855, %v2009
    %v2042 = vmul.f32 %v1857, %v2010
    %v2043 = vmul.f32 %v1859, %v2011
    %v2044 = vmul.f32 %v1861, %v2012
    %v2045 = vmul.f32 %v1863, %v2013
    %v2046 = vmul.f32 %v1865, %v2014
    %v2047 = vmul.f32 %v1867, %v2015
    %v2048 = vmul.f32 %v1869, %v2016
    %v2049 = vmul.f32 %v1871, %v2017
    %v2050 = vmul.f32 %v1873, %v2018
    %v2051 = vmul.f32 %v1875, %v2019
    %v2052 = vmul.f32 %v1877, %v2020
    %v2053 = vmul.f32 %v1879, %v2021
    %v2054 = vmul.f32 %v1881, %v2022
    %v2055 = vmul.f32 %v1883, %v2023
    %v2056 = vmul.f32 %v1885, %v2024
    %v2057 = vmul.f32 %v1887, %v2025
    %v2058 = vmul.f32 %v1889, %v2026
    %v2059 = vmul.f32 %v1891, %v2027
    %v2060 = vmul.f32 %v1893, %v2028
    %v2061 = vmul.f32 %v1895, %v2029
    %v2062 = vmul.f32 %v1897, %v2030
    %v2063 = vmul.f32 %v1899, %v2031
    %v2064 = vmul.f32 %v1901, %v2032
    %v2065 = vmul.f32 %v1903, %v2033
    %v2066 = vmul.f32 %v1905, %v2034
    %v2067 = vmul.f32 %v1907, %v2035
    %v2068 = vpack.c.bf16 %v2037, %v2036
    %v2069 = vpack.c.bf16 %v2039, %v2038
    %v2070 = vpack.c.bf16 %v2041, %v2040
    %v2071 = vpack.c.bf16 %v2043, %v2042
    %v2072 = vpack.c.bf16 %v2045, %v2044
    %v2073 = vpack.c.bf16 %v2047, %v2046
    %v2074 = vpack.c.bf16 %v2049, %v2048
    %v2075 = vpack.c.bf16 %v2051, %v2050
    %v2076 = vpack.c.bf16 %v2053, %v2052
    %v2077 = vpack.c.bf16 %v2055, %v2054
    %v2078 = vpack.c.bf16 %v2057, %v2056
    %v2079 = vpack.c.bf16 %v2059, %v2058
    %v2080 = vpack.c.bf16 %v2061, %v2060
    %v2081 = vpack.c.bf16 %v2063, %v2062
    %v2082 = vpack.c.bf16 %v2065, %v2064
    %v2083 = vpack.c.bf16 %v2067, %v2066
    %v2085 = vsel %vm1715, %v2068, 0
    %2087 = vmatprep.subr.bf16.mxu0 0
    %2088 = vmatpush1.bf16.msra.mxu0 0
    %2089 = vmatprep.subr.bf16.mxu0 0
    %2090 = vmatpush1.bf16.msra.mxu0 0
    %2091 = vmatprep.subr.bf16.mxu0 0
    %2092 = vmatpush1.bf16.msra.mxu0 0
    %2093 = vmatprep.subr.bf16.mxu0 0
    %2094 = vmatpush1.bf16.msra.mxu0 0
    %2095 = vmatprep.subr.bf16.mxu0 0
    %2096 = vmatpush1.bf16.msra.mxu0 0
    %2097 = vmatprep.subr.bf16.mxu0 0
    %2098 = vmatpush1.bf16.msra.mxu0 0
    %2099 = vmatprep.subr.bf16.mxu0 0
    %2100 = vmatpush1.bf16.msra.mxu0 0
    %2101 = vmatprep.subr.bf16.mxu0 0
    %2102 = vmatpush1.bf16.msra.mxu0 %v946
    %2103 = vmatprep.subr.bf16.mxu0 0
    %2104 = vmatpush2.bf16.msra.mxu0 0
    %2105 = vmatprep.subr.bf16.mxu0 0
    %2106 = vmatpush2.bf16.msra.mxu0 0
    %2107 = vmatprep.subr.bf16.mxu0 0
    %2108 = vmatpush2.bf16.msra.mxu0 0
    %2109 = vmatprep.subr.bf16.mxu0 0
    %2110 = vmatpush2.bf16.msra.mxu0 0
    %2111 = vmatprep.subr.bf16.mxu0 0
    %2112 = vmatpush2.bf16.msra.mxu0 0
    %2113 = vmatprep.subr.bf16.mxu0 0
    %2114 = vmatpush2.bf16.msra.mxu0 0
    %2115 = vmatprep.subr.bf16.mxu0 0
    %2116 = vmatpush2.bf16.msra.mxu0 0
    %2117 = vmatprep.subr.bf16.mxu0 0
    %2118 = vmatpush2.bf16.msra.mxu0 0
    %2119 = vmatprep.mubr.bf16.mxu0 0
    %2120 = vmatmul.mubr.bf16.gmra.mxu0 %v2085
    %v2121 = vpop.f32.mrf.mxu0
    %v2122 = vadd.f32 0.0, %v2121
    %v2123 = vpop.f32.mrf.mxu0
    %v2124 = vpop.f32.mrf.mxu0
    %v2125 = vadd.f32 0.0, %v2124
    %v2126 = vpop.f32.mrf.mxu0
    %2127 = vdwg.mxu0
    %v2129 = vsel %vm1715, %v2069, 0
    %2131 = vmatprep.subr.bf16.mxu0 0
    %2132 = vmatpush1.bf16.msra.mxu0 0
    %2133 = vmatprep.subr.bf16.mxu0 0
    %2134 = vmatpush1.bf16.msra.mxu0 0
    %2135 = vmatprep.subr.bf16.mxu0 0
    %2136 = vmatpush1.bf16.msra.mxu0 0
    %2137 = vmatprep.subr.bf16.mxu0 0
    %2138 = vmatpush1.bf16.msra.mxu0 0
    %2139 = vmatprep.subr.bf16.mxu0 0
    %2140 = vmatpush1.bf16.msra.mxu0 0
    %2141 = vmatprep.subr.bf16.mxu0 0
    %2142 = vmatpush1.bf16.msra.mxu0 0
    %2143 = vmatprep.subr.bf16.mxu0 0
    %2144 = vmatpush1.bf16.msra.mxu0 0
    %2145 = vmatprep.subr.bf16.mxu0 0
    %2146 = vmatpush1.bf16.msra.mxu0 %v947
    %2147 = vmatprep.subr.bf16.mxu0 0
    %2148 = vmatpush2.bf16.msra.mxu0 0
    %2149 = vmatprep.subr.bf16.mxu0 0
    %2150 = vmatpush2.bf16.msra.mxu0 0
    %2151 = vmatprep.subr.bf16.mxu0 0
    %2152 = vmatpush2.bf16.msra.mxu0 0
    %2153 = vmatprep.subr.bf16.mxu0 0
    %2154 = vmatpush2.bf16.msra.mxu0 0
    %2155 = vmatprep.subr.bf16.mxu0 0
    %2156 = vmatpush2.bf16.msra.mxu0 0
    %2157 = vmatprep.subr.bf16.mxu0 0
    %2158 = vmatpush2.bf16.msra.mxu0 0
    %2159 = vmatprep.subr.bf16.mxu0 0
    %2160 = vmatpush2.bf16.msra.mxu0 0
    %2161 = vmatprep.subr.bf16.mxu0 0
    %2162 = vmatpush2.bf16.msra.mxu0 0
    %2163 = vmatprep.mubr.bf16.mxu0 0
    %2164 = vmatmul.mubr.bf16.gmra.mxu0 %v2129
    %v2165 = vpop.f32.mrf.mxu0
    %v2166 = vadd.f32 0.0, %v2165
    %v2167 = vpop.f32.mrf.mxu0
    %v2168 = vpop.f32.mrf.mxu0
    %v2169 = vadd.f32 0.0, %v2168
    %v2170 = vpop.f32.mrf.mxu0
    %2171 = vdwg.mxu0
    %v2173 = vsel %vm1715, %v2070, 0
    %2175 = vmatprep.subr.bf16.mxu0 0
    %2176 = vmatpush1.bf16.msra.mxu0 0
    %2177 = vmatprep.subr.bf16.mxu0 0
    %2178 = vmatpush1.bf16.msra.mxu0 0
    %2179 = vmatprep.subr.bf16.mxu0 0
    %2180 = vmatpush1.bf16.msra.mxu0 0
    %2181 = vmatprep.subr.bf16.mxu0 0
    %2182 = vmatpush1.bf16.msra.mxu0 0
    %2183 = vmatprep.subr.bf16.mxu0 0
    %2184 = vmatpush1.bf16.msra.mxu0 0
    %2185 = vmatprep.subr.bf16.mxu0 0
    %2186 = vmatpush1.bf16.msra.mxu0 0
    %2187 = vmatprep.subr.bf16.mxu0 0
    %2188 = vmatpush1.bf16.msra.mxu0 0
    %2189 = vmatprep.subr.bf16.mxu0 0
    %2190 = vmatpush1.bf16.msra.mxu0 %v948
    %2191 = vmatprep.subr.bf16.mxu0 0
    %2192 = vmatpush2.bf16.msra.mxu0 0
    %2193 = vmatprep.subr.bf16.mxu0 0
    %2194 = vmatpush2.bf16.msra.mxu0 0
    %2195 = vmatprep.subr.bf16.mxu0 0
    %2196 = vmatpush2.bf16.msra.mxu0 0
    %2197 = vmatprep.subr.bf16.mxu0 0
    %2198 = vmatpush2.bf16.msra.mxu0 0
    %2199 = vmatprep.subr.bf16.mxu0 0
    %2200 = vmatpush2.bf16.msra.mxu0 0
    %2201 = vmatprep.subr.bf16.mxu0 0
    %2202 = vmatpush2.bf16.msra.mxu0 0
    %2203 = vmatprep.subr.bf16.mxu0 0
    %2204 = vmatpush2.bf16.msra.mxu0 0
    %2205 = vmatprep.subr.bf16.mxu0 0
    %2206 = vmatpush2.bf16.msra.mxu0 0
    %2207 = vmatprep.mubr.bf16.mxu0 0
    %2208 = vmatmul.mubr.bf16.gmra.mxu0 %v2173
    %v2209 = vpop.f32.mrf.mxu0
    %v2210 = vadd.f32 0.0, %v2209
    %v2211 = vpop.f32.mrf.mxu0
    %v2212 = vpop.f32.mrf.mxu0
    %v2213 = vadd.f32 0.0, %v2212
    %v2214 = vpop.f32.mrf.mxu0
    %2215 = vdwg.mxu0
    %v2217 = vsel %vm1715, %v2071, 0
    %2219 = vmatprep.subr.bf16.mxu0 0
    %2220 = vmatpush1.bf16.msra.mxu0 0
    %2221 = vmatprep.subr.bf16.mxu0 0
    %2222 = vmatpush1.bf16.msra.mxu0 0
    %2223 = vmatprep.subr.bf16.mxu0 0
    %2224 = vmatpush1.bf16.msra.mxu0 0
    %2225 = vmatprep.subr.bf16.mxu0 0
    %2226 = vmatpush1.bf16.msra.mxu0 0
    %2227 = vmatprep.subr.bf16.mxu0 0
    %2228 = vmatpush1.bf16.msra.mxu0 0
    %2229 = vmatprep.subr.bf16.mxu0 0
    %2230 = vmatpush1.bf16.msra.mxu0 0
    %2231 = vmatprep.subr.bf16.mxu0 0
    %2232 = vmatpush1.bf16.msra.mxu0 0
    %2233 = vmatprep.subr.bf16.mxu0 0
    %2234 = vmatpush1.bf16.msra.mxu0 %v949
    %2235 = vmatprep.subr.bf16.mxu0 0
    %2236 = vmatpush2.bf16.msra.mxu0 0
    %2237 = vmatprep.subr.bf16.mxu0 0
    %2238 = vmatpush2.bf16.msra.mxu0 0
    %2239 = vmatprep.subr.bf16.mxu0 0
    %2240 = vmatpush2.bf16.msra.mxu0 0
    %2241 = vmatprep.subr.bf16.mxu0 0
    %2242 = vmatpush2.bf16.msra.mxu0 0
    %2243 = vmatprep.subr.bf16.mxu0 0
    %2244 = vmatpush2.bf16.msra.mxu0 0
    %2245 = vmatprep.subr.bf16.mxu0 0
    %2246 = vmatpush2.bf16.msra.mxu0 0
    %2247 = vmatprep.subr.bf16.mxu0 0
    %2248 = vmatpush2.bf16.msra.mxu0 0
    %2249 = vmatprep.subr.bf16.mxu0 0
    %2250 = vmatpush2.bf16.msra.mxu0 0
    %2251 = vmatprep.mubr.bf16.mxu0 0
    %2252 = vmatmul.mubr.bf16.gmra.mxu0 %v2217
    %v2253 = vpop.f32.mrf.mxu0
    %v2254 = vadd.f32 0.0, %v2253
    %v2255 = vpop.f32.mrf.mxu0
    %v2256 = vpop.f32.mrf.mxu0
    %v2257 = vadd.f32 0.0, %v2256
    %v2258 = vpop.f32.mrf.mxu0
    %2259 = vdwg.mxu0
    %v2261 = vsel %vm1715, %v2072, 0
    %2263 = vmatprep.subr.bf16.mxu0 0
    %2264 = vmatpush1.bf16.msra.mxu0 0
    %2265 = vmatprep.subr.bf16.mxu0 0
    %2266 = vmatpush1.bf16.msra.mxu0 0
    %2267 = vmatprep.subr.bf16.mxu0 0
    %2268 = vmatpush1.bf16.msra.mxu0 0
    %2269 = vmatprep.subr.bf16.mxu0 0
    %2270 = vmatpush1.bf16.msra.mxu0 0
    %2271 = vmatprep.subr.bf16.mxu0 0
    %2272 = vmatpush1.bf16.msra.mxu0 0
    %2273 = vmatprep.subr.bf16.mxu0 0
    %2274 = vmatpush1.bf16.msra.mxu0 0
    %2275 = vmatprep.subr.bf16.mxu0 0
    %2276 = vmatpush1.bf16.msra.mxu0 0
    %2277 = vmatprep.subr.bf16.mxu0 0
    %2278 = vmatpush1.bf16.msra.mxu0 %v950
    %2279 = vmatprep.subr.bf16.mxu0 0
    %2280 = vmatpush2.bf16.msra.mxu0 0
    %2281 = vmatprep.subr.bf16.mxu0 0
    %2282 = vmatpush2.bf16.msra.mxu0 0
    %2283 = vmatprep.subr.bf16.mxu0 0
    %2284 = vmatpush2.bf16.msra.mxu0 0
    %2285 = vmatprep.subr.bf16.mxu0 0
    %2286 = vmatpush2.bf16.msra.mxu0 0
    %2287 = vmatprep.subr.bf16.mxu0 0
    %2288 = vmatpush2.bf16.msra.mxu0 0
    %2289 = vmatprep.subr.bf16.mxu0 0
    %2290 = vmatpush2.bf16.msra.mxu0 0
    %2291 = vmatprep.subr.bf16.mxu0 0
    %2292 = vmatpush2.bf16.msra.mxu0 0
    %2293 = vmatprep.subr.bf16.mxu0 0
    %2294 = vmatpush2.bf16.msra.mxu0 0
    %2295 = vmatprep.mubr.bf16.mxu0 0
    %2296 = vmatmul.mubr.bf16.gmra.mxu0 %v2261
    %v2297 = vpop.f32.mrf.mxu0
    %v2298 = vadd.f32 0.0, %v2297
    %v2299 = vpop.f32.mrf.mxu0
    %v2300 = vpop.f32.mrf.mxu0
    %v2301 = vadd.f32 0.0, %v2300
    %v2302 = vpop.f32.mrf.mxu0
    %2303 = vdwg.mxu0
    %v2305 = vsel %vm1715, %v2073, 0
    %2307 = vmatprep.subr.bf16.mxu0 0
    %2308 = vmatpush1.bf16.msra.mxu0 0
    %2309 = vmatprep.subr.bf16.mxu0 0
    %2310 = vmatpush1.bf16.msra.mxu0 0
    %2311 = vmatprep.subr.bf16.mxu0 0
    %2312 = vmatpush1.bf16.msra.mxu0 0
    %2313 = vmatprep.subr.bf16.mxu0 0
    %2314 = vmatpush1.bf16.msra.mxu0 0
    %2315 = vmatprep.subr.bf16.mxu0 0
    %2316 = vmatpush1.bf16.msra.mxu0 0
    %2317 = vmatprep.subr.bf16.mxu0 0
    %2318 = vmatpush1.bf16.msra.mxu0 0
    %2319 = vmatprep.subr.bf16.mxu0 0
    %2320 = vmatpush1.bf16.msra.mxu0 0
    %2321 = vmatprep.subr.bf16.mxu0 0
    %2322 = vmatpush1.bf16.msra.mxu0 %v951
    %2323 = vmatprep.subr.bf16.mxu0 0
    %2324 = vmatpush2.bf16.msra.mxu0 0
    %2325 = vmatprep.subr.bf16.mxu0 0
    %2326 = vmatpush2.bf16.msra.mxu0 0
    %2327 = vmatprep.subr.bf16.mxu0 0
    %2328 = vmatpush2.bf16.msra.mxu0 0
    %2329 = vmatprep.subr.bf16.mxu0 0
    %2330 = vmatpush2.bf16.msra.mxu0 0
    %2331 = vmatprep.subr.bf16.mxu0 0
    %2332 = vmatpush2.bf16.msra.mxu0 0
    %2333 = vmatprep.subr.bf16.mxu0 0
    %2334 = vmatpush2.bf16.msra.mxu0 0
    %2335 = vmatprep.subr.bf16.mxu0 0
    %2336 = vmatpush2.bf16.msra.mxu0 0
    %2337 = vmatprep.subr.bf16.mxu0 0
    %2338 = vmatpush2.bf16.msra.mxu0 0
    %2339 = vmatprep.mubr.bf16.mxu0 0
    %2340 = vmatmul.mubr.bf16.gmra.mxu0 %v2305
    %v2341 = vpop.f32.mrf.mxu0
    %v2342 = vadd.f32 0.0, %v2341
    %v2343 = vpop.f32.mrf.mxu0
    %v2344 = vpop.f32.mrf.mxu0
    %v2345 = vadd.f32 0.0, %v2344
    %v2346 = vpop.f32.mrf.mxu0
    %2347 = vdwg.mxu0
    %v2349 = vsel %vm1715, %v2074, 0
    %2351 = vmatprep.subr.bf16.mxu0 0
    %2352 = vmatpush1.bf16.msra.mxu0 0
    %2353 = vmatprep.subr.bf16.mxu0 0
    %2354 = vmatpush1.bf16.msra.mxu0 0
    %2355 = vmatprep.subr.bf16.mxu0 0
    %2356 = vmatpush1.bf16.msra.mxu0 0
    %2357 = vmatprep.subr.bf16.mxu0 0
    %2358 = vmatpush1.bf16.msra.mxu0 0
    %2359 = vmatprep.subr.bf16.mxu0 0
    %2360 = vmatpush1.bf16.msra.mxu0 0
    %2361 = vmatprep.subr.bf16.mxu0 0
    %2362 = vmatpush1.bf16.msra.mxu0 0
    %2363 = vmatprep.subr.bf16.mxu0 0
    %2364 = vmatpush1.bf16.msra.mxu0 0
    %2365 = vmatprep.subr.bf16.mxu0 0
    %2366 = vmatpush1.bf16.msra.mxu0 %v952
    %2367 = vmatprep.subr.bf16.mxu0 0
    %2368 = vmatpush2.bf16.msra.mxu0 0
    %2369 = vmatprep.subr.bf16.mxu0 0
    %2370 = vmatpush2.bf16.msra.mxu0 0
    %2371 = vmatprep.subr.bf16.mxu0 0
    %2372 = vmatpush2.bf16.msra.mxu0 0
    %2373 = vmatprep.subr.bf16.mxu0 0
    %2374 = vmatpush2.bf16.msra.mxu0 0
    %2375 = vmatprep.subr.bf16.mxu0 0
    %2376 = vmatpush2.bf16.msra.mxu0 0
    %2377 = vmatprep.subr.bf16.mxu0 0
    %2378 = vmatpush2.bf16.msra.mxu0 0
    %2379 = vmatprep.subr.bf16.mxu0 0
    %2380 = vmatpush2.bf16.msra.mxu0 0
    %2381 = vmatprep.subr.bf16.mxu0 0
    %2382 = vmatpush2.bf16.msra.mxu0 0
    %2383 = vmatprep.mubr.bf16.mxu0 0
    %2384 = vmatmul.mubr.bf16.gmra.mxu0 %v2349
    %v2385 = vpop.f32.mrf.mxu0
    %v2386 = vadd.f32 0.0, %v2385
    %v2387 = vpop.f32.mrf.mxu0
    %v2388 = vpop.f32.mrf.mxu0
    %v2389 = vadd.f32 0.0, %v2388
    %v2390 = vpop.f32.mrf.mxu0
    %2391 = vdwg.mxu0
    %v2393 = vsel %vm1715, %v2075, 0
    %2395 = vmatprep.subr.bf16.mxu0 0
    %2396 = vmatpush1.bf16.msra.mxu0 0
    %2397 = vmatprep.subr.bf16.mxu0 0
    %2398 = vmatpush1.bf16.msra.mxu0 0
    %2399 = vmatprep.subr.bf16.mxu0 0
    %2400 = vmatpush1.bf16.msra.mxu0 0
    %2401 = vmatprep.subr.bf16.mxu0 0
    %2402 = vmatpush1.bf16.msra.mxu0 0
    %2403 = vmatprep.subr.bf16.mxu0 0
    %2404 = vmatpush1.bf16.msra.mxu0 0
    %2405 = vmatprep.subr.bf16.mxu0 0
    %2406 = vmatpush1.bf16.msra.mxu0 0
    %2407 = vmatprep.subr.bf16.mxu0 0
    %2408 = vmatpush1.bf16.msra.mxu0 0
    %2409 = vmatprep.subr.bf16.mxu0 0
    %2410 = vmatpush1.bf16.msra.mxu0 %v953
    %2411 = vmatprep.subr.bf16.mxu0 0
    %2412 = vmatpush2.bf16.msra.mxu0 0
    %2413 = vmatprep.subr.bf16.mxu0 0
    %2414 = vmatpush2.bf16.msra.mxu0 0
    %2415 = vmatprep.subr.bf16.mxu0 0
    %2416 = vmatpush2.bf16.msra.mxu0 0
    %2417 = vmatprep.subr.bf16.mxu0 0
    %2418 = vmatpush2.bf16.msra.mxu0 0
    %2419 = vmatprep.subr.bf16.mxu0 0
    %2420 = vmatpush2.bf16.msra.mxu0 0
    %2421 = vmatprep.subr.bf16.mxu0 0
    %2422 = vmatpush2.bf16.msra.mxu0 0
    %2423 = vmatprep.subr.bf16.mxu0 0
    %2424 = vmatpush2.bf16.msra.mxu0 0
    %2425 = vmatprep.subr.bf16.mxu0 0
    %2426 = vmatpush2.bf16.msra.mxu0 0
    %2427 = vmatprep.mubr.bf16.mxu0 0
    %2428 = vmatmul.mubr.bf16.gmra.mxu0 %v2393
    %v2429 = vpop.f32.mrf.mxu0
    %v2430 = vadd.f32 0.0, %v2429
    %v2431 = vpop.f32.mrf.mxu0
    %v2432 = vpop.f32.mrf.mxu0
    %v2433 = vadd.f32 0.0, %v2432
    %v2434 = vpop.f32.mrf.mxu0
    %2435 = vdwg.mxu0
    %v2437 = vsel %vm1715, %v2076, 0
    %2439 = vmatprep.subr.bf16.mxu0 0
    %2440 = vmatpush1.bf16.msra.mxu0 0
    %2441 = vmatprep.subr.bf16.mxu0 0
    %2442 = vmatpush1.bf16.msra.mxu0 0
    %2443 = vmatprep.subr.bf16.mxu0 0
    %2444 = vmatpush1.bf16.msra.mxu0 0
    %2445 = vmatprep.subr.bf16.mxu0 0
    %2446 = vmatpush1.bf16.msra.mxu0 0
    %2447 = vmatprep.subr.bf16.mxu0 0
    %2448 = vmatpush1.bf16.msra.mxu0 0
    %2449 = vmatprep.subr.bf16.mxu0 0
    %2450 = vmatpush1.bf16.msra.mxu0 0
    %2451 = vmatprep.subr.bf16.mxu0 0
    %2452 = vmatpush1.bf16.msra.mxu0 0
    %2453 = vmatprep.subr.bf16.mxu0 0
    %2454 = vmatpush1.bf16.msra.mxu0 %v954
    %2455 = vmatprep.subr.bf16.mxu0 0
    %2456 = vmatpush2.bf16.msra.mxu0 0
    %2457 = vmatprep.subr.bf16.mxu0 0
    %2458 = vmatpush2.bf16.msra.mxu0 0
    %2459 = vmatprep.subr.bf16.mxu0 0
    %2460 = vmatpush2.bf16.msra.mxu0 0
    %2461 = vmatprep.subr.bf16.mxu0 0
    %2462 = vmatpush2.bf16.msra.mxu0 0
    %2463 = vmatprep.subr.bf16.mxu0 0
    %2464 = vmatpush2.bf16.msra.mxu0 0
    %2465 = vmatprep.subr.bf16.mxu0 0
    %2466 = vmatpush2.bf16.msra.mxu0 0
    %2467 = vmatprep.subr.bf16.mxu0 0
    %2468 = vmatpush2.bf16.msra.mxu0 0
    %2469 = vmatprep.subr.bf16.mxu0 0
    %2470 = vmatpush2.bf16.msra.mxu0 0
    %2471 = vmatprep.mubr.bf16.mxu0 0
    %2472 = vmatmul.mubr.bf16.gmra.mxu0 %v2437
    %v2473 = vpop.f32.mrf.mxu0
    %v2474 = vadd.f32 0.0, %v2473
    %v2475 = vpop.f32.mrf.mxu0
    %v2476 = vpop.f32.mrf.mxu0
    %v2477 = vadd.f32 0.0, %v2476
    %v2478 = vpop.f32.mrf.mxu0
    %2479 = vdwg.mxu0
    %v2481 = vsel %vm1715, %v2077, 0
    %2483 = vmatprep.subr.bf16.mxu0 0
    %2484 = vmatpush1.bf16.msra.mxu0 0
    %2485 = vmatprep.subr.bf16.mxu0 0
    %2486 = vmatpush1.bf16.msra.mxu0 0
    %2487 = vmatprep.subr.bf16.mxu0 0
    %2488 = vmatpush1.bf16.msra.mxu0 0
    %2489 = vmatprep.subr.bf16.mxu0 0
    %2490 = vmatpush1.bf16.msra.mxu0 0
    %2491 = vmatprep.subr.bf16.mxu0 0
    %2492 = vmatpush1.bf16.msra.mxu0 0
    %2493 = vmatprep.subr.bf16.mxu0 0
    %2494 = vmatpush1.bf16.msra.mxu0 0
    %2495 = vmatprep.subr.bf16.mxu0 0
    %2496 = vmatpush1.bf16.msra.mxu0 0
    %2497 = vmatprep.subr.bf16.mxu0 0
    %2498 = vmatpush1.bf16.msra.mxu0 %v955
    %2499 = vmatprep.subr.bf16.mxu0 0
    %2500 = vmatpush2.bf16.msra.mxu0 0
    %2501 = vmatprep.subr.bf16.mxu0 0
    %2502 = vmatpush2.bf16.msra.mxu0 0
    %2503 = vmatprep.subr.bf16.mxu0 0
    %2504 = vmatpush2.bf16.msra.mxu0 0
    %2505 = vmatprep.subr.bf16.mxu0 0
    %2506 = vmatpush2.bf16.msra.mxu0 0
    %2507 = vmatprep.subr.bf16.mxu0 0
    %2508 = vmatpush2.bf16.msra.mxu0 0
    %2509 = vmatprep.subr.bf16.mxu0 0
    %2510 = vmatpush2.bf16.msra.mxu0 0
    %2511 = vmatprep.subr.bf16.mxu0 0
    %2512 = vmatpush2.bf16.msra.mxu0 0
    %2513 = vmatprep.subr.bf16.mxu0 0
    %2514 = vmatpush2.bf16.msra.mxu0 0
    %2515 = vmatprep.mubr.bf16.mxu0 0
    %2516 = vmatmul.mubr.bf16.gmra.mxu0 %v2481
    %v2517 = vpop.f32.mrf.mxu0
    %v2518 = vadd.f32 0.0, %v2517
    %v2519 = vpop.f32.mrf.mxu0
    %v2520 = vpop.f32.mrf.mxu0
    %v2521 = vadd.f32 0.0, %v2520
    %v2522 = vpop.f32.mrf.mxu0
    %2523 = vdwg.mxu0
    %v2525 = vsel %vm1715, %v2078, 0
    %2527 = vmatprep.subr.bf16.mxu0 0
    %2528 = vmatpush1.bf16.msra.mxu0 0
    %2529 = vmatprep.subr.bf16.mxu0 0
    %2530 = vmatpush1.bf16.msra.mxu0 0
    %2531 = vmatprep.subr.bf16.mxu0 0
    %2532 = vmatpush1.bf16.msra.mxu0 0
    %2533 = vmatprep.subr.bf16.mxu0 0
    %2534 = vmatpush1.bf16.msra.mxu0 0
    %2535 = vmatprep.subr.bf16.mxu0 0
    %2536 = vmatpush1.bf16.msra.mxu0 0
    %2537 = vmatprep.subr.bf16.mxu0 0
    %2538 = vmatpush1.bf16.msra.mxu0 0
    %2539 = vmatprep.subr.bf16.mxu0 0
    %2540 = vmatpush1.bf16.msra.mxu0 0
    %2541 = vmatprep.subr.bf16.mxu0 0
    %2542 = vmatpush1.bf16.msra.mxu0 %v956
    %2543 = vmatprep.subr.bf16.mxu0 0
    %2544 = vmatpush2.bf16.msra.mxu0 0
    %2545 = vmatprep.subr.bf16.mxu0 0
    %2546 = vmatpush2.bf16.msra.mxu0 0
    %2547 = vmatprep.subr.bf16.mxu0 0
    %2548 = vmatpush2.bf16.msra.mxu0 0
    %2549 = vmatprep.subr.bf16.mxu0 0
    %2550 = vmatpush2.bf16.msra.mxu0 0
    %2551 = vmatprep.subr.bf16.mxu0 0
    %2552 = vmatpush2.bf16.msra.mxu0 0
    %2553 = vmatprep.subr.bf16.mxu0 0
    %2554 = vmatpush2.bf16.msra.mxu0 0
    %2555 = vmatprep.subr.bf16.mxu0 0
    %2556 = vmatpush2.bf16.msra.mxu0 0
    %2557 = vmatprep.subr.bf16.mxu0 0
    %2558 = vmatpush2.bf16.msra.mxu0 0
    %2559 = vmatprep.mubr.bf16.mxu0 0
    %2560 = vmatmul.mubr.bf16.gmra.mxu0 %v2525
    %v2561 = vpop.f32.mrf.mxu0
    %v2562 = vadd.f32 0.0, %v2561
    %v2563 = vpop.f32.mrf.mxu0
    %v2564 = vpop.f32.mrf.mxu0
    %v2565 = vadd.f32 0.0, %v2564
    %v2566 = vpop.f32.mrf.mxu0
    %2567 = vdwg.mxu0
    %v2569 = vsel %vm1715, %v2079, 0
    %2571 = vmatprep.subr.bf16.mxu0 0
    %2572 = vmatpush1.bf16.msra.mxu0 0
    %2573 = vmatprep.subr.bf16.mxu0 0
    %2574 = vmatpush1.bf16.msra.mxu0 0
    %2575 = vmatprep.subr.bf16.mxu0 0
    %2576 = vmatpush1.bf16.msra.mxu0 0
    %2577 = vmatprep.subr.bf16.mxu0 0
    %2578 = vmatpush1.bf16.msra.mxu0 0
    %2579 = vmatprep.subr.bf16.mxu0 0
    %2580 = vmatpush1.bf16.msra.mxu0 0
    %2581 = vmatprep.subr.bf16.mxu0 0
    %2582 = vmatpush1.bf16.msra.mxu0 0
    %2583 = vmatprep.subr.bf16.mxu0 0
    %2584 = vmatpush1.bf16.msra.mxu0 0
    %2585 = vmatprep.subr.bf16.mxu0 0
    %2586 = vmatpush1.bf16.msra.mxu0 %v957
    %2587 = vmatprep.subr.bf16.mxu0 0
    %2588 = vmatpush2.bf16.msra.mxu0 0
    %2589 = vmatprep.subr.bf16.mxu0 0
    %2590 = vmatpush2.bf16.msra.mxu0 0
    %2591 = vmatprep.subr.bf16.mxu0 0
    %2592 = vmatpush2.bf16.msra.mxu0 0
    %2593 = vmatprep.subr.bf16.mxu0 0
    %2594 = vmatpush2.bf16.msra.mxu0 0
    %2595 = vmatprep.subr.bf16.mxu0 0
    %2596 = vmatpush2.bf16.msra.mxu0 0
    %2597 = vmatprep.subr.bf16.mxu0 0
    %2598 = vmatpush2.bf16.msra.mxu0 0
    %2599 = vmatprep.subr.bf16.mxu0 0
    %2600 = vmatpush2.bf16.msra.mxu0 0
    %2601 = vmatprep.subr.bf16.mxu0 0
    %2602 = vmatpush2.bf16.msra.mxu0 0
    %2603 = vmatprep.mubr.bf16.mxu0 0
    %2604 = vmatmul.mubr.bf16.gmra.mxu0 %v2569
    %v2605 = vpop.f32.mrf.mxu0
    %v2606 = vadd.f32 0.0, %v2605
    %v2607 = vpop.f32.mrf.mxu0
    %v2608 = vpop.f32.mrf.mxu0
    %v2609 = vadd.f32 0.0, %v2608
    %v2610 = vpop.f32.mrf.mxu0
    %2611 = vdwg.mxu0
    %v2613 = vsel %vm1715, %v2080, 0
    %2615 = vmatprep.subr.bf16.mxu0 0
    %2616 = vmatpush1.bf16.msra.mxu0 0
    %2617 = vmatprep.subr.bf16.mxu0 0
    %2618 = vmatpush1.bf16.msra.mxu0 0
    %2619 = vmatprep.subr.bf16.mxu0 0
    %2620 = vmatpush1.bf16.msra.mxu0 0
    %2621 = vmatprep.subr.bf16.mxu0 0
    %2622 = vmatpush1.bf16.msra.mxu0 0
    %2623 = vmatprep.subr.bf16.mxu0 0
    %2624 = vmatpush1.bf16.msra.mxu0 0
    %2625 = vmatprep.subr.bf16.mxu0 0
    %2626 = vmatpush1.bf16.msra.mxu0 0
    %2627 = vmatprep.subr.bf16.mxu0 0
    %2628 = vmatpush1.bf16.msra.mxu0 0
    %2629 = vmatprep.subr.bf16.mxu0 0
    %2630 = vmatpush1.bf16.msra.mxu0 %v958
    %2631 = vmatprep.subr.bf16.mxu0 0
    %2632 = vmatpush2.bf16.msra.mxu0 0
    %2633 = vmatprep.subr.bf16.mxu0 0
    %2634 = vmatpush2.bf16.msra.mxu0 0
    %2635 = vmatprep.subr.bf16.mxu0 0
    %2636 = vmatpush2.bf16.msra.mxu0 0
    %2637 = vmatprep.subr.bf16.mxu0 0
    %2638 = vmatpush2.bf16.msra.mxu0 0
    %2639 = vmatprep.subr.bf16.mxu0 0
    %2640 = vmatpush2.bf16.msra.mxu0 0
    %2641 = vmatprep.subr.bf16.mxu0 0
    %2642 = vmatpush2.bf16.msra.mxu0 0
    %2643 = vmatprep.subr.bf16.mxu0 0
    %2644 = vmatpush2.bf16.msra.mxu0 0
    %2645 = vmatprep.subr.bf16.mxu0 0
    %2646 = vmatpush2.bf16.msra.mxu0 0
    %2647 = vmatprep.mubr.bf16.mxu0 0
    %2648 = vmatmul.mubr.bf16.gmra.mxu0 %v2613
    %v2649 = vpop.f32.mrf.mxu0
    %v2650 = vadd.f32 0.0, %v2649
    %v2651 = vpop.f32.mrf.mxu0
    %v2652 = vpop.f32.mrf.mxu0
    %v2653 = vadd.f32 0.0, %v2652
    %v2654 = vpop.f32.mrf.mxu0
    %2655 = vdwg.mxu0
    %v2657 = vsel %vm1715, %v2081, 0
    %2659 = vmatprep.subr.bf16.mxu0 0
    %2660 = vmatpush1.bf16.msra.mxu0 0
    %2661 = vmatprep.subr.bf16.mxu0 0
    %2662 = vmatpush1.bf16.msra.mxu0 0
    %2663 = vmatprep.subr.bf16.mxu0 0
    %2664 = vmatpush1.bf16.msra.mxu0 0
    %2665 = vmatprep.subr.bf16.mxu0 0
    %2666 = vmatpush1.bf16.msra.mxu0 0
    %2667 = vmatprep.subr.bf16.mxu0 0
    %2668 = vmatpush1.bf16.msra.mxu0 0
    %2669 = vmatprep.subr.bf16.mxu0 0
    %2670 = vmatpush1.bf16.msra.mxu0 0
    %2671 = vmatprep.subr.bf16.mxu0 0
    %2672 = vmatpush1.bf16.msra.mxu0 0
    %2673 = vmatprep.subr.bf16.mxu0 0
    %2674 = vmatpush1.bf16.msra.mxu0 %v959
    %2675 = vmatprep.subr.bf16.mxu0 0
    %2676 = vmatpush2.bf16.msra.mxu0 0
    %2677 = vmatprep.subr.bf16.mxu0 0
    %2678 = vmatpush2.bf16.msra.mxu0 0
    %2679 = vmatprep.subr.bf16.mxu0 0
    %2680 = vmatpush2.bf16.msra.mxu0 0
    %2681 = vmatprep.subr.bf16.mxu0 0
    %2682 = vmatpush2.bf16.msra.mxu0 0
    %2683 = vmatprep.subr.bf16.mxu0 0
    %2684 = vmatpush2.bf16.msra.mxu0 0
    %2685 = vmatprep.subr.bf16.mxu0 0
    %2686 = vmatpush2.bf16.msra.mxu0 0
    %2687 = vmatprep.subr.bf16.mxu0 0
    %2688 = vmatpush2.bf16.msra.mxu0 0
    %2689 = vmatprep.subr.bf16.mxu0 0
    %2690 = vmatpush2.bf16.msra.mxu0 0
    %2691 = vmatprep.mubr.bf16.mxu0 0
    %2692 = vmatmul.mubr.bf16.gmra.mxu0 %v2657
    %v2693 = vpop.f32.mrf.mxu0
    %v2694 = vadd.f32 0.0, %v2693
    %v2695 = vpop.f32.mrf.mxu0
    %v2696 = vpop.f32.mrf.mxu0
    %v2697 = vadd.f32 0.0, %v2696
    %v2698 = vpop.f32.mrf.mxu0
    %2699 = vdwg.mxu0
    %v2701 = vsel %vm1715, %v2082, 0
    %2703 = vmatprep.subr.bf16.mxu0 0
    %2704 = vmatpush1.bf16.msra.mxu0 0
    %2705 = vmatprep.subr.bf16.mxu0 0
    %2706 = vmatpush1.bf16.msra.mxu0 0
    %2707 = vmatprep.subr.bf16.mxu0 0
    %2708 = vmatpush1.bf16.msra.mxu0 0
    %2709 = vmatprep.subr.bf16.mxu0 0
    %2710 = vmatpush1.bf16.msra.mxu0 0
    %2711 = vmatprep.subr.bf16.mxu0 0
    %2712 = vmatpush1.bf16.msra.mxu0 0
    %2713 = vmatprep.subr.bf16.mxu0 0
    %2714 = vmatpush1.bf16.msra.mxu0 0
    %2715 = vmatprep.subr.bf16.mxu0 0
    %2716 = vmatpush1.bf16.msra.mxu0 0
    %2717 = vmatprep.subr.bf16.mxu0 0
    %2718 = vmatpush1.bf16.msra.mxu0 %v960
    %2719 = vmatprep.subr.bf16.mxu0 0
    %2720 = vmatpush2.bf16.msra.mxu0 0
    %2721 = vmatprep.subr.bf16.mxu0 0
    %2722 = vmatpush2.bf16.msra.mxu0 0
    %2723 = vmatprep.subr.bf16.mxu0 0
    %2724 = vmatpush2.bf16.msra.mxu0 0
    %2725 = vmatprep.subr.bf16.mxu0 0
    %2726 = vmatpush2.bf16.msra.mxu0 0
    %2727 = vmatprep.subr.bf16.mxu0 0
    %2728 = vmatpush2.bf16.msra.mxu0 0
    %2729 = vmatprep.subr.bf16.mxu0 0
    %2730 = vmatpush2.bf16.msra.mxu0 0
    %2731 = vmatprep.subr.bf16.mxu0 0
    %2732 = vmatpush2.bf16.msra.mxu0 0
    %2733 = vmatprep.subr.bf16.mxu0 0
    %2734 = vmatpush2.bf16.msra.mxu0 0
    %2735 = vmatprep.mubr.bf16.mxu0 0
    %2736 = vmatmul.mubr.bf16.gmra.mxu0 %v2701
    %v2737 = vpop.f32.mrf.mxu0
    %v2738 = vadd.f32 0.0, %v2737
    %v2739 = vpop.f32.mrf.mxu0
    %v2740 = vpop.f32.mrf.mxu0
    %v2741 = vadd.f32 0.0, %v2740
    %v2742 = vpop.f32.mrf.mxu0
    %2743 = vdwg.mxu0
    %v2745 = vsel %vm1715, %v2083, 0
    %2747 = vmatprep.subr.bf16.mxu0 0
    %2748 = vmatpush1.bf16.msra.mxu0 0
    %2749 = vmatprep.subr.bf16.mxu0 0
    %2750 = vmatpush1.bf16.msra.mxu0 0
    %2751 = vmatprep.subr.bf16.mxu0 0
    %2752 = vmatpush1.bf16.msra.mxu0 0
    %2753 = vmatprep.subr.bf16.mxu0 0
    %2754 = vmatpush1.bf16.msra.mxu0 0
    %2755 = vmatprep.subr.bf16.mxu0 0
    %2756 = vmatpush1.bf16.msra.mxu0 0
    %2757 = vmatprep.subr.bf16.mxu0 0
    %2758 = vmatpush1.bf16.msra.mxu0 0
    %2759 = vmatprep.subr.bf16.mxu0 0
    %2760 = vmatpush1.bf16.msra.mxu0 0
    %2761 = vmatprep.subr.bf16.mxu0 0
    %2762 = vmatpush1.bf16.msra.mxu0 %v961
    %2763 = vmatprep.subr.bf16.mxu0 0
    %2764 = vmatpush2.bf16.msra.mxu0 0
    %2765 = vmatprep.subr.bf16.mxu0 0
    %2766 = vmatpush2.bf16.msra.mxu0 0
    %2767 = vmatprep.subr.bf16.mxu0 0
    %2768 = vmatpush2.bf16.msra.mxu0 0
    %2769 = vmatprep.subr.bf16.mxu0 0
    %2770 = vmatpush2.bf16.msra.mxu0 0
    %2771 = vmatprep.subr.bf16.mxu0 0
    %2772 = vmatpush2.bf16.msra.mxu0 0
    %2773 = vmatprep.subr.bf16.mxu0 0
    %2774 = vmatpush2.bf16.msra.mxu0 0
    %2775 = vmatprep.subr.bf16.mxu0 0
    %2776 = vmatpush2.bf16.msra.mxu0 0
    %2777 = vmatprep.subr.bf16.mxu0 0
    %2778 = vmatpush2.bf16.msra.mxu0 0
    %2779 = vmatprep.mubr.bf16.mxu0 0
    %2780 = vmatmul.mubr.bf16.gmra.mxu0 %v2745
    %v2781 = vpop.f32.mrf.mxu0
    %v2782 = vadd.f32 0.0, %v2781
    %v2783 = vpop.f32.mrf.mxu0
    %v2784 = vpop.f32.mrf.mxu0
    %v2785 = vadd.f32 0.0, %v2784
    %v2786 = vpop.f32.mrf.mxu0
    %2787 = vdwg.mxu0
    %2796 = vrot.lane.b32.xlu0 %v2298, 32
    %v2797 = vpop.permute.xlu0 %2796
    %2798 = vrot.lane.b32.xlu0 %v2301, 32
    %v2799 = vpop.permute.xlu0 %2798
    %2800 = vrot.lane.b32.xlu0 %v2342, 32
    %v2801 = vpop.permute.xlu0 %2800
    %2802 = vrot.lane.b32.xlu0 %v2345, 32
    %v2803 = vpop.permute.xlu0 %2802
    %2804 = vrot.lane.b32.xlu0 %v2386, 32
    %v2805 = vpop.permute.xlu0 %2804
    %2806 = vrot.lane.b32.xlu0 %v2389, 32
    %v2807 = vpop.permute.xlu0 %2806
    %2808 = vrot.lane.b32.xlu0 %v2430, 32
    %v2809 = vpop.permute.xlu0 %2808
    %2810 = vrot.lane.b32.xlu0 %v2433, 32
    %v2811 = vpop.permute.xlu0 %2810
    %2828 = vrot.lane.b32.xlu0 %v2474, 64
    %v2829 = vpop.permute.xlu0 %2828
    %2830 = vrot.lane.b32.xlu0 %v2477, 64
    %v2831 = vpop.permute.xlu0 %2830
    %2832 = vrot.lane.b32.xlu0 %v2518, 64
    %v2833 = vpop.permute.xlu0 %2832
    %2834 = vrot.lane.b32.xlu0 %v2521, 64
    %v2835 = vpop.permute.xlu0 %2834
    %2836 = vrot.lane.b32.xlu0 %v2562, 64
    %v2837 = vpop.permute.xlu0 %2836
    %2838 = vrot.lane.b32.xlu0 %v2565, 64
    %v2839 = vpop.permute.xlu0 %2838
    %2840 = vrot.lane.b32.xlu0 %v2606, 64
    %v2841 = vpop.permute.xlu0 %2840
    %2842 = vrot.lane.b32.xlu0 %v2609, 64
    %v2843 = vpop.permute.xlu0 %2842
    %2860 = vrot.lane.b32.xlu0 %v2650, 96
    %v2861 = vpop.permute.xlu0 %2860
    %2862 = vrot.lane.b32.xlu0 %v2653, 96
    %v2863 = vpop.permute.xlu0 %2862
    %2864 = vrot.lane.b32.xlu0 %v2694, 96
    %v2865 = vpop.permute.xlu0 %2864
    %2866 = vrot.lane.b32.xlu0 %v2697, 96
    %v2867 = vpop.permute.xlu0 %2866
    %2868 = vrot.lane.b32.xlu0 %v2738, 96
    %v2869 = vpop.permute.xlu0 %2868
    %2870 = vrot.lane.b32.xlu0 %v2741, 96
    %v2871 = vpop.permute.xlu0 %2870
    %2872 = vrot.lane.b32.xlu0 %v2782, 96
    %v2873 = vpop.permute.xlu0 %2872
    %2874 = vrot.lane.b32.xlu0 %v2785, 96
    %v2875 = vpop.permute.xlu0 %2874
    %v2884 = vsel %vm962, %v2122, %v2797
    %v2885 = vsel %vm962, %v2125, %v2799
    %v2886 = vsel %vm962, %v2166, %v2801
    %v2887 = vsel %vm962, %v2169, %v2803
    %v2888 = vsel %vm962, %v2210, %v2805
    %v2889 = vsel %vm962, %v2213, %v2807
    %v2890 = vsel %vm962, %v2254, %v2809
    %v2891 = vsel %vm962, %v2257, %v2811
    %vm2892 = vcmask 523264
    %v2893 = vsel %vm2892, %v2884, %v2829
    %v2894 = vsel %vm2892, %v2885, %v2831
    %v2895 = vsel %vm2892, %v2886, %v2833
    %v2896 = vsel %vm2892, %v2887, %v2835
    %v2897 = vsel %vm2892, %v2888, %v2837
    %v2898 = vsel %vm2892, %v2889, %v2839
    %v2899 = vsel %vm2892, %v2890, %v2841
    %v2900 = vsel %vm2892, %v2891, %v2843
    %vm2901 = vcmask 785408
    %v2902 = vsel %vm2901, %v2893, %v2861
    %v2903 = vsel %vm2901, %v2894, %v2863
    %v2904 = vsel %vm2901, %v2895, %v2865
    %v2905 = vsel %vm2901, %v2896, %v2867
    %v2906 = vsel %vm2901, %v2897, %v2869
    %v2907 = vsel %vm2901, %v2898, %v2871
    %v2908 = vsel %vm2901, %v2899, %v2873
    %v2909 = vsel %vm2901, %v2900, %v2875
    %v2910 = vld [vmem:[#allocation11 + $0xc] sm:$0xf]
    %v2911 = vld [vmem:[#allocation11 + $0x24] sm:$0xf]
    %v2912 = vld [vmem:[#allocation11 + $0x3c] sm:$0xf]
    %v2913 = vld [vmem:[#allocation11 + $0x54] sm:$0xf]
    %v2914 = vld [vmem:[#allocation11 + $0x6c] sm:$0xf]
    %v2915 = vld [vmem:[#allocation11 + $0x84] sm:$0xf]
    %v2916 = vld [vmem:[#allocation11 + $0x9c] sm:$0xf]
    %v2917 = vld [vmem:[#allocation11 + $0xb4] sm:$0xf]
    %v2918 = vld [vmem:[#allocation11 + $0xcc] sm:$0xf]
    %v2919 = vld [vmem:[#allocation11 + $0xe4] sm:$0xf]
    %v2920 = vld [vmem:[#allocation11 + $0xfc] sm:$0xf]
    %v2921 = vld [vmem:[#allocation11 + $0x114] sm:$0xf]
    %v2922 = vld [vmem:[#allocation11 + $0x12c] sm:$0xf]
    %v2923 = vld [vmem:[#allocation11 + $0x144] sm:$0xf]
    %v2924 = vld [vmem:[#allocation11 + $0x15c] sm:$0xf]
    %v2925 = vld [vmem:[#allocation11 + $0x174] sm:$0xf]
    %v2926 = vpack.c.bf16 %v2903, %v2902
    %v2927 = vpack.c.bf16 %v2905, %v2904
    %v2928 = vpack.c.bf16 %v2907, %v2906
    %v2929 = vpack.c.bf16 %v2909, %v2908
    %v2946 = vunpack.c.l.b16 %v2910
    %v2947 = vunpack.c.l.b16 %v2911
    %v2948 = vunpack.c.l.b16 %v2912
    %v2949 = vunpack.c.l.b16 %v2913
    %v2950 = vunpack.c.l.b16 %v2914
    %v2951 = vunpack.c.l.b16 %v2915
    %v2952 = vunpack.c.l.b16 %v2916
    %v2953 = vunpack.c.l.b16 %v2917
    %v2954 = vunpack.c.l.b16 %v2918
    %v2955 = vunpack.c.l.b16 %v2919
    %v2956 = vunpack.c.l.b16 %v2920
    %v2957 = vunpack.c.l.b16 %v2921
    %v2958 = vunpack.c.l.b16 %v2922
    %v2959 = vunpack.c.l.b16 %v2923
    %v2960 = vunpack.c.l.b16 %v2924
    %v2961 = vunpack.c.l.b16 %v2925
    %v2962 = vpack.c.b16 %v2947, %v2946
    %v2963 = vpack.c.b16 %v2949, %v2948
    %v2964 = vpack.c.b16 %v2951, %v2950
    %v2965 = vpack.c.b16 %v2953, %v2952
    %v2966 = vpack.c.b16 %v2955, %v2954
    %v2967 = vpack.c.b16 %v2957, %v2956
    %v2968 = vpack.c.b16 %v2959, %v2958
    %v2969 = vpack.c.b16 %v2961, %v2960
    %2978 = vmatprep.subr.bf16.mxu0 0
    %2979 = vmatpush1.bf16.msra.mxu0 %v2969
    %2980 = vmatprep.subr.bf16.mxu0 0
    %2981 = vmatpush1.bf16.msra.mxu0 %v2968
    %2982 = vmatprep.subr.bf16.mxu0 0
    %2983 = vmatpush1.bf16.msra.mxu0 %v2967
    %2984 = vmatprep.subr.bf16.mxu0 0
    %2985 = vmatpush1.bf16.msra.mxu0 %v2966
    %2986 = vmatprep.subr.bf16.mxu0 0
    %2987 = vmatpush1.bf16.msra.mxu0 %v2965
    %2988 = vmatprep.subr.bf16.mxu0 0
    %2989 = vmatpush1.bf16.msra.mxu0 %v2964
    %2990 = vmatprep.subr.bf16.mxu0 0
    %2991 = vmatpush1.bf16.msra.mxu0 %v2963
    %2992 = vmatprep.subr.bf16.mxu0 0
    %2993 = vmatpush1.bf16.msra.mxu0 %v2962
    %2994 = vmatprep.subr.bf16.mxu0 0
    %2995 = vmatpush2.bf16.msra.mxu0 0
    %2996 = vmatprep.subr.bf16.mxu0 0
    %2997 = vmatpush2.bf16.msra.mxu0 0
    %2998 = vmatprep.subr.bf16.mxu0 0
    %2999 = vmatpush2.bf16.msra.mxu0 0
    %3000 = vmatprep.subr.bf16.mxu0 0
    %3001 = vmatpush2.bf16.msra.mxu0 0
    %3002 = vmatprep.subr.bf16.mxu0 0
    %3003 = vmatpush2.bf16.msra.mxu0 0
    %3004 = vmatprep.subr.bf16.mxu0 0
    %3005 = vmatpush2.bf16.msra.mxu0 0
    %3006 = vmatprep.subr.bf16.mxu0 0
    %3007 = vmatpush2.bf16.msra.mxu0 0
    %3008 = vmatprep.subr.bf16.mxu0 0
    %3009 = vmatpush2.bf16.msra.mxu0 0
    %3010 = vmatprep.mubr.bf16.mxu0 0
    %3011 = vmatmul.mubr.bf16.gmra.mxu0 %v2926
    %v3012 = vpop.f32.mrf.mxu0
    %v3013 = vadd.f32 0.0, %v3012
    %v3014 = vpop.f32.mrf.mxu0
    %v3015 = vpop.f32.mrf.mxu0
    %v3016 = vadd.f32 0.0, %v3015
    %v3017 = vpop.f32.mrf.mxu0
    %3018 = vmatprep.mubr.bf16.mxu0 0
    %3019 = vmatmul.mubr.bf16.gmra.mxu0 %v2927
    %v3020 = vpop.f32.mrf.mxu0
    %v3021 = vadd.f32 0.0, %v3020
    %v3022 = vpop.f32.mrf.mxu0
    %v3023 = vpop.f32.mrf.mxu0
    %v3024 = vadd.f32 0.0, %v3023
    %v3025 = vpop.f32.mrf.mxu0
    %3026 = vmatprep.mubr.bf16.mxu0 0
    %3027 = vmatmul.mubr.bf16.gmra.mxu0 %v2928
    %v3028 = vpop.f32.mrf.mxu0
    %v3029 = vadd.f32 0.0, %v3028
    %v3030 = vpop.f32.mrf.mxu0
    %v3031 = vpop.f32.mrf.mxu0
    %v3032 = vadd.f32 0.0, %v3031
    %v3033 = vpop.f32.mrf.mxu0
    %3034 = vmatprep.mubr.bf16.mxu0 0
    %3035 = vmatmul.mubr.bf16.gmra.mxu0 %v2929
    %v3036 = vpop.f32.mrf.mxu0
    %v3037 = vadd.f32 0.0, %v3036
    %v3038 = vpop.f32.mrf.mxu0
    %v3039 = vpop.f32.mrf.mxu0
    %v3040 = vadd.f32 0.0, %v3039
    %v3041 = vpop.f32.mrf.mxu0
    %3042 = vdwg.mxu0
    %v3043 = vadd.f32 %v167, %v3013
    %v3044 = vadd.f32 %v168, %v3016
    %v3045 = vadd.f32 %v169, %v3021
    %v3046 = vadd.f32 %v170, %v3024
    %v3047 = vadd.f32 %v227, %v3029
    %v3048 = vadd.f32 %v228, %v3032
    %v3049 = vadd.f32 %v229, %v3037
    %v3050 = vadd.f32 %v230, %v3040
    %v3051 = vlaneseq
    %v3052 = vshrl.u32 %v3051, 7
    %v3053 = vsub.s32 4, %v3052
    %v3054 = vrot.slane %v98, %v3053
    %v3055 = vadd.f32 %v3043, %v3054
    %v3056 = vadd.f32 %v3044, %v3054
    %v3057 = vadd.f32 %v3045, %v3054
    %v3058 = vadd.f32 %v3046, %v3054
    %v3059 = vadd.f32 %v3047, %v3054
    %v3060 = vadd.f32 %v3048, %v3054
    %v3061 = vadd.f32 %v3049, %v3054
    %v3062 = vadd.f32 %v3050, %v3054
    %3063 = vadd.xlane.f32.xlu0 %v3055
    %v3064 = vpop.xlane.xlu0 %3063
    %3065 = vadd.xlane.f32.xlu0 %v3056
    %v3066 = vpop.xlane.xlu0 %3065
    %3067 = vadd.xlane.f32.xlu0 %v3057
    %v3068 = vpop.xlane.xlu0 %3067
    %3069 = vadd.xlane.f32.xlu0 %v3058
    %v3070 = vpop.xlane.xlu0 %3069
    %3071 = vadd.xlane.f32.xlu0 %v3059
    %v3072 = vpop.xlane.xlu0 %3071
    %3073 = vadd.xlane.f32.xlu0 %v3060
    %v3074 = vpop.xlane.xlu0 %3073
    %3075 = vadd.xlane.f32.xlu0 %v3061
    %v3076 = vpop.xlane.xlu0 %3075
    %3077 = vadd.xlane.f32.xlu0 %v3062
    %v3078 = vpop.xlane.xlu0 %3077
    %v3079 = vmul.f32 %v3064, %v118
    %v3080 = vmul.f32 %v3066, %v118
    %v3081 = vmul.f32 %v3068, %v118
    %v3082 = vmul.f32 %v3070, %v118
    %v3083 = vmul.f32 %v3072, %v118
    %v3084 = vmul.f32 %v3074, %v118
    %v3085 = vmul.f32 %v3076, %v118
    %v3086 = vmul.f32 %v3078, %v118
    %v3087 = vsub.f32 %v3055, %v3079
    %v3088 = vsub.f32 %v3056, %v3080
    %v3089 = vsub.f32 %v3057, %v3081
    %v3090 = vsub.f32 %v3058, %v3082
    %v3091 = vsub.f32 %v3059, %v3083
    %v3092 = vsub.f32 %v3060, %v3084
    %v3093 = vsub.f32 %v3061, %v3085
    %v3094 = vsub.f32 %v3062, %v3086
    %v3095 = vmul.f32 %v3087, %v3087
    %v3096 = vmul.f32 %v3088, %v3088
    %v3097 = vmul.f32 %v3089, %v3089
    %v3098 = vmul.f32 %v3090, %v3090
    %v3099 = vmul.f32 %v3091, %v3091
    %v3100 = vmul.f32 %v3092, %v3092
    %v3101 = vmul.f32 %v3093, %v3093
    %v3102 = vmul.f32 %v3094, %v3094
    %3103 = vadd.xlane.f32.xlu0 %v3095
    %v3104 = vpop.xlane.xlu0 %3103
    %3105 = vadd.xlane.f32.xlu0 %v3096
    %v3106 = vpop.xlane.xlu0 %3105
    %3107 = vadd.xlane.f32.xlu0 %v3097
    %v3108 = vpop.xlane.xlu0 %3107
    %3109 = vadd.xlane.f32.xlu0 %v3098
    %v3110 = vpop.xlane.xlu0 %3109
    %3111 = vadd.xlane.f32.xlu0 %v3099
    %v3112 = vpop.xlane.xlu0 %3111
    %3113 = vadd.xlane.f32.xlu0 %v3100
    %v3114 = vpop.xlane.xlu0 %3113
    %3115 = vadd.xlane.f32.xlu0 %v3101
    %v3116 = vpop.xlane.xlu0 %3115
    %3117 = vadd.xlane.f32.xlu0 %v3102
    %v3118 = vpop.xlane.xlu0 %3117
    %v3119 = vmul.f32 %v3104, %v118
    %v3120 = vmul.f32 %v3106, %v118
    %v3121 = vmul.f32 %v3108, %v118
    %v3122 = vmul.f32 %v3110, %v118
    %v3123 = vmul.f32 %v3112, %v118
    %v3124 = vmul.f32 %v3114, %v118
    %v3125 = vmul.f32 %v3116, %v118
    %v3126 = vmul.f32 %v3118, %v118
    %v3127 = vadd.f32 %v3119, 1e-06
    %v3128 = vadd.f32 %v3120, 1e-06
    %v3129 = vadd.f32 %v3121, 1e-06
    %v3130 = vadd.f32 %v3122, 1e-06
    %v3131 = vadd.f32 %v3123, 1e-06
    %v3132 = vadd.f32 %v3124, 1e-06
    %v3133 = vadd.f32 %v3125, 1e-06
    %v3134 = vadd.f32 %v3126, 1e-06
    %v3135 = vrsqrt.pop %v3127
    %v3136 = vrsqrt.pop %v3128
    %v3137 = vrsqrt.pop %v3129
    %v3138 = vrsqrt.pop %v3130
    %v3139 = vrsqrt.pop %v3131
    %v3140 = vrsqrt.pop %v3132
    %v3141 = vrsqrt.pop %v3133
    %v3142 = vrsqrt.pop %v3134
    %v3143 = vmul.f32 %v3087, %v3135
    %v3144 = vmul.f32 %v3088, %v3136
    %v3145 = vmul.f32 %v3089, %v3137
    %v3146 = vmul.f32 %v3090, %v3138
    %v3147 = vmul.f32 %v3091, %v3139
    %v3148 = vmul.f32 %v3092, %v3140
    %v3149 = vmul.f32 %v3093, %v3141
    %v3150 = vmul.f32 %v3094, %v3142
    %v3151 = vlaneseq
    %v3152 = vshrl.u32 %v3151, 7
    %v3153 = vsub.s32 6, %v3152
    %v3154 = vrot.slane %v97, %v3153
    %v3155 = vmul.f32 %v3143, %v3154
    %v3156 = vmul.f32 %v3144, %v3154
    %v3157 = vmul.f32 %v3145, %v3154
    %v3158 = vmul.f32 %v3146, %v3154
    %v3159 = vmul.f32 %v3147, %v3154
    %v3160 = vmul.f32 %v3148, %v3154
    %v3161 = vmul.f32 %v3149, %v3154
    %v3162 = vmul.f32 %v3150, %v3154
    %v3163 = vlaneseq
    %v3164 = vshrl.u32 %v3163, 7
    %v3165 = vsub.s32 7, %v3164
    %v3166 = vrot.slane %v97, %v3165
    %v3167 = vadd.f32 %v3155, %v3166
    %v3168 = vadd.f32 %v3156, %v3166
    %v3169 = vadd.f32 %v3157, %v3166
    %v3170 = vadd.f32 %v3158, %v3166
    %v3171 = vadd.f32 %v3159, %v3166
    %v3172 = vadd.f32 %v3160, %v3166
    %v3173 = vadd.f32 %v3161, %v3166
    %v3174 = vadd.f32 %v3162, %v3166
    %s3175 = smul.u32 4, 16
    %s3176 = smul.u32 %s3175, 8
    %s3177 = sshll.u32 %s3176, 4
    %3178 = dma.done [#allocation4], %s3177
    %v3179 = vld [vmem:[#allocation2] sm:$0xff]
    %v3180 = vld [vmem:[#allocation2 + $0x8] sm:$0xff]
    %v3181 = vld [vmem:[#allocation2 + $0x20] sm:$0xff]
    %v3182 = vld [vmem:[#allocation2 + $0x28] sm:$0xff]
    %v3183 = vld [vmem:[#allocation2 + $0x40] sm:$0xff]
    %v3184 = vld [vmem:[#allocation2 + $0x48] sm:$0xff]
    %v3185 = vld [vmem:[#allocation2 + $0x60] sm:$0xff]
    %v3186 = vld [vmem:[#allocation2 + $0x68] sm:$0xff]
    %v3187 = vld [vmem:[#allocation2 + $0x80] sm:$0xff]
    %v3188 = vld [vmem:[#allocation2 + $0x88] sm:$0xff]
    %v3189 = vld [vmem:[#allocation2 + $0xa0] sm:$0xff]
    %v3190 = vld [vmem:[#allocation2 + $0xa8] sm:$0xff]
    %v3191 = vld [vmem:[#allocation2 + $0xc0] sm:$0xff]
    %v3192 = vld [vmem:[#allocation2 + $0xc8] sm:$0xff]
    %v3193 = vld [vmem:[#allocation2 + $0xe0] sm:$0xff]
    %v3194 = vld [vmem:[#allocation2 + $0xe8] sm:$0xff]
    %v3195 = vld [vmem:[#allocation2 + $0x100] sm:$0xff]
    %v3196 = vld [vmem:[#allocation2 + $0x108] sm:$0xff]
    %v3197 = vld [vmem:[#allocation2 + $0x120] sm:$0xff]
    %v3198 = vld [vmem:[#allocation2 + $0x128] sm:$0xff]
    %v3199 = vld [vmem:[#allocation2 + $0x140] sm:$0xff]
    %v3200 = vld [vmem:[#allocation2 + $0x148] sm:$0xff]
    %v3201 = vld [vmem:[#allocation2 + $0x160] sm:$0xff]
    %v3202 = vld [vmem:[#allocation2 + $0x168] sm:$0xff]
    %v3203 = vld [vmem:[#allocation2 + $0x180] sm:$0xff]
    %v3204 = vld [vmem:[#allocation2 + $0x188] sm:$0xff]
    %v3205 = vld [vmem:[#allocation2 + $0x1a0] sm:$0xff]
    %v3206 = vld [vmem:[#allocation2 + $0x1a8] sm:$0xff]
    %v3207 = vld [vmem:[#allocation2 + $0x1c0] sm:$0xff]
    %v3208 = vld [vmem:[#allocation2 + $0x1c8] sm:$0xff]
    %v3209 = vld [vmem:[#allocation2 + $0x1e0] sm:$0xff]
    %v3210 = vld [vmem:[#allocation2 + $0x1e8] sm:$0xff]
    %v3211 = vpack.c.bf16 %v3168, %v3167
    %v3212 = vpack.c.bf16 %v3170, %v3169
    %v3213 = vpack.c.bf16 %v3172, %v3171
    %v3214 = vpack.c.bf16 %v3174, %v3173
    %v3215 = vlaneseq
    %v3216 = vshrl.u32 %v3215, 7
    %v3217 = vsub.s32 0, %v3216
    %v3218 = vrot.slane %v100, %v3217
    %v3219 = vlaneseq
    %v3220 = vshrl.u32 %v3219, 7
    %v3221 = vsub.s32 4, %v3220
    %v3222 = vrot.slane %v100, %v3221
    %v3223 = vlaneseq
    %v3224 = vshrl.u32 %v3223, 7
    %v3225 = vsub.s32 0, %v3224
    %v3226 = vrot.slane %v101, %v3225
    %v3227 = vlaneseq
    %v3228 = vshrl.u32 %v3227, 7
    %v3229 = vsub.s32 4, %v3228
    %v3230 = vrot.slane %v101, %v3229
    %v3235 = vlaneseq
    %v3236 = vshrl.u32 %v3235, 7
    %v3237 = vsub.s32 0, %v3236
    %v3238 = vrot.slane %v3218, %v3237
    %v3239 = vlaneseq
    %v3240 = vshrl.u32 %v3239, 7
    %v3241 = vsub.s32 0, %v3240
    %v3242 = vrot.slane %v3222, %v3241
    %v3243 = vlaneseq
    %v3244 = vshrl.u32 %v3243, 7
    %v3245 = vsub.s32 0, %v3244
    %v3246 = vrot.slane %v3226, %v3245
    %v3247 = vlaneseq
    %v3248 = vshrl.u32 %v3247, 7
    %v3249 = vsub.s32 0, %v3248
    %v3250 = vrot.slane %v3230, %v3249
    %v3283 = vunpack.c.l.b16 %v3179
    %v3284 = vunpack.c.h.b16 %v3179
    %v3285 = vunpack.c.l.b16 %v3180
    %v3286 = vunpack.c.h.b16 %v3180
    %v3287 = vunpack.c.l.b16 %v3181
    %v3288 = vunpack.c.h.b16 %v3181
    %v3289 = vunpack.c.l.b16 %v3182
    %v3290 = vunpack.c.h.b16 %v3182
    %v3291 = vunpack.c.l.b16 %v3183
    %v3292 = vunpack.c.h.b16 %v3183
    %v3293 = vunpack.c.l.b16 %v3184
    %v3294 = vunpack.c.h.b16 %v3184
    %v3295 = vunpack.c.l.b16 %v3185
    %v3296 = vunpack.c.h.b16 %v3185
    %v3297 = vunpack.c.l.b16 %v3186
    %v3298 = vunpack.c.h.b16 %v3186
    %v3299 = vunpack.c.l.b16 %v3187
    %v3300 = vunpack.c.h.b16 %v3187
    %v3301 = vunpack.c.l.b16 %v3188
    %v3302 = vunpack.c.h.b16 %v3188
    %v3303 = vunpack.c.l.b16 %v3189
    %v3304 = vunpack.c.h.b16 %v3189
    %v3305 = vunpack.c.l.b16 %v3190
    %v3306 = vunpack.c.h.b16 %v3190
    %v3307 = vunpack.c.l.b16 %v3191
    %v3308 = vunpack.c.h.b16 %v3191
    %v3309 = vunpack.c.l.b16 %v3192
    %v3310 = vunpack.c.h.b16 %v3192
    %v3311 = vunpack.c.l.b16 %v3193
    %v3312 = vunpack.c.h.b16 %v3193
    %v3313 = vunpack.c.l.b16 %v3194
    %v3314 = vunpack.c.h.b16 %v3194
    %v3315 = vunpack.c.l.b16 %v3195
    %v3316 = vunpack.c.h.b16 %v3195
    %v3317 = vunpack.c.l.b16 %v3196
    %v3318 = vunpack.c.h.b16 %v3196
    %v3319 = vunpack.c.l.b16 %v3197
    %v3320 = vunpack.c.h.b16 %v3197
    %v3321 = vunpack.c.l.b16 %v3198
    %v3322 = vunpack.c.h.b16 %v3198
    %v3323 = vunpack.c.l.b16 %v3199
    %v3324 = vunpack.c.h.b16 %v3199
    %v3325 = vunpack.c.l.b16 %v3200
    %v3326 = vunpack.c.h.b16 %v3200
    %v3327 = vunpack.c.l.b16 %v3201
    %v3328 = vunpack.c.h.b16 %v3201
    %v3329 = vunpack.c.l.b16 %v3202
    %v3330 = vunpack.c.h.b16 %v3202
    %v3331 = vunpack.c.l.b16 %v3203
    %v3332 = vunpack.c.h.b16 %v3203
    %v3333 = vunpack.c.l.b16 %v3204
    %v3334 = vunpack.c.h.b16 %v3204
    %v3335 = vunpack.c.l.b16 %v3205
    %v3336 = vunpack.c.h.b16 %v3205
    %v3337 = vunpack.c.l.b16 %v3206
    %v3338 = vunpack.c.h.b16 %v3206
    %v3339 = vunpack.c.l.b16 %v3207
    %v3340 = vunpack.c.h.b16 %v3207
    %v3341 = vunpack.c.l.b16 %v3208
    %v3342 = vunpack.c.h.b16 %v3208
    %v3343 = vunpack.c.l.b16 %v3209
    %v3344 = vunpack.c.h.b16 %v3209
    %v3345 = vunpack.c.l.b16 %v3210
    %v3346 = vunpack.c.h.b16 %v3210
    %v3347 = vpack.c.b16 %v3287, %v3283
    %v3348 = vpack.c.b16 %v3288, %v3284
    %v3349 = vpack.c.b16 %v3289, %v3285
    %v3350 = vpack.c.b16 %v3290, %v3286
    %v3351 = vpack.c.b16 %v3295, %v3291
    %v3352 = vpack.c.b16 %v3296, %v3292
    %v3353 = vpack.c.b16 %v3297, %v3293
    %v3354 = vpack.c.b16 %v3298, %v3294
    %v3355 = vpack.c.b16 %v3303, %v3299
    %v3356 = vpack.c.b16 %v3304, %v3300
    %v3357 = vpack.c.b16 %v3305, %v3301
    %v3358 = vpack.c.b16 %v3306, %v3302
    %v3359 = vpack.c.b16 %v3311, %v3307
    %v3360 = vpack.c.b16 %v3312, %v3308
    %v3361 = vpack.c.b16 %v3313, %v3309
    %v3362 = vpack.c.b16 %v3314, %v3310
    %v3363 = vpack.c.b16 %v3319, %v3315
    %v3364 = vpack.c.b16 %v3320, %v3316
    %v3365 = vpack.c.b16 %v3321, %v3317
    %v3366 = vpack.c.b16 %v3322, %v3318
    %v3367 = vpack.c.b16 %v3327, %v3323
    %v3368 = vpack.c.b16 %v3328, %v3324
    %v3369 = vpack.c.b16 %v3329, %v3325
    %v3370 = vpack.c.b16 %v3330, %v3326
    %v3371 = vpack.c.b16 %v3335, %v3331
    %v3372 = vpack.c.b16 %v3336, %v3332
    %v3373 = vpack.c.b16 %v3337, %v3333
    %v3374 = vpack.c.b16 %v3338, %v3334
    %v3375 = vpack.c.b16 %v3343, %v3339
    %v3376 = vpack.c.b16 %v3344, %v3340
    %v3377 = vpack.c.b16 %v3345, %v3341
    %v3378 = vpack.c.b16 %v3346, %v3342
    %3411 = vmatprep.subr.bf16.mxu0 %v3376
    %3412 = vmatpush1.bf16.msra.mxu0 %v3375
    %3413 = vmatprep.subr.bf16.mxu0 %v3372
    %3414 = vmatpush1.bf16.msra.mxu0 %v3371
    %3415 = vmatprep.subr.bf16.mxu0 %v3368
    %3416 = vmatpush1.bf16.msra.mxu0 %v3367
    %3417 = vmatprep.subr.bf16.mxu0 %v3364
    %3418 = vmatpush1.bf16.msra.mxu0 %v3363
    %3419 = vmatprep.subr.bf16.mxu0 %v3360
    %3420 = vmatpush1.bf16.msra.mxu0 %v3359
    %3421 = vmatprep.subr.bf16.mxu0 %v3356
    %3422 = vmatpush1.bf16.msra.mxu0 %v3355
    %3423 = vmatprep.subr.bf16.mxu0 %v3352
    %3424 = vmatpush1.bf16.msra.mxu0 %v3351
    %3425 = vmatprep.subr.bf16.mxu0 %v3348
    %3426 = vmatpush1.bf16.msra.mxu0 %v3347
    %3427 = vmatprep.subr.bf16.mxu0 0
    %3428 = vmatpush2.bf16.msra.mxu0 0
    %3429 = vmatprep.subr.bf16.mxu0 0
    %3430 = vmatpush2.bf16.msra.mxu0 0
    %3431 = vmatprep.subr.bf16.mxu0 0
    %3432 = vmatpush2.bf16.msra.mxu0 0
    %3433 = vmatprep.subr.bf16.mxu0 0
    %3434 = vmatpush2.bf16.msra.mxu0 0
    %3435 = vmatprep.subr.bf16.mxu0 0
    %3436 = vmatpush2.bf16.msra.mxu0 0
    %3437 = vmatprep.subr.bf16.mxu0 0
    %3438 = vmatpush2.bf16.msra.mxu0 0
    %3439 = vmatprep.subr.bf16.mxu0 0
    %3440 = vmatpush2.bf16.msra.mxu0 0
    %3441 = vmatprep.subr.bf16.mxu0 0
    %3442 = vmatpush2.bf16.msra.mxu0 0
    %3443 = vmatprep.mubr.bf16.mxu0 0
    %3444 = vmatmul.mubr.bf16.gmra.mxu0 %v3211
    %v3445 = vpop.f32.mrf.mxu0
    %v3446 = vadd.f32 %v3238, %v3445
    %v3447 = vpop.f32.mrf.mxu0
    %v3448 = vadd.f32 %v3242, %v3447
    %v3449 = vpop.f32.mrf.mxu0
    %v3450 = vadd.f32 %v3238, %v3449
    %v3451 = vpop.f32.mrf.mxu0
    %v3452 = vadd.f32 %v3242, %v3451
    %3453 = vmatprep.mubr.bf16.mxu0 0
    %3454 = vmatmul.mubr.bf16.gmra.mxu0 %v3212
    %v3455 = vpop.f32.mrf.mxu0
    %v3456 = vadd.f32 %v3238, %v3455
    %v3457 = vpop.f32.mrf.mxu0
    %v3458 = vadd.f32 %v3242, %v3457
    %v3459 = vpop.f32.mrf.mxu0
    %v3460 = vadd.f32 %v3238, %v3459
    %v3461 = vpop.f32.mrf.mxu0
    %v3462 = vadd.f32 %v3242, %v3461
    %3463 = vmatprep.mubr.bf16.mxu0 0
    %3464 = vmatmul.mubr.bf16.gmra.mxu0 %v3213
    %v3465 = vpop.f32.mrf.mxu0
    %v3466 = vadd.f32 %v3238, %v3465
    %v3467 = vpop.f32.mrf.mxu0
    %v3468 = vadd.f32 %v3242, %v3467
    %v3469 = vpop.f32.mrf.mxu0
    %v3470 = vadd.f32 %v3238, %v3469
    %v3471 = vpop.f32.mrf.mxu0
    %v3472 = vadd.f32 %v3242, %v3471
    %3473 = vmatprep.mubr.bf16.mxu0 0
    %3474 = vmatmul.mubr.bf16.gmra.mxu0 %v3214
    %v3475 = vpop.f32.mrf.mxu0
    %v3476 = vadd.f32 %v3238, %v3475
    %v3477 = vpop.f32.mrf.mxu0
    %v3478 = vadd.f32 %v3242, %v3477
    %v3479 = vpop.f32.mrf.mxu0
    %v3480 = vadd.f32 %v3238, %v3479
    %v3481 = vpop.f32.mrf.mxu0
    %v3482 = vadd.f32 %v3242, %v3481
    %3483 = vdwg.mxu0
    %3484 = vmatprep.subr.bf16.mxu0 %v3378
    %3485 = vmatpush1.bf16.msra.mxu0 %v3377
    %3486 = vmatprep.subr.bf16.mxu0 %v3374
    %3487 = vmatpush1.bf16.msra.mxu0 %v3373
    %3488 = vmatprep.subr.bf16.mxu0 %v3370
    %3489 = vmatpush1.bf16.msra.mxu0 %v3369
    %3490 = vmatprep.subr.bf16.mxu0 %v3366
    %3491 = vmatpush1.bf16.msra.mxu0 %v3365
    %3492 = vmatprep.subr.bf16.mxu0 %v3362
    %3493 = vmatpush1.bf16.msra.mxu0 %v3361
    %3494 = vmatprep.subr.bf16.mxu0 %v3358
    %3495 = vmatpush1.bf16.msra.mxu0 %v3357
    %3496 = vmatprep.subr.bf16.mxu0 %v3354
    %3497 = vmatpush1.bf16.msra.mxu0 %v3353
    %3498 = vmatprep.subr.bf16.mxu0 %v3350
    %3499 = vmatpush1.bf16.msra.mxu0 %v3349
    %3500 = vmatprep.subr.bf16.mxu0 0
    %3501 = vmatpush2.bf16.msra.mxu0 0
    %3502 = vmatprep.subr.bf16.mxu0 0
    %3503 = vmatpush2.bf16.msra.mxu0 0
    %3504 = vmatprep.subr.bf16.mxu0 0
    %3505 = vmatpush2.bf16.msra.mxu0 0
    %3506 = vmatprep.subr.bf16.mxu0 0
    %3507 = vmatpush2.bf16.msra.mxu0 0
    %3508 = vmatprep.subr.bf16.mxu0 0
    %3509 = vmatpush2.bf16.msra.mxu0 0
    %3510 = vmatprep.subr.bf16.mxu0 0
    %3511 = vmatpush2.bf16.msra.mxu0 0
    %3512 = vmatprep.subr.bf16.mxu0 0
    %3513 = vmatpush2.bf16.msra.mxu0 0
    %3514 = vmatprep.subr.bf16.mxu0 0
    %3515 = vmatpush2.bf16.msra.mxu0 0
    %3516 = vmatprep.mubr.bf16.mxu0 0
    %3517 = vmatmul.mubr.bf16.gmra.mxu0 %v3211
    %v3518 = vpop.f32.mrf.mxu0
    %v3519 = vadd.f32 %v3246, %v3518
    %v3520 = vpop.f32.mrf.mxu0
    %v3521 = vadd.f32 %v3250, %v3520
    %v3522 = vpop.f32.mrf.mxu0
    %v3523 = vadd.f32 %v3246, %v3522
    %v3524 = vpop.f32.mrf.mxu0
    %v3525 = vadd.f32 %v3250, %v3524
    %3526 = vmatprep.mubr.bf16.mxu0 0
    %3527 = vmatmul.mubr.bf16.gmra.mxu0 %v3212
    %v3528 = vpop.f32.mrf.mxu0
    %v3529 = vadd.f32 %v3246, %v3528
    %v3530 = vpop.f32.mrf.mxu0
    %v3531 = vadd.f32 %v3250, %v3530
    %v3532 = vpop.f32.mrf.mxu0
    %v3533 = vadd.f32 %v3246, %v3532
    %v3534 = vpop.f32.mrf.mxu0
    %v3535 = vadd.f32 %v3250, %v3534
    %3536 = vmatprep.mubr.bf16.mxu0 0
    %3537 = vmatmul.mubr.bf16.gmra.mxu0 %v3213
    %v3538 = vpop.f32.mrf.mxu0
    %v3539 = vadd.f32 %v3246, %v3538
    %v3540 = vpop.f32.mrf.mxu0
    %v3541 = vadd.f32 %v3250, %v3540
    %v3542 = vpop.f32.mrf.mxu0
    %v3543 = vadd.f32 %v3246, %v3542
    %v3544 = vpop.f32.mrf.mxu0
    %v3545 = vadd.f32 %v3250, %v3544
    %3546 = vmatprep.mubr.bf16.mxu0 0
    %3547 = vmatmul.mubr.bf16.gmra.mxu0 %v3214
    %v3548 = vpop.f32.mrf.mxu0
    %v3549 = vadd.f32 %v3246, %v3548
    %v3550 = vpop.f32.mrf.mxu0
    %v3551 = vadd.f32 %v3250, %v3550
    %v3552 = vpop.f32.mrf.mxu0
    %v3553 = vadd.f32 %v3246, %v3552
    %v3554 = vpop.f32.mrf.mxu0
    %v3555 = vadd.f32 %v3250, %v3554
    %3556 = vdwg.mxu0
    %v3557 = vmul.f32 %v3446, 0.5
    %v3558 = vmul.f32 %v3448, 0.5
    %v3559 = vmul.f32 %v3519, 0.5
    %v3560 = vmul.f32 %v3521, 0.5
    %v3561 = vmul.f32 %v3450, 0.5
    %v3562 = vmul.f32 %v3452, 0.5
    %v3563 = vmul.f32 %v3523, 0.5
    %v3564 = vmul.f32 %v3525, 0.5
    %v3565 = vmul.f32 %v3456, 0.5
    %v3566 = vmul.f32 %v3458, 0.5
    %v3567 = vmul.f32 %v3529, 0.5
    %v3568 = vmul.f32 %v3531, 0.5
    %v3569 = vmul.f32 %v3460, 0.5
    %v3570 = vmul.f32 %v3462, 0.5
    %v3571 = vmul.f32 %v3533, 0.5
    %v3572 = vmul.f32 %v3535, 0.5
    %v3573 = vmul.f32 %v3466, 0.5
    %v3574 = vmul.f32 %v3468, 0.5
    %v3575 = vmul.f32 %v3539, 0.5
    %v3576 = vmul.f32 %v3541, 0.5
    %v3577 = vmul.f32 %v3470, 0.5
    %v3578 = vmul.f32 %v3472, 0.5
    %v3579 = vmul.f32 %v3543, 0.5
    %v3580 = vmul.f32 %v3545, 0.5
    %v3581 = vmul.f32 %v3476, 0.5
    %v3582 = vmul.f32 %v3478, 0.5
    %v3583 = vmul.f32 %v3549, 0.5
    %v3584 = vmul.f32 %v3551, 0.5
    %v3585 = vmul.f32 %v3480, 0.5
    %v3586 = vmul.f32 %v3482, 0.5
    %v3587 = vmul.f32 %v3553, 0.5
    %v3588 = vmul.f32 %v3555, 0.5
    %v3589 = vmul.f32 %v3446, 0.044715
    %v3590 = vmul.f32 %v3448, 0.044715
    %v3591 = vmul.f32 %v3519, 0.044715
    %v3592 = vmul.f32 %v3521, 0.044715
    %v3593 = vmul.f32 %v3450, 0.044715
    %v3594 = vmul.f32 %v3452, 0.044715
    %v3595 = vmul.f32 %v3523, 0.044715
    %v3596 = vmul.f32 %v3525, 0.044715
    %v3597 = vmul.f32 %v3456, 0.044715
    %v3598 = vmul.f32 %v3458, 0.044715
    %v3599 = vmul.f32 %v3529, 0.044715
    %v3600 = vmul.f32 %v3531, 0.044715
    %v3601 = vmul.f32 %v3460, 0.044715
    %v3602 = vmul.f32 %v3462, 0.044715
    %v3603 = vmul.f32 %v3533, 0.044715
    %v3604 = vmul.f32 %v3535, 0.044715
    %v3605 = vmul.f32 %v3466, 0.044715
    %v3606 = vmul.f32 %v3468, 0.044715
    %v3607 = vmul.f32 %v3539, 0.044715
    %v3608 = vmul.f32 %v3541, 0.044715
    %v3609 = vmul.f32 %v3470, 0.044715
    %v3610 = vmul.f32 %v3472, 0.044715
    %v3611 = vmul.f32 %v3543, 0.044715
    %v3612 = vmul.f32 %v3545, 0.044715
    %v3613 = vmul.f32 %v3476, 0.044715
    %v3614 = vmul.f32 %v3478, 0.044715
    %v3615 = vmul.f32 %v3549, 0.044715
    %v3616 = vmul.f32 %v3551, 0.044715
    %v3617 = vmul.f32 %v3480, 0.044715
    %v3618 = vmul.f32 %v3482, 0.044715
    %v3619 = vmul.f32 %v3553, 0.044715
    %v3620 = vmul.f32 %v3555, 0.044715
    %v3621 = vmul.f32 %v3589, %v3446
    %v3622 = vmul.f32 %v3590, %v3448
    %v3623 = vmul.f32 %v3591, %v3519
    %v3624 = vmul.f32 %v3592, %v3521
    %v3625 = vmul.f32 %v3593, %v3450
    %v3626 = vmul.f32 %v3594, %v3452
    %v3627 = vmul.f32 %v3595, %v3523
    %v3628 = vmul.f32 %v3596, %v3525
    %v3629 = vmul.f32 %v3597, %v3456
    %v3630 = vmul.f32 %v3598, %v3458
    %v3631 = vmul.f32 %v3599, %v3529
    %v3632 = vmul.f32 %v3600, %v3531
    %v3633 = vmul.f32 %v3601, %v3460
    %v3634 = vmul.f32 %v3602, %v3462
    %v3635 = vmul.f32 %v3603, %v3533
    %v3636 = vmul.f32 %v3604, %v3535
    %v3637 = vmul.f32 %v3605, %v3466
    %v3638 = vmul.f32 %v3606, %v3468
    %v3639 = vmul.f32 %v3607, %v3539
    %v3640 = vmul.f32 %v3608, %v3541
    %v3641 = vmul.f32 %v3609, %v3470
    %v3642 = vmul.f32 %v3610, %v3472
    %v3643 = vmul.f32 %v3611, %v3543
    %v3644 = vmul.f32 %v3612, %v3545
    %v3645 = vmul.f32 %v3613, %v3476
    %v3646 = vmul.f32 %v3614, %v3478
    %v3647 = vmul.f32 %v3615, %v3549
    %v3648 = vmul.f32 %v3616, %v3551
    %v3649 = vmul.f32 %v3617, %v3480
    %v3650 = vmul.f32 %v3618, %v3482
    %v3651 = vmul.f32 %v3619, %v3553
    %v3652 = vmul.f32 %v3620, %v3555
    %v3653 = vmul.f32 %v3621, %v3446
    %v3654 = vmul.f32 %v3622, %v3448
    %v3655 = vmul.f32 %v3623, %v3519
    %v3656 = vmul.f32 %v3624, %v3521
    %v3657 = vmul.f32 %v3625, %v3450
    %v3658 = vmul.f32 %v3626, %v3452
    %v3659 = vmul.f32 %v3627, %v3523
    %v3660 = vmul.f32 %v3628, %v3525
    %v3661 = vmul.f32 %v3629, %v3456
    %v3662 = vmul.f32 %v3630, %v3458
    %v3663 = vmul.f32 %v3631, %v3529
    %v3664 = vmul.f32 %v3632, %v3531
    %v3665 = vmul.f32 %v3633, %v3460
    %v3666 = vmul.f32 %v3634, %v3462
    %v3667 = vmul.f32 %v3635, %v3533
    %v3668 = vmul.f32 %v3636, %v3535
    %v3669 = vmul.f32 %v3637, %v3466
    %v3670 = vmul.f32 %v3638, %v3468
    %v3671 = vmul.f32 %v3639, %v3539
    %v3672 = vmul.f32 %v3640, %v3541
    %v3673 = vmul.f32 %v3641, %v3470
    %v3674 = vmul.f32 %v3642, %v3472
    %v3675 = vmul.f32 %v3643, %v3543
    %v3676 = vmul.f32 %v3644, %v3545
    %v3677 = vmul.f32 %v3645, %v3476
    %v3678 = vmul.f32 %v3646, %v3478
    %v3679 = vmul.f32 %v3647, %v3549
    %v3680 = vmul.f32 %v3648, %v3551
    %v3681 = vmul.f32 %v3649, %v3480
    %v3682 = vmul.f32 %v3650, %v3482
    %v3683 = vmul.f32 %v3651, %v3553
    %v3684 = vmul.f32 %v3652, %v3555
    %v3685 = vadd.f32 %v3446, %v3653
    %v3686 = vadd.f32 %v3448, %v3654
    %v3687 = vadd.f32 %v3519, %v3655
    %v3688 = vadd.f32 %v3521, %v3656
    %v3689 = vadd.f32 %v3450, %v3657
    %v3690 = vadd.f32 %v3452, %v3658
    %v3691 = vadd.f32 %v3523, %v3659
    %v3692 = vadd.f32 %v3525, %v3660
    %v3693 = vadd.f32 %v3456, %v3661
    %v3694 = vadd.f32 %v3458, %v3662
    %v3695 = vadd.f32 %v3529, %v3663
    %v3696 = vadd.f32 %v3531, %v3664
    %v3697 = vadd.f32 %v3460, %v3665
    %v3698 = vadd.f32 %v3462, %v3666
    %v3699 = vadd.f32 %v3533, %v3667
    %v3700 = vadd.f32 %v3535, %v3668
    %v3701 = vadd.f32 %v3466, %v3669
    %v3702 = vadd.f32 %v3468, %v3670
    %v3703 = vadd.f32 %v3539, %v3671
    %v3704 = vadd.f32 %v3541, %v3672
    %v3705 = vadd.f32 %v3470, %v3673
    %v3706 = vadd.f32 %v3472, %v3674
    %v3707 = vadd.f32 %v3543, %v3675
    %v3708 = vadd.f32 %v3545, %v3676
    %v3709 = vadd.f32 %v3476, %v3677
    %v3710 = vadd.f32 %v3478, %v3678
    %v3711 = vadd.f32 %v3549, %v3679
    %v3712 = vadd.f32 %v3551, %v3680
    %v3713 = vadd.f32 %v3480, %v3681
    %v3714 = vadd.f32 %v3482, %v3682
    %v3715 = vadd.f32 %v3553, %v3683
    %v3716 = vadd.f32 %v3555, %v3684
    %v3717 = vmul.f32 %v3685, 0.7978846
    %v3718 = vmul.f32 %v3686, 0.7978846
    %v3719 = vmul.f32 %v3687, 0.7978846
    %v3720 = vmul.f32 %v3688, 0.7978846
    %v3721 = vmul.f32 %v3689, 0.7978846
    %v3722 = vmul.f32 %v3690, 0.7978846
    %v3723 = vmul.f32 %v3691, 0.7978846
    %v3724 = vmul.f32 %v3692, 0.7978846
    %v3725 = vmul.f32 %v3693, 0.7978846
    %v3726 = vmul.f32 %v3694, 0.7978846
    %v3727 = vmul.f32 %v3695, 0.7978846
    %v3728 = vmul.f32 %v3696, 0.7978846
    %v3729 = vmul.f32 %v3697, 0.7978846
    %v3730 = vmul.f32 %v3698, 0.7978846
    %v3731 = vmul.f32 %v3699, 0.7978846
    %v3732 = vmul.f32 %v3700, 0.7978846
    %v3733 = vmul.f32 %v3701, 0.7978846
    %v3734 = vmul.f32 %v3702, 0.7978846
    %v3735 = vmul.f32 %v3703, 0.7978846
    %v3736 = vmul.f32 %v3704, 0.7978846
    %v3737 = vmul.f32 %v3705, 0.7978846
    %v3738 = vmul.f32 %v3706, 0.7978846
    %v3739 = vmul.f32 %v3707, 0.7978846
    %v3740 = vmul.f32 %v3708, 0.7978846
    %v3741 = vmul.f32 %v3709, 0.7978846
    %v3742 = vmul.f32 %v3710, 0.7978846
    %v3743 = vmul.f32 %v3711, 0.7978846
    %v3744 = vmul.f32 %v3712, 0.7978846
    %v3745 = vmul.f32 %v3713, 0.7978846
    %v3746 = vmul.f32 %v3714, 0.7978846
    %v3747 = vmul.f32 %v3715, 0.7978846
    %v3748 = vmul.f32 %v3716, 0.7978846
    %v3749 = vtanh.pop %v3717
    %v3750 = vtanh.pop %v3718
    %v3751 = vtanh.pop %v3719
    %v3752 = vtanh.pop %v3720
    %v3753 = vtanh.pop %v3721
    %v3754 = vtanh.pop %v3722
    %v3755 = vtanh.pop %v3723
    %v3756 = vtanh.pop %v3724
    %v3757 = vtanh.pop %v3725
    %v3758 = vtanh.pop %v3726
    %v3759 = vtanh.pop %v3727
    %v3760 = vtanh.pop %v3728
    %v3761 = vtanh.pop %v3729
    %v3762 = vtanh.pop %v3730
    %v3763 = vtanh.pop %v3731
    %v3764 = vtanh.pop %v3732
    %v3765 = vtanh.pop %v3733
    %v3766 = vtanh.pop %v3734
    %v3767 = vtanh.pop %v3735
    %v3768 = vtanh.pop %v3736
    %v3769 = vtanh.pop %v3737
    %v3770 = vtanh.pop %v3738
    %v3771 = vtanh.pop %v3739
    %v3772 = vtanh.pop %v3740
    %v3773 = vtanh.pop %v3741
    %v3774 = vtanh.pop %v3742
    %v3775 = vtanh.pop %v3743
    %v3776 = vtanh.pop %v3744
    %v3777 = vtanh.pop %v3745
    %v3778 = vtanh.pop %v3746
    %v3779 = vtanh.pop %v3747
    %v3780 = vtanh.pop %v3748
    %v3781 = vadd.f32 %v3749, 1.0
    %v3782 = vadd.f32 %v3750, 1.0
    %v3783 = vadd.f32 %v3751, 1.0
    %v3784 = vadd.f32 %v3752, 1.0
    %v3785 = vadd.f32 %v3753, 1.0
    %v3786 = vadd.f32 %v3754, 1.0
    %v3787 = vadd.f32 %v3755, 1.0
    %v3788 = vadd.f32 %v3756, 1.0
    %v3789 = vadd.f32 %v3757, 1.0
    %v3790 = vadd.f32 %v3758, 1.0
    %v3791 = vadd.f32 %v3759, 1.0
    %v3792 = vadd.f32 %v3760, 1.0
    %v3793 = vadd.f32 %v3761, 1.0
    %v3794 = vadd.f32 %v3762, 1.0
    %v3795 = vadd.f32 %v3763, 1.0
    %v3796 = vadd.f32 %v3764, 1.0
    %v3797 = vadd.f32 %v3765, 1.0
    %v3798 = vadd.f32 %v3766, 1.0
    %v3799 = vadd.f32 %v3767, 1.0
    %v3800 = vadd.f32 %v3768, 1.0
    %v3801 = vadd.f32 %v3769, 1.0
    %v3802 = vadd.f32 %v3770, 1.0
    %v3803 = vadd.f32 %v3771, 1.0
    %v3804 = vadd.f32 %v3772, 1.0
    %v3805 = vadd.f32 %v3773, 1.0
    %v3806 = vadd.f32 %v3774, 1.0
    %v3807 = vadd.f32 %v3775, 1.0
    %v3808 = vadd.f32 %v3776, 1.0
    %v3809 = vadd.f32 %v3777, 1.0
    %v3810 = vadd.f32 %v3778, 1.0
    %v3811 = vadd.f32 %v3779, 1.0
    %v3812 = vadd.f32 %v3780, 1.0
    %v3813 = vmul.f32 %v3557, %v3781
    %v3814 = vmul.f32 %v3558, %v3782
    %v3815 = vmul.f32 %v3559, %v3783
    %v3816 = vmul.f32 %v3560, %v3784
    %v3817 = vmul.f32 %v3561, %v3785
    %v3818 = vmul.f32 %v3562, %v3786
    %v3819 = vmul.f32 %v3563, %v3787
    %v3820 = vmul.f32 %v3564, %v3788
    %v3821 = vmul.f32 %v3565, %v3789
    %v3822 = vmul.f32 %v3566, %v3790
    %v3823 = vmul.f32 %v3567, %v3791
    %v3824 = vmul.f32 %v3568, %v3792
    %v3825 = vmul.f32 %v3569, %v3793
    %v3826 = vmul.f32 %v3570, %v3794
    %v3827 = vmul.f32 %v3571, %v3795
    %v3828 = vmul.f32 %v3572, %v3796
    %v3829 = vmul.f32 %v3573, %v3797
    %v3830 = vmul.f32 %v3574, %v3798
    %v3831 = vmul.f32 %v3575, %v3799
    %v3832 = vmul.f32 %v3576, %v3800
    %v3833 = vmul.f32 %v3577, %v3801
    %v3834 = vmul.f32 %v3578, %v3802
    %v3835 = vmul.f32 %v3579, %v3803
    %v3836 = vmul.f32 %v3580, %v3804
    %v3837 = vmul.f32 %v3581, %v3805
    %v3838 = vmul.f32 %v3582, %v3806
    %v3839 = vmul.f32 %v3583, %v3807
    %v3840 = vmul.f32 %v3584, %v3808
    %v3841 = vmul.f32 %v3585, %v3809
    %v3842 = vmul.f32 %v3586, %v3810
    %v3843 = vmul.f32 %v3587, %v3811
    %v3844 = vmul.f32 %v3588, %v3812
    %s3845 = smul.u32 4, 128
    %s3846 = smul.u32 %s3845, 1
    %s3847 = sshll.u32 %s3846, 4
    %3848 = dma.done %s85, %s3847
    %v3849 = vld [vmem:[#allocation3] sm:$0xf]
    %v3850 = vld [vmem:[#allocation3 + $0x4] sm:$0xf]
    %v3851 = vld [vmem:[#allocation3 + $0x8] sm:$0xf]
    %v3852 = vld [vmem:[#allocation3 + $0xc] sm:$0xf]
    %v3853 = vld [vmem:[#allocation3 + $0x10] sm:$0xf]
    %v3854 = vld [vmem:[#allocation3 + $0x14] sm:$0xf]
    %v3855 = vld [vmem:[#allocation3 + $0x18] sm:$0xf]
    %v3856 = vld [vmem:[#allocation3 + $0x1c] sm:$0xf]
    %v3857 = vld [vmem:[#allocation3 + $0x20] sm:$0xf]
    %v3858 = vld [vmem:[#allocation3 + $0x24] sm:$0xf]
    %v3859 = vld [vmem:[#allocation3 + $0x28] sm:$0xf]
    %v3860 = vld [vmem:[#allocation3 + $0x2c] sm:$0xf]
    %v3861 = vld [vmem:[#allocation3 + $0x30] sm:$0xf]
    %v3862 = vld [vmem:[#allocation3 + $0x34] sm:$0xf]
    %v3863 = vld [vmem:[#allocation3 + $0x38] sm:$0xf]
    %v3864 = vld [vmem:[#allocation3 + $0x3c] sm:$0xf]
    %v3865 = vld [vmem:[#allocation3 + $0x40] sm:$0xf]
    %v3866 = vld [vmem:[#allocation3 + $0x44] sm:$0xf]
    %v3867 = vld [vmem:[#allocation3 + $0x48] sm:$0xf]
    %v3868 = vld [vmem:[#allocation3 + $0x4c] sm:$0xf]
    %v3869 = vld [vmem:[#allocation3 + $0x50] sm:$0xf]
    %v3870 = vld [vmem:[#allocation3 + $0x54] sm:$0xf]
    %v3871 = vld [vmem:[#allocation3 + $0x58] sm:$0xf]
    %v3872 = vld [vmem:[#allocation3 + $0x5c] sm:$0xf]
    %v3873 = vld [vmem:[#allocation3 + $0x60] sm:$0xf]
    %v3874 = vld [vmem:[#allocation3 + $0x64] sm:$0xf]
    %v3875 = vld [vmem:[#allocation3 + $0x68] sm:$0xf]
    %v3876 = vld [vmem:[#allocation3 + $0x6c] sm:$0xf]
    %v3877 = vld [vmem:[#allocation3 + $0x70] sm:$0xf]
    %v3878 = vld [vmem:[#allocation3 + $0x74] sm:$0xf]
    %v3879 = vld [vmem:[#allocation3 + $0x78] sm:$0xf]
    %v3880 = vld [vmem:[#allocation3 + $0x7c] sm:$0xf]
    %v3881 = vld [vmem:[#allocation3 + $0x80] sm:$0xf]
    %v3882 = vld [vmem:[#allocation3 + $0x84] sm:$0xf]
    %v3883 = vld [vmem:[#allocation3 + $0x88] sm:$0xf]
    %v3884 = vld [vmem:[#allocation3 + $0x8c] sm:$0xf]
    %v3885 = vld [vmem:[#allocation3 + $0x90] sm:$0xf]
    %v3886 = vld [vmem:[#allocation3 + $0x94] sm:$0xf]
    %v3887 = vld [vmem:[#allocation3 + $0x98] sm:$0xf]
    %v3888 = vld [vmem:[#allocation3 + $0x9c] sm:$0xf]
    %v3889 = vld [vmem:[#allocation3 + $0xa0] sm:$0xf]
    %v3890 = vld [vmem:[#allocation3 + $0xa4] sm:$0xf]
    %v3891 = vld [vmem:[#allocation3 + $0xa8] sm:$0xf]
    %v3892 = vld [vmem:[#allocation3 + $0xac] sm:$0xf]
    %v3893 = vld [vmem:[#allocation3 + $0xb0] sm:$0xf]
    %v3894 = vld [vmem:[#allocation3 + $0xb4] sm:$0xf]
    %v3895 = vld [vmem:[#allocation3 + $0xb8] sm:$0xf]
    %v3896 = vld [vmem:[#allocation3 + $0xbc] sm:$0xf]
    %v3897 = vld [vmem:[#allocation3 + $0xc0] sm:$0xf]
    %v3898 = vld [vmem:[#allocation3 + $0xc4] sm:$0xf]
    %v3899 = vld [vmem:[#allocation3 + $0xc8] sm:$0xf]
    %v3900 = vld [vmem:[#allocation3 + $0xcc] sm:$0xf]
    %v3901 = vld [vmem:[#allocation3 + $0xd0] sm:$0xf]
    %v3902 = vld [vmem:[#allocation3 + $0xd4] sm:$0xf]
    %v3903 = vld [vmem:[#allocation3 + $0xd8] sm:$0xf]
    %v3904 = vld [vmem:[#allocation3 + $0xdc] sm:$0xf]
    %v3905 = vld [vmem:[#allocation3 + $0xe0] sm:$0xf]
    %v3906 = vld [vmem:[#allocation3 + $0xe4] sm:$0xf]
    %v3907 = vld [vmem:[#allocation3 + $0xe8] sm:$0xf]
    %v3908 = vld [vmem:[#allocation3 + $0xec] sm:$0xf]
    %v3909 = vld [vmem:[#allocation3 + $0xf0] sm:$0xf]
    %v3910 = vld [vmem:[#allocation3 + $0xf4] sm:$0xf]
    %v3911 = vld [vmem:[#allocation3 + $0xf8] sm:$0xf]
    %v3912 = vld [vmem:[#allocation3 + $0xfc] sm:$0xf]
    %v3913 = vpack.c.bf16 %v3817, %v3813
    %v3914 = vpack.c.bf16 %v3818, %v3814
    %v3915 = vpack.c.bf16 %v3819, %v3815
    %v3916 = vpack.c.bf16 %v3820, %v3816
    %v3917 = vpack.c.bf16 %v3825, %v3821
    %v3918 = vpack.c.bf16 %v3826, %v3822
    %v3919 = vpack.c.bf16 %v3827, %v3823
    %v3920 = vpack.c.bf16 %v3828, %v3824
    %v3921 = vpack.c.bf16 %v3833, %v3829
    %v3922 = vpack.c.bf16 %v3834, %v3830
    %v3923 = vpack.c.bf16 %v3835, %v3831
    %v3924 = vpack.c.bf16 %v3836, %v3832
    %v3925 = vpack.c.bf16 %v3841, %v3837
    %v3926 = vpack.c.bf16 %v3842, %v3838
    %v3927 = vpack.c.bf16 %v3843, %v3839
    %v3928 = vpack.c.bf16 %v3844, %v3840
    %v3929 = vlaneseq
    %v3930 = vshrl.u32 %v3929, 7
    %v3931 = vsub.s32 5, %v3930
    %v3932 = vrot.slane %v98, %v3931
    %v3997 = vunpack.c.l.b16 %v3849
    %v3998 = vunpack.c.l.b16 %v3850
    %v3999 = vunpack.c.l.b16 %v3851
    %v4000 = vunpack.c.l.b16 %v3852
    %v4001 = vunpack.c.l.b16 %v3853
    %v4002 = vunpack.c.l.b16 %v3854
    %v4003 = vunpack.c.l.b16 %v3855
    %v4004 = vunpack.c.l.b16 %v3856
    %v4005 = vunpack.c.l.b16 %v3857
    %v4006 = vunpack.c.l.b16 %v3858
    %v4007 = vunpack.c.l.b16 %v3859
    %v4008 = vunpack.c.l.b16 %v3860
    %v4009 = vunpack.c.l.b16 %v3861
    %v4010 = vunpack.c.l.b16 %v3862
    %v4011 = vunpack.c.l.b16 %v3863
    %v4012 = vunpack.c.l.b16 %v3864
    %v4013 = vunpack.c.l.b16 %v3865
    %v4014 = vunpack.c.l.b16 %v3866
    %v4015 = vunpack.c.l.b16 %v3867
    %v4016 = vunpack.c.l.b16 %v3868
    %v4017 = vunpack.c.l.b16 %v3869
    %v4018 = vunpack.c.l.b16 %v3870
    %v4019 = vunpack.c.l.b16 %v3871
    %v4020 = vunpack.c.l.b16 %v3872
    %v4021 = vunpack.c.l.b16 %v3873
    %v4022 = vunpack.c.l.b16 %v3874
    %v4023 = vunpack.c.l.b16 %v3875
    %v4024 = vunpack.c.l.b16 %v3876
    %v4025 = vunpack.c.l.b16 %v3877
    %v4026 = vunpack.c.l.b16 %v3878
    %v4027 = vunpack.c.l.b16 %v3879
    %v4028 = vunpack.c.l.b16 %v3880
    %v4029 = vunpack.c.l.b16 %v3881
    %v4030 = vunpack.c.l.b16 %v3882
    %v4031 = vunpack.c.l.b16 %v3883
    %v4032 = vunpack.c.l.b16 %v3884
    %v4033 = vunpack.c.l.b16 %v3885
    %v4034 = vunpack.c.l.b16 %v3886
    %v4035 = vunpack.c.l.b16 %v3887
    %v4036 = vunpack.c.l.b16 %v3888
    %v4037 = vunpack.c.l.b16 %v3889
    %v4038 = vunpack.c.l.b16 %v3890
    %v4039 = vunpack.c.l.b16 %v3891
    %v4040 = vunpack.c.l.b16 %v3892
    %v4041 = vunpack.c.l.b16 %v3893
    %v4042 = vunpack.c.l.b16 %v3894
    %v4043 = vunpack.c.l.b16 %v3895
    %v4044 = vunpack.c.l.b16 %v3896
    %v4045 = vunpack.c.l.b16 %v3897
    %v4046 = vunpack.c.l.b16 %v3898
    %v4047 = vunpack.c.l.b16 %v3899
    %v4048 = vunpack.c.l.b16 %v3900
    %v4049 = vunpack.c.l.b16 %v3901
    %v4050 = vunpack.c.l.b16 %v3902
    %v4051 = vunpack.c.l.b16 %v3903
    %v4052 = vunpack.c.l.b16 %v3904
    %v4053 = vunpack.c.l.b16 %v3905
    %v4054 = vunpack.c.l.b16 %v3906
    %v4055 = vunpack.c.l.b16 %v3907
    %v4056 = vunpack.c.l.b16 %v3908
    %v4057 = vunpack.c.l.b16 %v3909
    %v4058 = vunpack.c.l.b16 %v3910
    %v4059 = vunpack.c.l.b16 %v3911
    %v4060 = vunpack.c.l.b16 %v3912
    %v4061 = vpack.c.b16 %v3998, %v3997
    %v4062 = vpack.c.b16 %v4000, %v3999
    %v4063 = vpack.c.b16 %v4002, %v4001
    %v4064 = vpack.c.b16 %v4004, %v4003
    %v4065 = vpack.c.b16 %v4006, %v4005
    %v4066 = vpack.c.b16 %v4008, %v4007
    %v4067 = vpack.c.b16 %v4010, %v4009
    %v4068 = vpack.c.b16 %v4012, %v4011
    %v4069 = vpack.c.b16 %v4014, %v4013
    %v4070 = vpack.c.b16 %v4016, %v4015
    %v4071 = vpack.c.b16 %v4018, %v4017
    %v4072 = vpack.c.b16 %v4020, %v4019
    %v4073 = vpack.c.b16 %v4022, %v4021
    %v4074 = vpack.c.b16 %v4024, %v4023
    %v4075 = vpack.c.b16 %v4026, %v4025
    %v4076 = vpack.c.b16 %v4028, %v4027
    %v4077 = vpack.c.b16 %v4030, %v4029
    %v4078 = vpack.c.b16 %v4032, %v4031
    %v4079 = vpack.c.b16 %v4034, %v4033
    %v4080 = vpack.c.b16 %v4036, %v4035
    %v4081 = vpack.c.b16 %v4038, %v4037
    %v4082 = vpack.c.b16 %v4040, %v4039
    %v4083 = vpack.c.b16 %v4042, %v4041
    %v4084 = vpack.c.b16 %v4044, %v4043
    %v4085 = vpack.c.b16 %v4046, %v4045
    %v4086 = vpack.c.b16 %v4048, %v4047
    %v4087 = vpack.c.b16 %v4050, %v4049
    %v4088 = vpack.c.b16 %v4052, %v4051
    %v4089 = vpack.c.b16 %v4054, %v4053
    %v4090 = vpack.c.b16 %v4056, %v4055
    %v4091 = vpack.c.b16 %v4058, %v4057
    %v4092 = vpack.c.b16 %v4060, %v4059
    %4125 = vmatprep.subr.bf16.mxu0 0
    %4126 = vmatpush1.bf16.msra.mxu0 %v4068
    %4127 = vmatprep.subr.bf16.mxu0 0
    %4128 = vmatpush1.bf16.msra.mxu0 %v4067
    %4129 = vmatprep.subr.bf16.mxu0 0
    %4130 = vmatpush1.bf16.msra.mxu0 %v4066
    %4131 = vmatprep.subr.bf16.mxu0 0
    %4132 = vmatpush1.bf16.msra.mxu0 %v4065
    %4133 = vmatprep.subr.bf16.mxu0 0
    %4134 = vmatpush1.bf16.msra.mxu0 %v4064
    %4135 = vmatprep.subr.bf16.mxu0 0
    %4136 = vmatpush1.bf16.msra.mxu0 %v4063
    %4137 = vmatprep.subr.bf16.mxu0 0
    %4138 = vmatpush1.bf16.msra.mxu0 %v4062
    %4139 = vmatprep.subr.bf16.mxu0 0
    %4140 = vmatpush1.bf16.msra.mxu0 %v4061
    %4141 = vmatprep.subr.bf16.mxu0 0
    %4142 = vmatpush2.bf16.msra.mxu0 %v4076
    %4143 = vmatprep.subr.bf16.mxu0 0
    %4144 = vmatpush2.bf16.msra.mxu0 %v4075
    %4145 = vmatprep.subr.bf16.mxu0 0
    %4146 = vmatpush2.bf16.msra.mxu0 %v4074
    %4147 = vmatprep.subr.bf16.mxu0 0
    %4148 = vmatpush2.bf16.msra.mxu0 %v4073
    %4149 = vmatprep.subr.bf16.mxu0 0
    %4150 = vmatpush2.bf16.msra.mxu0 %v4072
    %4151 = vmatprep.subr.bf16.mxu0 0
    %4152 = vmatpush2.bf16.msra.mxu0 %v4071
    %4153 = vmatprep.subr.bf16.mxu0 0
    %4154 = vmatpush2.bf16.msra.mxu0 %v4070
    %4155 = vmatprep.subr.bf16.mxu0 0
    %4156 = vmatpush2.bf16.msra.mxu0 %v4069
    %4157 = vmatprep.mubr.bf16.mxu0 %v3914
    %4158 = vmatmul.mubr.bf16.gmra.mxu0 %v3913
    %v4159 = vpop.f32.mrf.mxu0
    %v4160 = vadd.f32 %v3932, %v4159
    %v4161 = vpop.f32.mrf.mxu0
    %v4162 = vpop.f32.mrf.mxu0
    %v4163 = vadd.f32 %v3932, %v4162
    %v4164 = vpop.f32.mrf.mxu0
    %4165 = vmatprep.mubr.bf16.mxu0 %v3918
    %4166 = vmatmul.mubr.bf16.gmra.mxu0 %v3917
    %v4167 = vpop.f32.mrf.mxu0
    %v4168 = vadd.f32 %v3932, %v4167
    %v4169 = vpop.f32.mrf.mxu0
    %v4170 = vpop.f32.mrf.mxu0
    %v4171 = vadd.f32 %v3932, %v4170
    %v4172 = vpop.f32.mrf.mxu0
    %4173 = vmatprep.mubr.bf16.mxu0 %v3922
    %4174 = vmatmul.mubr.bf16.gmra.mxu0 %v3921
    %v4175 = vpop.f32.mrf.mxu0
    %v4176 = vadd.f32 %v3932, %v4175
    %v4177 = vpop.f32.mrf.mxu0
    %v4178 = vpop.f32.mrf.mxu0
    %v4179 = vadd.f32 %v3932, %v4178
    %v4180 = vpop.f32.mrf.mxu0
    %4181 = vmatprep.mubr.bf16.mxu0 %v3926
    %4182 = vmatmul.mubr.bf16.gmra.mxu0 %v3925
    %v4183 = vpop.f32.mrf.mxu0
    %v4184 = vadd.f32 %v3932, %v4183
    %v4185 = vpop.f32.mrf.mxu0
    %v4186 = vpop.f32.mrf.mxu0
    %v4187 = vadd.f32 %v3932, %v4186
    %v4188 = vpop.f32.mrf.mxu0
    %4189 = vdwg.mxu0
    %4190 = vmatprep.subr.bf16.mxu0 0
    %4191 = vmatpush1.bf16.msra.mxu0 %v4084
    %4192 = vmatprep.subr.bf16.mxu0 0
    %4193 = vmatpush1.bf16.msra.mxu0 %v4083
    %4194 = vmatprep.subr.bf16.mxu0 0
    %4195 = vmatpush1.bf16.msra.mxu0 %v4082
    %4196 = vmatprep.subr.bf16.mxu0 0
    %4197 = vmatpush1.bf16.msra.mxu0 %v4081
    %4198 = vmatprep.subr.bf16.mxu0 0
    %4199 = vmatpush1.bf16.msra.mxu0 %v4080
    %4200 = vmatprep.subr.bf16.mxu0 0
    %4201 = vmatpush1.bf16.msra.mxu0 %v4079
    %4202 = vmatprep.subr.bf16.mxu0 0
    %4203 = vmatpush1.bf16.msra.mxu0 %v4078
    %4204 = vmatprep.subr.bf16.mxu0 0
    %4205 = vmatpush1.bf16.msra.mxu0 %v4077
    %4206 = vmatprep.subr.bf16.mxu0 0
    %4207 = vmatpush2.bf16.msra.mxu0 %v4092
    %4208 = vmatprep.subr.bf16.mxu0 0
    %4209 = vmatpush2.bf16.msra.mxu0 %v4091
    %4210 = vmatprep.subr.bf16.mxu0 0
    %4211 = vmatpush2.bf16.msra.mxu0 %v4090
    %4212 = vmatprep.subr.bf16.mxu0 0
    %4213 = vmatpush2.bf16.msra.mxu0 %v4089
    %4214 = vmatprep.subr.bf16.mxu0 0
    %4215 = vmatpush2.bf16.msra.mxu0 %v4088
    %4216 = vmatprep.subr.bf16.mxu0 0
    %4217 = vmatpush2.bf16.msra.mxu0 %v4087
    %4218 = vmatprep.subr.bf16.mxu0 0
    %4219 = vmatpush2.bf16.msra.mxu0 %v4086
    %4220 = vmatprep.subr.bf16.mxu0 0
    %4221 = vmatpush2.bf16.msra.mxu0 %v4085
    %4222 = vmatprep.mubr.bf16.mxu0 %v3916
    %4223 = vmatmul.mubr.bf16.gmra.mxu0 %v3915
    %v4224 = vpop.f32.mrf.mxu0
    %v4225 = vadd.f32 %v4160, %v4224
    %v4226 = vpop.f32.mrf.mxu0
    %v4227 = vpop.f32.mrf.mxu0
    %v4228 = vadd.f32 %v4163, %v4227
    %v4229 = vpop.f32.mrf.mxu0
    %4230 = vmatprep.mubr.bf16.mxu0 %v3920
    %4231 = vmatmul.mubr.bf16.gmra.mxu0 %v3919
    %v4232 = vpop.f32.mrf.mxu0
    %v4233 = vadd.f32 %v4168, %v4232
    %v4234 = vpop.f32.mrf.mxu0
    %v4235 = vpop.f32.mrf.mxu0
    %v4236 = vadd.f32 %v4171, %v4235
    %v4237 = vpop.f32.mrf.mxu0
    %4238 = vmatprep.mubr.bf16.mxu0 %v3924
    %4239 = vmatmul.mubr.bf16.gmra.mxu0 %v3923
    %v4240 = vpop.f32.mrf.mxu0
    %v4241 = vadd.f32 %v4176, %v4240
    %v4242 = vpop.f32.mrf.mxu0
    %v4243 = vpop.f32.mrf.mxu0
    %v4244 = vadd.f32 %v4179, %v4243
    %v4245 = vpop.f32.mrf.mxu0
    %4246 = vmatprep.mubr.bf16.mxu0 %v3928
    %4247 = vmatmul.mubr.bf16.gmra.mxu0 %v3927
    %v4248 = vpop.f32.mrf.mxu0
    %v4249 = vadd.f32 %v4184, %v4248
    %v4250 = vpop.f32.mrf.mxu0
    %v4251 = vpop.f32.mrf.mxu0
    %v4252 = vadd.f32 %v4187, %v4251
    %v4253 = vpop.f32.mrf.mxu0
    %4254 = vdwg.mxu0
    %v4255 = vadd.f32 %v3055, %v4225
    %v4256 = vadd.f32 %v3056, %v4228
    %v4257 = vadd.f32 %v3057, %v4233
    %v4258 = vadd.f32 %v3058, %v4236
    %v4259 = vadd.f32 %v3059, %v4241
    %v4260 = vadd.f32 %v3060, %v4244
    %v4261 = vadd.f32 %v3061, %v4249
    %v4262 = vadd.f32 %v3062, %v4252
    %v4263 = vld [vmem:[#allocation11 + $0x10] sm:$0xff]
    %v4264 = vld [vmem:[#allocation11 + $0x28] sm:$0xff]
    %v4265 = vld [vmem:[#allocation11 + $0x40] sm:$0xff]
    %v4266 = vld [vmem:[#allocation11 + $0x58] sm:$0xff]
    %v4267 = vld [vmem:[#allocation11 + $0x70] sm:$0xff]
    %v4268 = vld [vmem:[#allocation11 + $0x88] sm:$0xff]
    %v4269 = vld [vmem:[#allocation11 + $0xa0] sm:$0xff]
    %v4270 = vld [vmem:[#allocation11 + $0xb8] sm:$0xff]
    %v4271 = vld [vmem:[#allocation11 + $0xd0] sm:$0xff]
    %v4272 = vld [vmem:[#allocation11 + $0xe8] sm:$0xff]
    %v4273 = vld [vmem:[#allocation11 + $0x100] sm:$0xff]
    %v4274 = vld [vmem:[#allocation11 + $0x118] sm:$0xff]
    %v4275 = vld [vmem:[#allocation11 + $0x130] sm:$0xff]
    %v4276 = vld [vmem:[#allocation11 + $0x148] sm:$0xff]
    %v4277 = vld [vmem:[#allocation11 + $0x160] sm:$0xff]
    %v4278 = vld [vmem:[#allocation11 + $0x178] sm:$0xff]
    %v4279 = vpack.c.bf16 %v4256, %v4255
    %v4280 = vpack.c.bf16 %v4258, %v4257
    %v4281 = vpack.c.bf16 %v4260, %v4259
    %v4282 = vpack.c.bf16 %v4262, %v4261
    %v4299 = vunpack.c.l.b16 %v4263
    %v4300 = vunpack.c.h.b16 %v4263
    %v4301 = vunpack.c.l.b16 %v4264
    %v4302 = vunpack.c.h.b16 %v4264
    %v4303 = vunpack.c.l.b16 %v4265
    %v4304 = vunpack.c.h.b16 %v4265
    %v4305 = vunpack.c.l.b16 %v4266
    %v4306 = vunpack.c.h.b16 %v4266
    %v4307 = vunpack.c.l.b16 %v4267
    %v4308 = vunpack.c.h.b16 %v4267
    %v4309 = vunpack.c.l.b16 %v4268
    %v4310 = vunpack.c.h.b16 %v4268
    %v4311 = vunpack.c.l.b16 %v4269
    %v4312 = vunpack.c.h.b16 %v4269
    %v4313 = vunpack.c.l.b16 %v4270
    %v4314 = vunpack.c.h.b16 %v4270
    %v4315 = vunpack.c.l.b16 %v4271
    %v4316 = vunpack.c.h.b16 %v4271
    %v4317 = vunpack.c.l.b16 %v4272
    %v4318 = vunpack.c.h.b16 %v4272
    %v4319 = vunpack.c.l.b16 %v4273
    %v4320 = vunpack.c.h.b16 %v4273
    %v4321 = vunpack.c.l.b16 %v4274
    %v4322 = vunpack.c.h.b16 %v4274
    %v4323 = vunpack.c.l.b16 %v4275
    %v4324 = vunpack.c.h.b16 %v4275
    %v4325 = vunpack.c.l.b16 %v4276
    %v4326 = vunpack.c.h.b16 %v4276
    %v4327 = vunpack.c.l.b16 %v4277
    %v4328 = vunpack.c.h.b16 %v4277
    %v4329 = vunpack.c.l.b16 %v4278
    %v4330 = vunpack.c.h.b16 %v4278
    %v4331 = vpack.c.b16 %v4301, %v4299
    %v4332 = vpack.c.b16 %v4302, %v4300
    %v4333 = vpack.c.b16 %v4305, %v4303
    %v4334 = vpack.c.b16 %v4306, %v4304
    %v4335 = vpack.c.b16 %v4309, %v4307
    %v4336 = vpack.c.b16 %v4310, %v4308
    %v4337 = vpack.c.b16 %v4313, %v4311
    %v4338 = vpack.c.b16 %v4314, %v4312
    %v4339 = vpack.c.b16 %v4317, %v4315
    %v4340 = vpack.c.b16 %v4318, %v4316
    %v4341 = vpack.c.b16 %v4321, %v4319
    %v4342 = vpack.c.b16 %v4322, %v4320
    %v4343 = vpack.c.b16 %v4325, %v4323
    %v4344 = vpack.c.b16 %v4326, %v4324
    %v4345 = vpack.c.b16 %v4329, %v4327
    %v4346 = vpack.c.b16 %v4330, %v4328
    %4363 = vmatprep.subr.bf16.mxu0 %v4346
    %4364 = vmatpush1.bf16.msra.mxu0 %v4345
    %4365 = vmatprep.subr.bf16.mxu0 %v4344
    %4366 = vmatpush1.bf16.msra.mxu0 %v4343
    %4367 = vmatprep.subr.bf16.mxu0 %v4342
    %4368 = vmatpush1.bf16.msra.mxu0 %v4341
    %4369 = vmatprep.subr.bf16.mxu0 %v4340
    %4370 = vmatpush1.bf16.msra.mxu0 %v4339
    %4371 = vmatprep.subr.bf16.mxu0 %v4338
    %4372 = vmatpush1.bf16.msra.mxu0 %v4337
    %4373 = vmatprep.subr.bf16.mxu0 %v4336
    %4374 = vmatpush1.bf16.msra.mxu0 %v4335
    %4375 = vmatprep.subr.bf16.mxu0 %v4334
    %4376 = vmatpush1.bf16.msra.mxu0 %v4333
    %4377 = vmatprep.subr.bf16.mxu0 %v4332
    %4378 = vmatpush1.bf16.msra.mxu0 %v4331
    %4379 = vmatprep.subr.bf16.mxu0 0
    %4380 = vmatpush2.bf16.msra.mxu0 0
    %4381 = vmatprep.subr.bf16.mxu0 0
    %4382 = vmatpush2.bf16.msra.mxu0 0
    %4383 = vmatprep.subr.bf16.mxu0 0
    %4384 = vmatpush2.bf16.msra.mxu0 0
    %4385 = vmatprep.subr.bf16.mxu0 0
    %4386 = vmatpush2.bf16.msra.mxu0 0
    %4387 = vmatprep.subr.bf16.mxu0 0
    %4388 = vmatpush2.bf16.msra.mxu0 0
    %4389 = vmatprep.subr.bf16.mxu0 0
    %4390 = vmatpush2.bf16.msra.mxu0 0
    %4391 = vmatprep.subr.bf16.mxu0 0
    %4392 = vmatpush2.bf16.msra.mxu0 0
    %4393 = vmatprep.subr.bf16.mxu0 0
    %4394 = vmatpush2.bf16.msra.mxu0 0
    %4395 = vmatprep.mubr.bf16.mxu0 0
    %4396 = vmatmul.mubr.bf16.gmra.mxu0 %v4279
    %v4397 = vpop.f32.mrf.mxu0
    %v4398 = vadd.f32 0.0, %v4397
    %v4399 = vpop.f32.mrf.mxu0
    %v4400 = vpop.f32.mrf.mxu0
    %v4401 = vadd.f32 0.0, %v4400
    %v4402 = vpop.f32.mrf.mxu0
    %4403 = vmatprep.mubr.bf16.mxu0 0
    %4404 = vmatmul.mubr.bf16.gmra.mxu0 %v4280
    %v4405 = vpop.f32.mrf.mxu0
    %v4406 = vadd.f32 0.0, %v4405
    %v4407 = vpop.f32.mrf.mxu0
    %v4408 = vpop.f32.mrf.mxu0
    %v4409 = vadd.f32 0.0, %v4408
    %v4410 = vpop.f32.mrf.mxu0
    %4411 = vmatprep.mubr.bf16.mxu0 0
    %4412 = vmatmul.mubr.bf16.gmra.mxu0 %v4281
    %v4413 = vpop.f32.mrf.mxu0
    %v4414 = vpop.f32.mrf.mxu0
    %v4415 = vadd.f32 0.0, %v4414
    %v4416 = vpop.f32.mrf.mxu0
    %v4417 = vpop.f32.mrf.mxu0
    %v4418 = vadd.f32 0.0, %v4417
    %4419 = vmatprep.mubr.bf16.mxu0 0
    %4420 = vmatmul.mubr.bf16.gmra.mxu0 %v4282
    %v4421 = vpop.f32.mrf.mxu0
    %v4422 = vpop.f32.mrf.mxu0
    %v4423 = vadd.f32 0.0, %v4422
    %v4424 = vpop.f32.mrf.mxu0
    %v4425 = vpop.f32.mrf.mxu0
    %v4426 = vadd.f32 0.0, %v4425
    %4427 = vdwg.mxu0
    %v4428 = vlaneseq
    %v4429 = vshrl.u32 %v4428, 7
    %v4430 = vsub.s32 6, %v4429
    %v4431 = vrot.slane %v98, %v4430
    %v4432 = vadd.f32 %v4398, %v4431
    %v4433 = vadd.f32 %v4401, %v4431
    %v4434 = vadd.f32 %v4406, %v4431
    %v4435 = vadd.f32 %v4409, %v4431
    %v4436 = vlaneseq
    %v4437 = vshrl.u32 %v4436, 7
    %v4438 = vsub.s32 7, %v4437
    %v4439 = vrot.slane %v98, %v4438
    %v4440 = vadd.f32 %v4415, %v4439
    %v4441 = vadd.f32 %v4418, %v4439
    %v4442 = vadd.f32 %v4423, %v4439
    %v4443 = vadd.f32 %v4426, %v4439
    %v4444 = vadd.f32 %v4432, %v4440
    %v4445 = vadd.f32 %v4433, %v4441
    %v4446 = vadd.f32 %v4434, %v4442
    %v4447 = vadd.f32 %v4435, %v4443
    %4448 = vadd.xlane.f32.xlu0 %v4444
    %v4449 = vpop.xlane.xlu0 %4448
    %4450 = vadd.xlane.f32.xlu0 %v4445
    %v4451 = vpop.xlane.xlu0 %4450
    %4452 = vadd.xlane.f32.xlu0 %v4446
    %v4453 = vpop.xlane.xlu0 %4452
    %4454 = vadd.xlane.f32.xlu0 %v4447
    %v4455 = vpop.xlane.xlu0 %4454
    %v4456 = vmul.f32 %v4449, %v118
    %v4457 = vmul.f32 %v4451, %v118
    %v4458 = vmul.f32 %v4453, %v118
    %v4459 = vmul.f32 %v4455, %v118
    %v4460 = vsub.f32 %v4444, %v4456
    %v4461 = vsub.f32 %v4445, %v4457
    %v4462 = vsub.f32 %v4446, %v4458
    %v4463 = vsub.f32 %v4447, %v4459
    %v4464 = vmul.f32 %v4460, %v4460
    %v4465 = vmul.f32 %v4461, %v4461
    %v4466 = vmul.f32 %v4462, %v4462
    %v4467 = vmul.f32 %v4463, %v4463
    %4468 = vadd.xlane.f32.xlu0 %v4464
    %v4469 = vpop.xlane.xlu0 %4468
    %4470 = vadd.xlane.f32.xlu0 %v4465
    %v4471 = vpop.xlane.xlu0 %4470
    %4472 = vadd.xlane.f32.xlu0 %v4466
    %v4473 = vpop.xlane.xlu0 %4472
    %4474 = vadd.xlane.f32.xlu0 %v4467
    %v4475 = vpop.xlane.xlu0 %4474
    %v4476 = vmul.f32 %v4469, %v118
    %v4477 = vmul.f32 %v4471, %v118
    %v4478 = vmul.f32 %v4473, %v118
    %v4479 = vmul.f32 %v4475, %v118
    %v4480 = vadd.f32 %v4476, 1e-05
    %v4481 = vadd.f32 %v4477, 1e-05
    %v4482 = vadd.f32 %v4478, 1e-05
    %v4483 = vadd.f32 %v4479, 1e-05
    %v4484 = vrsqrt.pop %v4480
    %v4485 = vrsqrt.pop %v4481
    %v4486 = vrsqrt.pop %v4482
    %v4487 = vrsqrt.pop %v4483
    %v4488 = vmul.f32 %v4460, %v4484
    %v4489 = vmul.f32 %v4461, %v4485
    %v4490 = vmul.f32 %v4462, %v4486
    %v4491 = vmul.f32 %v4463, %v4487
    %v4492 = vlaneseq
    %v4493 = vshrl.u32 %v4492, 7
    %v4494 = vsub.s32 0, %v4493
    %v4495 = vrot.slane %v98, %v4494
    %v4496 = vmul.f32 %v4488, %v4495
    %v4497 = vmul.f32 %v4489, %v4495
    %v4498 = vmul.f32 %v4490, %v4495
    %v4499 = vmul.f32 %v4491, %v4495
    %v4500 = vlaneseq
    %v4501 = vshrl.u32 %v4500, 7
    %v4502 = vsub.s32 1, %v4501
    %v4503 = vrot.slane %v98, %v4502
    %v4504 = vadd.f32 %v4496, %v4503
    %v4505 = vadd.f32 %v4497, %v4503
    %v4506 = vadd.f32 %v4498, %v4503
    %v4507 = vadd.f32 %v4499, %v4503
    %4508 = vadd.xlane.f32.xlu0 %v4504
    %v4509 = vpop.xlane.xlu0 %4508
    %4510 = vadd.xlane.f32.xlu0 %v4505
    %v4511 = vpop.xlane.xlu0 %4510
    %4512 = vadd.xlane.f32.xlu0 %v4506
    %v4513 = vpop.xlane.xlu0 %4512
    %4514 = vadd.xlane.f32.xlu0 %v4507
    %v4515 = vpop.xlane.xlu0 %4514
    %v4516 = vmul.f32 %v4509, %v118
    %v4517 = vmul.f32 %v4511, %v118
    %v4518 = vmul.f32 %v4513, %v118
    %v4519 = vmul.f32 %v4515, %v118
    %v4520 = vsub.f32 %v4504, %v4516
    %v4521 = vsub.f32 %v4505, %v4517
    %v4522 = vsub.f32 %v4506, %v4518
    %v4523 = vsub.f32 %v4507, %v4519
    %v4524 = vmul.f32 %v4520, %v4520
    %v4525 = vmul.f32 %v4521, %v4521
    %v4526 = vmul.f32 %v4522, %v4522
    %v4527 = vmul.f32 %v4523, %v4523
    %4528 = vadd.xlane.f32.xlu0 %v4524
    %v4529 = vpop.xlane.xlu0 %4528
    %4530 = vadd.xlane.f32.xlu0 %v4525
    %v4531 = vpop.xlane.xlu0 %4530
    %4532 = vadd.xlane.f32.xlu0 %v4526
    %v4533 = vpop.xlane.xlu0 %4532
    %4534 = vadd.xlane.f32.xlu0 %v4527
    %v4535 = vpop.xlane.xlu0 %4534
    %v4536 = vmul.f32 %v4529, %v118
    %v4537 = vmul.f32 %v4531, %v118
    %v4538 = vmul.f32 %v4533, %v118
    %v4539 = vmul.f32 %v4535, %v118
    %v4540 = vadd.f32 %v4536, 1e-05
    %v4541 = vadd.f32 %v4537, 1e-05
    %v4542 = vadd.f32 %v4538, 1e-05
    %v4543 = vadd.f32 %v4539, 1e-05
    %v4544 = vrsqrt.pop %v4540
    %v4545 = vrsqrt.pop %v4541
    %v4546 = vrsqrt.pop %v4542
    %v4547 = vrsqrt.pop %v4543
    %v4548 = vmul.f32 %v4520, %v4544
    %v4549 = vmul.f32 %v4521, %v4545
    %v4550 = vmul.f32 %v4522, %v4546
    %v4551 = vmul.f32 %v4523, %v4547
    %v4552 = vmul.f32 %v4548, %v4495
    %v4553 = vmul.f32 %v4549, %v4495
    %v4554 = vmul.f32 %v4550, %v4495
    %v4555 = vmul.f32 %v4551, %v4495
    %v4556 = vadd.f32 %v4552, %v4503
    %v4557 = vadd.f32 %v4553, %v4503
    %v4558 = vadd.f32 %v4554, %v4503
    %v4559 = vadd.f32 %v4555, %v4503
    %v4560 = vld [vmem:[#allocation2 + $0x10] sm:$0xff]
    %v4561 = vld [vmem:[#allocation2 + $0x18] sm:$0xff]
    %v4562 = vld [vmem:[#allocation2 + $0x30] sm:$0xff]
    %v4563 = vld [vmem:[#allocation2 + $0x38] sm:$0xff]
    %v4564 = vld [vmem:[#allocation2 + $0x50] sm:$0xff]
    %v4565 = vld [vmem:[#allocation2 + $0x58] sm:$0xff]
    %v4566 = vld [vmem:[#allocation2 + $0x70] sm:$0xff]
    %v4567 = vld [vmem:[#allocation2 + $0x78] sm:$0xff]
    %v4568 = vld [vmem:[#allocation2 + $0x90] sm:$0xff]
    %v4569 = vld [vmem:[#allocation2 + $0x98] sm:$0xff]
    %v4570 = vld [vmem:[#allocation2 + $0xb0] sm:$0xff]
    %v4571 = vld [vmem:[#allocation2 + $0xb8] sm:$0xff]
    %v4572 = vld [vmem:[#allocation2 + $0xd0] sm:$0xff]
    %v4573 = vld [vmem:[#allocation2 + $0xd8] sm:$0xff]
    %v4574 = vld [vmem:[#allocation2 + $0xf0] sm:$0xff]
    %v4575 = vld [vmem:[#allocation2 + $0xf8] sm:$0xff]
    %v4576 = vld [vmem:[#allocation2 + $0x110] sm:$0xff]
    %v4577 = vld [vmem:[#allocation2 + $0x118] sm:$0xff]
    %v4578 = vld [vmem:[#allocation2 + $0x130] sm:$0xff]
    %v4579 = vld [vmem:[#allocation2 + $0x138] sm:$0xff]
    %v4580 = vld [vmem:[#allocation2 + $0x150] sm:$0xff]
    %v4581 = vld [vmem:[#allocation2 + $0x158] sm:$0xff]
    %v4582 = vld [vmem:[#allocation2 + $0x170] sm:$0xff]
    %v4583 = vld [vmem:[#allocation2 + $0x178] sm:$0xff]
    %v4584 = vld [vmem:[#allocation2 + $0x190] sm:$0xff]
    %v4585 = vld [vmem:[#allocation2 + $0x198] sm:$0xff]
    %v4586 = vld [vmem:[#allocation2 + $0x1b0] sm:$0xff]
    %v4587 = vld [vmem:[#allocation2 + $0x1b8] sm:$0xff]
    %v4588 = vld [vmem:[#allocation2 + $0x1d0] sm:$0xff]
    %v4589 = vld [vmem:[#allocation2 + $0x1d8] sm:$0xff]
    %v4590 = vld [vmem:[#allocation2 + $0x1f0] sm:$0xff]
    %v4591 = vld [vmem:[#allocation2 + $0x1f8] sm:$0xff]
    %v4592 = vpack.c.bf16 %v4557, %v4556
    %v4593 = vpack.c.bf16 %v4559, %v4558
    %v4594 = vlaneseq
    %v4595 = vshrl.u32 %v4594, 7
    %v4596 = vsub.s32 1, %v4595
    %v4597 = vrot.slane %v100, %v4596
    %v4598 = vlaneseq
    %v4599 = vshrl.u32 %v4598, 7
    %v4600 = vsub.s32 5, %v4599
    %v4601 = vrot.slane %v100, %v4600
    %v4602 = vlaneseq
    %v4603 = vshrl.u32 %v4602, 7
    %v4604 = vsub.s32 1, %v4603
    %v4605 = vrot.slane %v101, %v4604
    %v4606 = vlaneseq
    %v4607 = vshrl.u32 %v4606, 7
    %v4608 = vsub.s32 5, %v4607
    %v4609 = vrot.slane %v101, %v4608
    %v4614 = vlaneseq
    %v4615 = vshrl.u32 %v4614, 7
    %v4616 = vsub.s32 1, %v4615
    %v4617 = vrot.slane %v4597, %v4616
    %v4618 = vlaneseq
    %v4619 = vshrl.u32 %v4618, 7
    %v4620 = vsub.s32 1, %v4619
    %v4621 = vrot.slane %v4601, %v4620
    %v4622 = vlaneseq
    %v4623 = vshrl.u32 %v4622, 7
    %v4624 = vsub.s32 1, %v4623
    %v4625 = vrot.slane %v4605, %v4624
    %v4626 = vlaneseq
    %v4627 = vshrl.u32 %v4626, 7
    %v4628 = vsub.s32 1, %v4627
    %v4629 = vrot.slane %v4609, %v4628
    %v4662 = vunpack.c.l.b16 %v4560
    %v4663 = vunpack.c.h.b16 %v4560
    %v4664 = vunpack.c.l.b16 %v4561
    %v4665 = vunpack.c.h.b16 %v4561
    %v4666 = vunpack.c.l.b16 %v4562
    %v4667 = vunpack.c.h.b16 %v4562
    %v4668 = vunpack.c.l.b16 %v4563
    %v4669 = vunpack.c.h.b16 %v4563
    %v4670 = vunpack.c.l.b16 %v4564
    %v4671 = vunpack.c.h.b16 %v4564
    %v4672 = vunpack.c.l.b16 %v4565
    %v4673 = vunpack.c.h.b16 %v4565
    %v4674 = vunpack.c.l.b16 %v4566
    %v4675 = vunpack.c.h.b16 %v4566
    %v4676 = vunpack.c.l.b16 %v4567
    %v4677 = vunpack.c.h.b16 %v4567
    %v4678 = vunpack.c.l.b16 %v4568
    %v4679 = vunpack.c.h.b16 %v4568
    %v4680 = vunpack.c.l.b16 %v4569
    %v4681 = vunpack.c.h.b16 %v4569
    %v4682 = vunpack.c.l.b16 %v4570
    %v4683 = vunpack.c.h.b16 %v4570
    %v4684 = vunpack.c.l.b16 %v4571
    %v4685 = vunpack.c.h.b16 %v4571
    %v4686 = vunpack.c.l.b16 %v4572
    %v4687 = vunpack.c.h.b16 %v4572
    %v4688 = vunpack.c.l.b16 %v4573
    %v4689 = vunpack.c.h.b16 %v4573
    %v4690 = vunpack.c.l.b16 %v4574
    %v4691 = vunpack.c.h.b16 %v4574
    %v4692 = vunpack.c.l.b16 %v4575
    %v4693 = vunpack.c.h.b16 %v4575
    %v4694 = vunpack.c.l.b16 %v4576
    %v4695 = vunpack.c.h.b16 %v4576
    %v4696 = vunpack.c.l.b16 %v4577
    %v4697 = vunpack.c.h.b16 %v4577
    %v4698 = vunpack.c.l.b16 %v4578
    %v4699 = vunpack.c.h.b16 %v4578
    %v4700 = vunpack.c.l.b16 %v4579
    %v4701 = vunpack.c.h.b16 %v4579
    %v4702 = vunpack.c.l.b16 %v4580
    %v4703 = vunpack.c.h.b16 %v4580
    %v4704 = vunpack.c.l.b16 %v4581
    %v4705 = vunpack.c.h.b16 %v4581
    %v4706 = vunpack.c.l.b16 %v4582
    %v4707 = vunpack.c.h.b16 %v4582
    %v4708 = vunpack.c.l.b16 %v4583
    %v4709 = vunpack.c.h.b16 %v4583
    %v4710 = vunpack.c.l.b16 %v4584
    %v4711 = vunpack.c.h.b16 %v4584
    %v4712 = vunpack.c.l.b16 %v4585
    %v4713 = vunpack.c.h.b16 %v4585
    %v4714 = vunpack.c.l.b16 %v4586
    %v4715 = vunpack.c.h.b16 %v4586
    %v4716 = vunpack.c.l.b16 %v4587
    %v4717 = vunpack.c.h.b16 %v4587
    %v4718 = vunpack.c.l.b16 %v4588
    %v4719 = vunpack.c.h.b16 %v4588
    %v4720 = vunpack.c.l.b16 %v4589
    %v4721 = vunpack.c.h.b16 %v4589
    %v4722 = vunpack.c.l.b16 %v4590
    %v4723 = vunpack.c.h.b16 %v4590
    %v4724 = vunpack.c.l.b16 %v4591
    %v4725 = vunpack.c.h.b16 %v4591
    %v4726 = vpack.c.b16 %v4666, %v4662
    %v4727 = vpack.c.b16 %v4667, %v4663
    %v4728 = vpack.c.b16 %v4668, %v4664
    %v4729 = vpack.c.b16 %v4669, %v4665
    %v4730 = vpack.c.b16 %v4674, %v4670
    %v4731 = vpack.c.b16 %v4675, %v4671
    %v4732 = vpack.c.b16 %v4676, %v4672
    %v4733 = vpack.c.b16 %v4677, %v4673
    %v4734 = vpack.c.b16 %v4682, %v4678
    %v4735 = vpack.c.b16 %v4683, %v4679
    %v4736 = vpack.c.b16 %v4684, %v4680
    %v4737 = vpack.c.b16 %v4685, %v4681
    %v4738 = vpack.c.b16 %v4690, %v4686
    %v4739 = vpack.c.b16 %v4691, %v4687
    %v4740 = vpack.c.b16 %v4692, %v4688
    %v4741 = vpack.c.b16 %v4693, %v4689
    %v4742 = vpack.c.b16 %v4698, %v4694
    %v4743 = vpack.c.b16 %v4699, %v4695
    %v4744 = vpack.c.b16 %v4700, %v4696
    %v4745 = vpack.c.b16 %v4701, %v4697
    %v4746 = vpack.c.b16 %v4706, %v4702
    %v4747 = vpack.c.b16 %v4707, %v4703
    %v4748 = vpack.c.b16 %v4708, %v4704
    %v4749 = vpack.c.b16 %v4709, %v4705
    %v4750 = vpack.c.b16 %v4714, %v4710
    %v4751 = vpack.c.b16 %v4715, %v4711
    %v4752 = vpack.c.b16 %v4716, %v4712
    %v4753 = vpack.c.b16 %v4717, %v4713
    %v4754 = vpack.c.b16 %v4722, %v4718
    %v4755 = vpack.c.b16 %v4723, %v4719
    %v4756 = vpack.c.b16 %v4724, %v4720
    %v4757 = vpack.c.b16 %v4725, %v4721
    %4790 = vmatprep.subr.bf16.mxu0 %v4755
    %4791 = vmatpush1.bf16.msra.mxu0 %v4754
    %4792 = vmatprep.subr.bf16.mxu0 %v4751
    %4793 = vmatpush1.bf16.msra.mxu0 %v4750
    %4794 = vmatprep.subr.bf16.mxu0 %v4747
    %4795 = vmatpush1.bf16.msra.mxu0 %v4746
    %4796 = vmatprep.subr.bf16.mxu0 %v4743
    %4797 = vmatpush1.bf16.msra.mxu0 %v4742
    %4798 = vmatprep.subr.bf16.mxu0 %v4739
    %4799 = vmatpush1.bf16.msra.mxu0 %v4738
    %4800 = vmatprep.subr.bf16.mxu0 %v4735
    %4801 = vmatpush1.bf16.msra.mxu0 %v4734
    %4802 = vmatprep.subr.bf16.mxu0 %v4731
    %4803 = vmatpush1.bf16.msra.mxu0 %v4730
    %4804 = vmatprep.subr.bf16.mxu0 %v4727
    %4805 = vmatpush1.bf16.msra.mxu0 %v4726
    %4806 = vmatprep.subr.bf16.mxu0 0
    %4807 = vmatpush2.bf16.msra.mxu0 0
    %4808 = vmatprep.subr.bf16.mxu0 0
    %4809 = vmatpush2.bf16.msra.mxu0 0
    %4810 = vmatprep.subr.bf16.mxu0 0
    %4811 = vmatpush2.bf16.msra.mxu0 0
    %4812 = vmatprep.subr.bf16.mxu0 0
    %4813 = vmatpush2.bf16.msra.mxu0 0
    %4814 = vmatprep.subr.bf16.mxu0 0
    %4815 = vmatpush2.bf16.msra.mxu0 0
    %4816 = vmatprep.subr.bf16.mxu0 0
    %4817 = vmatpush2.bf16.msra.mxu0 0
    %4818 = vmatprep.subr.bf16.mxu0 0
    %4819 = vmatpush2.bf16.msra.mxu0 0
    %4820 = vmatprep.subr.bf16.mxu0 0
    %4821 = vmatpush2.bf16.msra.mxu0 0
    %4822 = vmatprep.mubr.bf16.mxu0 0
    %4823 = vmatmul.mubr.bf16.gmra.mxu0 %v4592
    %v4824 = vpop.f32.mrf.mxu0
    %v4825 = vadd.f32 %v4617, %v4824
    %v4826 = vpop.f32.mrf.mxu0
    %v4827 = vadd.f32 %v4621, %v4826
    %v4828 = vpop.f32.mrf.mxu0
    %v4829 = vadd.f32 %v4617, %v4828
    %v4830 = vpop.f32.mrf.mxu0
    %v4831 = vadd.f32 %v4621, %v4830
    %4832 = vmatprep.mubr.bf16.mxu0 0
    %4833 = vmatmul.mubr.bf16.gmra.mxu0 %v4593
    %v4834 = vpop.f32.mrf.mxu0
    %v4835 = vadd.f32 %v4617, %v4834
    %v4836 = vpop.f32.mrf.mxu0
    %v4837 = vadd.f32 %v4621, %v4836
    %v4838 = vpop.f32.mrf.mxu0
    %v4839 = vadd.f32 %v4617, %v4838
    %v4840 = vpop.f32.mrf.mxu0
    %v4841 = vadd.f32 %v4621, %v4840
    %4842 = vdwg.mxu0
    %4843 = vmatprep.subr.bf16.mxu0 %v4757
    %4844 = vmatpush1.bf16.msra.mxu0 %v4756
    %4845 = vmatprep.subr.bf16.mxu0 %v4753
    %4846 = vmatpush1.bf16.msra.mxu0 %v4752
    %4847 = vmatprep.subr.bf16.mxu0 %v4749
    %4848 = vmatpush1.bf16.msra.mxu0 %v4748
    %4849 = vmatprep.subr.bf16.mxu0 %v4745
    %4850 = vmatpush1.bf16.msra.mxu0 %v4744
    %4851 = vmatprep.subr.bf16.mxu0 %v4741
    %4852 = vmatpush1.bf16.msra.mxu0 %v4740
    %4853 = vmatprep.subr.bf16.mxu0 %v4737
    %4854 = vmatpush1.bf16.msra.mxu0 %v4736
    %4855 = vmatprep.subr.bf16.mxu0 %v4733
    %4856 = vmatpush1.bf16.msra.mxu0 %v4732
    %4857 = vmatprep.subr.bf16.mxu0 %v4729
    %4858 = vmatpush1.bf16.msra.mxu0 %v4728
    %4859 = vmatprep.subr.bf16.mxu0 0
    %4860 = vmatpush2.bf16.msra.mxu0 0
    %4861 = vmatprep.subr.bf16.mxu0 0
    %4862 = vmatpush2.bf16.msra.mxu0 0
    %4863 = vmatprep.subr.bf16.mxu0 0
    %4864 = vmatpush2.bf16.msra.mxu0 0
    %4865 = vmatprep.subr.bf16.mxu0 0
    %4866 = vmatpush2.bf16.msra.mxu0 0
    %4867 = vmatprep.subr.bf16.mxu0 0
    %4868 = vmatpush2.bf16.msra.mxu0 0
    %4869 = vmatprep.subr.bf16.mxu0 0
    %4870 = vmatpush2.bf16.msra.mxu0 0
    %4871 = vmatprep.subr.bf16.mxu0 0
    %4872 = vmatpush2.bf16.msra.mxu0 0
    %4873 = vmatprep.subr.bf16.mxu0 0
    %4874 = vmatpush2.bf16.msra.mxu0 0
    %4875 = vmatprep.mubr.bf16.mxu0 0
    %4876 = vmatmul.mubr.bf16.gmra.mxu0 %v4592
    %v4877 = vpop.f32.mrf.mxu0
    %v4878 = vadd.f32 %v4625, %v4877
    %v4879 = vpop.f32.mrf.mxu0
    %v4880 = vadd.f32 %v4629, %v4879
    %v4881 = vpop.f32.mrf.mxu0
    %v4882 = vadd.f32 %v4625, %v4881
    %v4883 = vpop.f32.mrf.mxu0
    %v4884 = vadd.f32 %v4629, %v4883
    %4885 = vmatprep.mubr.bf16.mxu0 0
    %4886 = vmatmul.mubr.bf16.gmra.mxu0 %v4593
    %v4887 = vpop.f32.mrf.mxu0
    %v4888 = vadd.f32 %v4625, %v4887
    %v4889 = vpop.f32.mrf.mxu0
    %v4890 = vadd.f32 %v4629, %v4889
    %v4891 = vpop.f32.mrf.mxu0
    %v4892 = vadd.f32 %v4625, %v4891
    %v4893 = vpop.f32.mrf.mxu0
    %v4894 = vadd.f32 %v4629, %v4893
    %4895 = vdwg.mxu0
    %v4896 = vmul.f32 %v4825, 0.5
    %v4897 = vmul.f32 %v4827, 0.5
    %v4898 = vmul.f32 %v4878, 0.5
    %v4899 = vmul.f32 %v4880, 0.5
    %v4900 = vmul.f32 %v4829, 0.5
    %v4901 = vmul.f32 %v4831, 0.5
    %v4902 = vmul.f32 %v4882, 0.5
    %v4903 = vmul.f32 %v4884, 0.5
    %v4904 = vmul.f32 %v4835, 0.5
    %v4905 = vmul.f32 %v4837, 0.5
    %v4906 = vmul.f32 %v4888, 0.5
    %v4907 = vmul.f32 %v4890, 0.5
    %v4908 = vmul.f32 %v4839, 0.5
    %v4909 = vmul.f32 %v4841, 0.5
    %v4910 = vmul.f32 %v4892, 0.5
    %v4911 = vmul.f32 %v4894, 0.5
    %v4912 = vmul.f32 %v4825, 0.044715
    %v4913 = vmul.f32 %v4827, 0.044715
    %v4914 = vmul.f32 %v4878, 0.044715
    %v4915 = vmul.f32 %v4880, 0.044715
    %v4916 = vmul.f32 %v4829, 0.044715
    %v4917 = vmul.f32 %v4831, 0.044715
    %v4918 = vmul.f32 %v4882, 0.044715
    %v4919 = vmul.f32 %v4884, 0.044715
    %v4920 = vmul.f32 %v4835, 0.044715
    %v4921 = vmul.f32 %v4837, 0.044715
    %v4922 = vmul.f32 %v4888, 0.044715
    %v4923 = vmul.f32 %v4890, 0.044715
    %v4924 = vmul.f32 %v4839, 0.044715
    %v4925 = vmul.f32 %v4841, 0.044715
    %v4926 = vmul.f32 %v4892, 0.044715
    %v4927 = vmul.f32 %v4894, 0.044715
    %v4928 = vmul.f32 %v4912, %v4825
    %v4929 = vmul.f32 %v4913, %v4827
    %v4930 = vmul.f32 %v4914, %v4878
    %v4931 = vmul.f32 %v4915, %v4880
    %v4932 = vmul.f32 %v4916, %v4829
    %v4933 = vmul.f32 %v4917, %v4831
    %v4934 = vmul.f32 %v4918, %v4882
    %v4935 = vmul.f32 %v4919, %v4884
    %v4936 = vmul.f32 %v4920, %v4835
    %v4937 = vmul.f32 %v4921, %v4837
    %v4938 = vmul.f32 %v4922, %v4888
    %v4939 = vmul.f32 %v4923, %v4890
    %v4940 = vmul.f32 %v4924, %v4839
    %v4941 = vmul.f32 %v4925, %v4841
    %v4942 = vmul.f32 %v4926, %v4892
    %v4943 = vmul.f32 %v4927, %v4894
    %v4944 = vmul.f32 %v4928, %v4825
    %v4945 = vmul.f32 %v4929, %v4827
    %v4946 = vmul.f32 %v4930, %v4878
    %v4947 = vmul.f32 %v4931, %v4880
    %v4948 = vmul.f32 %v4932, %v4829
    %v4949 = vmul.f32 %v4933, %v4831
    %v4950 = vmul.f32 %v4934, %v4882
    %v4951 = vmul.f32 %v4935, %v4884
    %v4952 = vmul.f32 %v4936, %v4835
    %v4953 = vmul.f32 %v4937, %v4837
    %v4954 = vmul.f32 %v4938, %v4888
    %v4955 = vmul.f32 %v4939, %v4890
    %v4956 = vmul.f32 %v4940, %v4839
    %v4957 = vmul.f32 %v4941, %v4841
    %v4958 = vmul.f32 %v4942, %v4892
    %v4959 = vmul.f32 %v4943, %v4894
    %v4960 = vadd.f32 %v4825, %v4944
    %v4961 = vadd.f32 %v4827, %v4945
    %v4962 = vadd.f32 %v4878, %v4946
    %v4963 = vadd.f32 %v4880, %v4947
    %v4964 = vadd.f32 %v4829, %v4948
    %v4965 = vadd.f32 %v4831, %v4949
    %v4966 = vadd.f32 %v4882, %v4950
    %v4967 = vadd.f32 %v4884, %v4951
    %v4968 = vadd.f32 %v4835, %v4952
    %v4969 = vadd.f32 %v4837, %v4953
    %v4970 = vadd.f32 %v4888, %v4954
    %v4971 = vadd.f32 %v4890, %v4955
    %v4972 = vadd.f32 %v4839, %v4956
    %v4973 = vadd.f32 %v4841, %v4957
    %v4974 = vadd.f32 %v4892, %v4958
    %v4975 = vadd.f32 %v4894, %v4959
    %v4976 = vmul.f32 %v4960, 0.7978846
    %v4977 = vmul.f32 %v4961, 0.7978846
    %v4978 = vmul.f32 %v4962, 0.7978846
    %v4979 = vmul.f32 %v4963, 0.7978846
    %v4980 = vmul.f32 %v4964, 0.7978846
    %v4981 = vmul.f32 %v4965, 0.7978846
    %v4982 = vmul.f32 %v4966, 0.7978846
    %v4983 = vmul.f32 %v4967, 0.7978846
    %v4984 = vmul.f32 %v4968, 0.7978846
    %v4985 = vmul.f32 %v4969, 0.7978846
    %v4986 = vmul.f32 %v4970, 0.7978846
    %v4987 = vmul.f32 %v4971, 0.7978846
    %v4988 = vmul.f32 %v4972, 0.7978846
    %v4989 = vmul.f32 %v4973, 0.7978846
    %v4990 = vmul.f32 %v4974, 0.7978846
    %v4991 = vmul.f32 %v4975, 0.7978846
    %v4992 = vtanh.pop %v4976
    %v4993 = vtanh.pop %v4977
    %v4994 = vtanh.pop %v4978
    %v4995 = vtanh.pop %v4979
    %v4996 = vtanh.pop %v4980
    %v4997 = vtanh.pop %v4981
    %v4998 = vtanh.pop %v4982
    %v4999 = vtanh.pop %v4983
    %v5000 = vtanh.pop %v4984
    %v5001 = vtanh.pop %v4985
    %v5002 = vtanh.pop %v4986
    %v5003 = vtanh.pop %v4987
    %v5004 = vtanh.pop %v4988
    %v5005 = vtanh.pop %v4989
    %v5006 = vtanh.pop %v4990
    %v5007 = vtanh.pop %v4991
    %v5008 = vadd.f32 %v4992, 1.0
    %v5009 = vadd.f32 %v4993, 1.0
    %v5010 = vadd.f32 %v4994, 1.0
    %v5011 = vadd.f32 %v4995, 1.0
    %v5012 = vadd.f32 %v4996, 1.0
    %v5013 = vadd.f32 %v4997, 1.0
    %v5014 = vadd.f32 %v4998, 1.0
    %v5015 = vadd.f32 %v4999, 1.0
    %v5016 = vadd.f32 %v5000, 1.0
    %v5017 = vadd.f32 %v5001, 1.0
    %v5018 = vadd.f32 %v5002, 1.0
    %v5019 = vadd.f32 %v5003, 1.0
    %v5020 = vadd.f32 %v5004, 1.0
    %v5021 = vadd.f32 %v5005, 1.0
    %v5022 = vadd.f32 %v5006, 1.0
    %v5023 = vadd.f32 %v5007, 1.0
    %v5024 = vmul.f32 %v4896, %v5008
    %v5025 = vmul.f32 %v4897, %v5009
    %v5026 = vmul.f32 %v4898, %v5010
    %v5027 = vmul.f32 %v4899, %v5011
    %v5028 = vmul.f32 %v4900, %v5012
    %v5029 = vmul.f32 %v4901, %v5013
    %v5030 = vmul.f32 %v4902, %v5014
    %v5031 = vmul.f32 %v4903, %v5015
    %v5032 = vmul.f32 %v4904, %v5016
    %v5033 = vmul.f32 %v4905, %v5017
    %v5034 = vmul.f32 %v4906, %v5018
    %v5035 = vmul.f32 %v4907, %v5019
    %v5036 = vmul.f32 %v4908, %v5020
    %v5037 = vmul.f32 %v4909, %v5021
    %v5038 = vmul.f32 %v4910, %v5022
    %v5039 = vmul.f32 %v4911, %v5023
    %v5040 = vld [vmem:[#allocation3 + $0x100] sm:$0xf]
    %v5041 = vld [vmem:[#allocation3 + $0x104] sm:$0xf]
    %v5042 = vld [vmem:[#allocation3 + $0x108] sm:$0xf]
    %v5043 = vld [vmem:[#allocation3 + $0x10c] sm:$0xf]
    %v5044 = vld [vmem:[#allocation3 + $0x110] sm:$0xf]
    %v5045 = vld [vmem:[#allocation3 + $0x114] sm:$0xf]
    %v5046 = vld [vmem:[#allocation3 + $0x118] sm:$0xf]
    %v5047 = vld [vmem:[#allocation3 + $0x11c] sm:$0xf]
    %v5048 = vld [vmem:[#allocation3 + $0x120] sm:$0xf]
    %v5049 = vld [vmem:[#allocation3 + $0x124] sm:$0xf]
    %v5050 = vld [vmem:[#allocation3 + $0x128] sm:$0xf]
    %v5051 = vld [vmem:[#allocation3 + $0x12c] sm:$0xf]
    %v5052 = vld [vmem:[#allocation3 + $0x130] sm:$0xf]
    %v5053 = vld [vmem:[#allocation3 + $0x134] sm:$0xf]
    %v5054 = vld [vmem:[#allocation3 + $0x138] sm:$0xf]
    %v5055 = vld [vmem:[#allocation3 + $0x13c] sm:$0xf]
    %v5056 = vld [vmem:[#allocation3 + $0x140] sm:$0xf]
    %v5057 = vld [vmem:[#allocation3 + $0x144] sm:$0xf]
    %v5058 = vld [vmem:[#allocation3 + $0x148] sm:$0xf]
    %v5059 = vld [vmem:[#allocation3 + $0x14c] sm:$0xf]
    %v5060 = vld [vmem:[#allocation3 + $0x150] sm:$0xf]
    %v5061 = vld [vmem:[#allocation3 + $0x154] sm:$0xf]
    %v5062 = vld [vmem:[#allocation3 + $0x158] sm:$0xf]
    %v5063 = vld [vmem:[#allocation3 + $0x15c] sm:$0xf]
    %v5064 = vld [vmem:[#allocation3 + $0x160] sm:$0xf]
    %v5065 = vld [vmem:[#allocation3 + $0x164] sm:$0xf]
    %v5066 = vld [vmem:[#allocation3 + $0x168] sm:$0xf]
    %v5067 = vld [vmem:[#allocation3 + $0x16c] sm:$0xf]
    %v5068 = vld [vmem:[#allocation3 + $0x170] sm:$0xf]
    %v5069 = vld [vmem:[#allocation3 + $0x174] sm:$0xf]
    %v5070 = vld [vmem:[#allocation3 + $0x178] sm:$0xf]
    %v5071 = vld [vmem:[#allocation3 + $0x17c] sm:$0xf]
    %v5072 = vld [vmem:[#allocation3 + $0x180] sm:$0xf]
    %v5073 = vld [vmem:[#allocation3 + $0x184] sm:$0xf]
    %v5074 = vld [vmem:[#allocation3 + $0x188] sm:$0xf]
    %v5075 = vld [vmem:[#allocation3 + $0x18c] sm:$0xf]
    %v5076 = vld [vmem:[#allocation3 + $0x190] sm:$0xf]
    %v5077 = vld [vmem:[#allocation3 + $0x194] sm:$0xf]
    %v5078 = vld [vmem:[#allocation3 + $0x198] sm:$0xf]
    %v5079 = vld [vmem:[#allocation3 + $0x19c] sm:$0xf]
    %v5080 = vld [vmem:[#allocation3 + $0x1a0] sm:$0xf]
    %v5081 = vld [vmem:[#allocation3 + $0x1a4] sm:$0xf]
    %v5082 = vld [vmem:[#allocation3 + $0x1a8] sm:$0xf]
    %v5083 = vld [vmem:[#allocation3 + $0x1ac] sm:$0xf]
    %v5084 = vld [vmem:[#allocation3 + $0x1b0] sm:$0xf]
    %v5085 = vld [vmem:[#allocation3 + $0x1b4] sm:$0xf]
    %v5086 = vld [vmem:[#allocation3 + $0x1b8] sm:$0xf]
    %v5087 = vld [vmem:[#allocation3 + $0x1bc] sm:$0xf]
    %v5088 = vld [vmem:[#allocation3 + $0x1c0] sm:$0xf]
    %v5089 = vld [vmem:[#allocation3 + $0x1c4] sm:$0xf]
    %v5090 = vld [vmem:[#allocation3 + $0x1c8] sm:$0xf]
    %v5091 = vld [vmem:[#allocation3 + $0x1cc] sm:$0xf]
    %v5092 = vld [vmem:[#allocation3 + $0x1d0] sm:$0xf]
    %v5093 = vld [vmem:[#allocation3 + $0x1d4] sm:$0xf]
    %v5094 = vld [vmem:[#allocation3 + $0x1d8] sm:$0xf]
    %v5095 = vld [vmem:[#allocation3 + $0x1dc] sm:$0xf]
    %v5096 = vld [vmem:[#allocation3 + $0x1e0] sm:$0xf]
    %v5097 = vld [vmem:[#allocation3 + $0x1e4] sm:$0xf]
    %v5098 = vld [vmem:[#allocation3 + $0x1e8] sm:$0xf]
    %v5099 = vld [vmem:[#allocation3 + $0x1ec] sm:$0xf]
    %v5100 = vld [vmem:[#allocation3 + $0x1f0] sm:$0xf]
    %v5101 = vld [vmem:[#allocation3 + $0x1f4] sm:$0xf]
    %v5102 = vld [vmem:[#allocation3 + $0x1f8] sm:$0xf]
    %v5103 = vld [vmem:[#allocation3 + $0x1fc] sm:$0xf]
    %v5104 = vpack.c.bf16 %v5028, %v5024
    %v5105 = vpack.c.bf16 %v5029, %v5025
    %v5106 = vpack.c.bf16 %v5030, %v5026
    %v5107 = vpack.c.bf16 %v5031, %v5027
    %v5108 = vpack.c.bf16 %v5036, %v5032
    %v5109 = vpack.c.bf16 %v5037, %v5033
    %v5110 = vpack.c.bf16 %v5038, %v5034
    %v5111 = vpack.c.bf16 %v5039, %v5035
    %v5112 = vlaneseq
    %v5113 = vshrl.u32 %v5112, 7
    %v5114 = vsub.s32 0, %v5113
    %v5115 = vrot.slane %v99, %v5114
    %v5180 = vunpack.c.l.b16 %v5040
    %v5181 = vunpack.c.l.b16 %v5041
    %v5182 = vunpack.c.l.b16 %v5042
    %v5183 = vunpack.c.l.b16 %v5043
    %v5184 = vunpack.c.l.b16 %v5044
    %v5185 = vunpack.c.l.b16 %v5045
    %v5186 = vunpack.c.l.b16 %v5046
    %v5187 = vunpack.c.l.b16 %v5047
    %v5188 = vunpack.c.l.b16 %v5048
    %v5189 = vunpack.c.l.b16 %v5049
    %v5190 = vunpack.c.l.b16 %v5050
    %v5191 = vunpack.c.l.b16 %v5051
    %v5192 = vunpack.c.l.b16 %v5052
    %v5193 = vunpack.c.l.b16 %v5053
    %v5194 = vunpack.c.l.b16 %v5054
    %v5195 = vunpack.c.l.b16 %v5055
    %v5196 = vunpack.c.l.b16 %v5056
    %v5197 = vunpack.c.l.b16 %v5057
    %v5198 = vunpack.c.l.b16 %v5058
    %v5199 = vunpack.c.l.b16 %v5059
    %v5200 = vunpack.c.l.b16 %v5060
    %v5201 = vunpack.c.l.b16 %v5061
    %v5202 = vunpack.c.l.b16 %v5062
    %v5203 = vunpack.c.l.b16 %v5063
    %v5204 = vunpack.c.l.b16 %v5064
    %v5205 = vunpack.c.l.b16 %v5065
    %v5206 = vunpack.c.l.b16 %v5066
    %v5207 = vunpack.c.l.b16 %v5067
    %v5208 = vunpack.c.l.b16 %v5068
    %v5209 = vunpack.c.l.b16 %v5069
    %v5210 = vunpack.c.l.b16 %v5070
    %v5211 = vunpack.c.l.b16 %v5071
    %v5212 = vunpack.c.l.b16 %v5072
    %v5213 = vunpack.c.l.b16 %v5073
    %v5214 = vunpack.c.l.b16 %v5074
    %v5215 = vunpack.c.l.b16 %v5075
    %v5216 = vunpack.c.l.b16 %v5076
    %v5217 = vunpack.c.l.b16 %v5077
    %v5218 = vunpack.c.l.b16 %v5078
    %v5219 = vunpack.c.l.b16 %v5079
    %v5220 = vunpack.c.l.b16 %v5080
    %v5221 = vunpack.c.l.b16 %v5081
    %v5222 = vunpack.c.l.b16 %v5082
    %v5223 = vunpack.c.l.b16 %v5083
    %v5224 = vunpack.c.l.b16 %v5084
    %v5225 = vunpack.c.l.b16 %v5085
    %v5226 = vunpack.c.l.b16 %v5086
    %v5227 = vunpack.c.l.b16 %v5087
    %v5228 = vunpack.c.l.b16 %v5088
    %v5229 = vunpack.c.l.b16 %v5089
    %v5230 = vunpack.c.l.b16 %v5090
    %v5231 = vunpack.c.l.b16 %v5091
    %v5232 = vunpack.c.l.b16 %v5092
    %v5233 = vunpack.c.l.b16 %v5093
    %v5234 = vunpack.c.l.b16 %v5094
    %v5235 = vunpack.c.l.b16 %v5095
    %v5236 = vunpack.c.l.b16 %v5096
    %v5237 = vunpack.c.l.b16 %v5097
    %v5238 = vunpack.c.l.b16 %v5098
    %v5239 = vunpack.c.l.b16 %v5099
    %v5240 = vunpack.c.l.b16 %v5100
    %v5241 = vunpack.c.l.b16 %v5101
    %v5242 = vunpack.c.l.b16 %v5102
    %v5243 = vunpack.c.l.b16 %v5103
    %v5244 = vpack.c.b16 %v5181, %v5180
    %v5245 = vpack.c.b16 %v5183, %v5182
    %v5246 = vpack.c.b16 %v5185, %v5184
    %v5247 = vpack.c.b16 %v5187, %v5186
    %v5248 = vpack.c.b16 %v5189, %v5188
    %v5249 = vpack.c.b16 %v5191, %v5190
    %v5250 = vpack.c.b16 %v5193, %v5192
    %v5251 = vpack.c.b16 %v5195, %v5194
    %v5252 = vpack.c.b16 %v5197, %v5196
    %v5253 = vpack.c.b16 %v5199, %v5198
    %v5254 = vpack.c.b16 %v5201, %v5200
    %v5255 = vpack.c.b16 %v5203, %v5202
    %v5256 = vpack.c.b16 %v5205, %v5204
    %v5257 = vpack.c.b16 %v5207, %v5206
    %v5258 = vpack.c.b16 %v5209, %v5208
    %v5259 = vpack.c.b16 %v5211, %v5210
    %v5260 = vpack.c.b16 %v5213, %v5212
    %v5261 = vpack.c.b16 %v5215, %v5214
    %v5262 = vpack.c.b16 %v5217, %v5216
    %v5263 = vpack.c.b16 %v5219, %v5218
    %v5264 = vpack.c.b16 %v5221, %v5220
    %v5265 = vpack.c.b16 %v5223, %v5222
    %v5266 = vpack.c.b16 %v5225, %v5224
    %v5267 = vpack.c.b16 %v5227, %v5226
    %v5268 = vpack.c.b16 %v5229, %v5228
    %v5269 = vpack.c.b16 %v5231, %v5230
    %v5270 = vpack.c.b16 %v5233, %v5232
    %v5271 = vpack.c.b16 %v5235, %v5234
    %v5272 = vpack.c.b16 %v5237, %v5236
    %v5273 = vpack.c.b16 %v5239, %v5238
    %v5274 = vpack.c.b16 %v5241, %v5240
    %v5275 = vpack.c.b16 %v5243, %v5242
    %5308 = vmatprep.subr.bf16.mxu0 0
    %5309 = vmatpush1.bf16.msra.mxu0 %v5251
    %5310 = vmatprep.subr.bf16.mxu0 0
    %5311 = vmatpush1.bf16.msra.mxu0 %v5250
    %5312 = vmatprep.subr.bf16.mxu0 0
    %5313 = vmatpush1.bf16.msra.mxu0 %v5249
    %5314 = vmatprep.subr.bf16.mxu0 0
    %5315 = vmatpush1.bf16.msra.mxu0 %v5248
    %5316 = vmatprep.subr.bf16.mxu0 0
    %5317 = vmatpush1.bf16.msra.mxu0 %v5247
    %5318 = vmatprep.subr.bf16.mxu0 0
    %5319 = vmatpush1.bf16.msra.mxu0 %v5246
    %5320 = vmatprep.subr.bf16.mxu0 0
    %5321 = vmatpush1.bf16.msra.mxu0 %v5245
    %5322 = vmatprep.subr.bf16.mxu0 0
    %5323 = vmatpush1.bf16.msra.mxu0 %v5244
    %5324 = vmatprep.subr.bf16.mxu0 0
    %5325 = vmatpush2.bf16.msra.mxu0 %v5259
    %5326 = vmatprep.subr.bf16.mxu0 0
    %5327 = vmatpush2.bf16.msra.mxu0 %v5258
    %5328 = vmatprep.subr.bf16.mxu0 0
    %5329 = vmatpush2.bf16.msra.mxu0 %v5257
    %5330 = vmatprep.subr.bf16.mxu0 0
    %5331 = vmatpush2.bf16.msra.mxu0 %v5256
    %5332 = vmatprep.subr.bf16.mxu0 0
    %5333 = vmatpush2.bf16.msra.mxu0 %v5255
    %5334 = vmatprep.subr.bf16.mxu0 0
    %5335 = vmatpush2.bf16.msra.mxu0 %v5254
    %5336 = vmatprep.subr.bf16.mxu0 0
    %5337 = vmatpush2.bf16.msra.mxu0 %v5253
    %5338 = vmatprep.subr.bf16.mxu0 0
    %5339 = vmatpush2.bf16.msra.mxu0 %v5252
    %5340 = vmatprep.mubr.bf16.mxu0 %v5105
    %5341 = vmatmul.mubr.bf16.gmra.mxu0 %v5104
    %v5342 = vpop.f32.mrf.mxu0
    %v5343 = vadd.f32 %v5115, %v5342
    %v5344 = vpop.f32.mrf.mxu0
    %v5345 = vpop.f32.mrf.mxu0
    %v5346 = vadd.f32 %v5115, %v5345
    %v5347 = vpop.f32.mrf.mxu0
    %5348 = vmatprep.mubr.bf16.mxu0 %v5109
    %5349 = vmatmul.mubr.bf16.gmra.mxu0 %v5108
    %v5350 = vpop.f32.mrf.mxu0
    %v5351 = vadd.f32 %v5115, %v5350
    %v5352 = vpop.f32.mrf.mxu0
    %v5353 = vpop.f32.mrf.mxu0
    %v5354 = vadd.f32 %v5115, %v5353
    %v5355 = vpop.f32.mrf.mxu0
    %5356 = vdwg.mxu0
    %5357 = vmatprep.subr.bf16.mxu0 0
    %5358 = vmatpush1.bf16.msra.mxu0 %v5267
    %5359 = vmatprep.subr.bf16.mxu0 0
    %5360 = vmatpush1.bf16.msra.mxu0 %v5266
    %5361 = vmatprep.subr.bf16.mxu0 0
    %5362 = vmatpush1.bf16.msra.mxu0 %v5265
    %5363 = vmatprep.subr.bf16.mxu0 0
    %5364 = vmatpush1.bf16.msra.mxu0 %v5264
    %5365 = vmatprep.subr.bf16.mxu0 0
    %5366 = vmatpush1.bf16.msra.mxu0 %v5263
    %5367 = vmatprep.subr.bf16.mxu0 0
    %5368 = vmatpush1.bf16.msra.mxu0 %v5262
    %5369 = vmatprep.subr.bf16.mxu0 0
    %5370 = vmatpush1.bf16.msra.mxu0 %v5261
    %5371 = vmatprep.subr.bf16.mxu0 0
    %5372 = vmatpush1.bf16.msra.mxu0 %v5260
    %5373 = vmatprep.subr.bf16.mxu0 0
    %5374 = vmatpush2.bf16.msra.mxu0 %v5275
    %5375 = vmatprep.subr.bf16.mxu0 0
    %5376 = vmatpush2.bf16.msra.mxu0 %v5274
    %5377 = vmatprep.subr.bf16.mxu0 0
    %5378 = vmatpush2.bf16.msra.mxu0 %v5273
    %5379 = vmatprep.subr.bf16.mxu0 0
    %5380 = vmatpush2.bf16.msra.mxu0 %v5272
    %5381 = vmatprep.subr.bf16.mxu0 0
    %5382 = vmatpush2.bf16.msra.mxu0 %v5271
    %5383 = vmatprep.subr.bf16.mxu0 0
    %5384 = vmatpush2.bf16.msra.mxu0 %v5270
    %5385 = vmatprep.subr.bf16.mxu0 0
    %5386 = vmatpush2.bf16.msra.mxu0 %v5269
    %5387 = vmatprep.subr.bf16.mxu0 0
    %5388 = vmatpush2.bf16.msra.mxu0 %v5268
    %5389 = vmatprep.mubr.bf16.mxu0 %v5107
    %5390 = vmatmul.mubr.bf16.gmra.mxu0 %v5106
    %v5391 = vpop.f32.mrf.mxu0
    %v5392 = vadd.f32 %v5343, %v5391
    %v5393 = vpop.f32.mrf.mxu0
    %v5394 = vpop.f32.mrf.mxu0
    %v5395 = vadd.f32 %v5346, %v5394
    %v5396 = vpop.f32.mrf.mxu0
    %5397 = vmatprep.mubr.bf16.mxu0 %v5111
    %5398 = vmatmul.mubr.bf16.gmra.mxu0 %v5110
    %v5399 = vpop.f32.mrf.mxu0
    %v5400 = vadd.f32 %v5351, %v5399
    %v5401 = vpop.f32.mrf.mxu0
    %v5402 = vpop.f32.mrf.mxu0
    %v5403 = vadd.f32 %v5354, %v5402
    %v5404 = vpop.f32.mrf.mxu0
    %5405 = vdwg.mxu0
    %v5406 = vadd.f32 %v4556, %v5392
    %v5407 = vadd.f32 %v4557, %v5395
    %v5408 = vadd.f32 %v4558, %v5400
    %v5409 = vadd.f32 %v4559, %v5403
    %5410 = vadd.xlane.f32.xlu0 %v5406
    %v5411 = vpop.xlane.xlu0 %5410
    %5412 = vadd.xlane.f32.xlu0 %v5407
    %v5413 = vpop.xlane.xlu0 %5412
    %5414 = vadd.xlane.f32.xlu0 %v5408
    %v5415 = vpop.xlane.xlu0 %5414
    %5416 = vadd.xlane.f32.xlu0 %v5409
    %v5417 = vpop.xlane.xlu0 %5416
    %v5418 = vmul.f32 %v5411, %v118
    %v5419 = vmul.f32 %v5413, %v118
    %v5420 = vmul.f32 %v5415, %v118
    %v5421 = vmul.f32 %v5417, %v118
    %v5422 = vsub.f32 %v5406, %v5418
    %v5423 = vsub.f32 %v5407, %v5419
    %v5424 = vsub.f32 %v5408, %v5420
    %v5425 = vsub.f32 %v5409, %v5421
    %v5426 = vmul.f32 %v5422, %v5422
    %v5427 = vmul.f32 %v5423, %v5423
    %v5428 = vmul.f32 %v5424, %v5424
    %v5429 = vmul.f32 %v5425, %v5425
    %5430 = vadd.xlane.f32.xlu0 %v5426
    %v5431 = vpop.xlane.xlu0 %5430
    %5432 = vadd.xlane.f32.xlu0 %v5427
    %v5433 = vpop.xlane.xlu0 %5432
    %5434 = vadd.xlane.f32.xlu0 %v5428
    %v5435 = vpop.xlane.xlu0 %5434
    %5436 = vadd.xlane.f32.xlu0 %v5429
    %v5437 = vpop.xlane.xlu0 %5436
    %v5438 = vmul.f32 %v5431, %v118
    %v5439 = vmul.f32 %v5433, %v118
    %v5440 = vmul.f32 %v5435, %v118
    %v5441 = vmul.f32 %v5437, %v118
    %v5442 = vadd.f32 %v5438, 1e-06
    %v5443 = vadd.f32 %v5439, 1e-06
    %v5444 = vadd.f32 %v5440, 1e-06
    %v5445 = vadd.f32 %v5441, 1e-06
    %v5446 = vrsqrt.pop %v5442
    %v5447 = vrsqrt.pop %v5443
    %v5448 = vrsqrt.pop %v5444
    %v5449 = vrsqrt.pop %v5445
    %v5450 = vmul.f32 %v5422, %v5446
    %v5451 = vmul.f32 %v5423, %v5447
    %v5452 = vmul.f32 %v5424, %v5448
    %v5453 = vmul.f32 %v5425, %v5449
    %v5454 = vlaneseq
    %v5455 = vshrl.u32 %v5454, 7
    %v5456 = vsub.s32 2, %v5455
    %v5457 = vrot.slane %v98, %v5456
    %v5458 = vmul.f32 %v5450, %v5457
    %v5459 = vmul.f32 %v5451, %v5457
    %v5460 = vmul.f32 %v5452, %v5457
    %v5461 = vmul.f32 %v5453, %v5457
    %v5462 = vlaneseq
    %v5463 = vshrl.u32 %v5462, 7
    %v5464 = vsub.s32 3, %v5463
    %v5465 = vrot.slane %v98, %v5464
    %v5466 = vadd.f32 %v5458, %v5465
    %v5467 = vadd.f32 %v5459, %v5465
    %v5468 = vadd.f32 %v5460, %v5465
    %v5469 = vadd.f32 %v5461, %v5465
    %5470 = vst [vmem:[#allocation13] sm:$0xff] %v4432
    %5471 = vst [vmem:[#allocation13 + $0x8] sm:$0xff] %v4433
    %5472 = vst [vmem:[#allocation13 + $0x10] sm:$0xff] %v4434
    %5473 = vst [vmem:[#allocation13 + $0x18] sm:$0xff] %v4435
    %v5474 = vadd.f32 %v4440, %v5466
    %v5475 = vadd.f32 %v4441, %v5467
    %v5476 = vadd.f32 %v4442, %v5468
    %v5477 = vadd.f32 %v4443, %v5469
    %5478 = vst [vmem:[#allocation13 + $0x20] sm:$0xff] %v5474
    %5479 = vst [vmem:[#allocation13 + $0x28] sm:$0xff] %v5475
    %5480 = vst [vmem:[#allocation13 + $0x30] sm:$0xff] %v5476
    %5481 = vst [vmem:[#allocation13 + $0x38] sm:$0xff] %v5477
    // Predicated region
    $region42: #{tpu_custom_call.1} parent=1 // pred_check
      _
    $region43: #{tpu_custom_call.1} parent=1 // pred_check_branch
      %5483 = sbr.rel (0) target = $region45
    $region44: #{tpu_custom_call.1} parent=1 // pred_region
      %s5485 = ssub.s32 1024, 1024
      %5486 = vsyncadd [#allocation7], %s5485
      %s5487 = sshll.u32 [#allocation13], 4
      %s5488 = int_to_ptr.vmem [resolvable:$true] %s5487
      %5493 = dma.vmem_to_hbm [thread:$0]  %s5488, 1024, %s6, [#allocation7], 128, 128, 8
    $region45: #{tpu_custom_call.1} parent=1 // pred_fallthru
      _
    // Predicated region
    $region46: #{tpu_custom_call.1} parent=1 // pred_check
      _
    $region47: #{tpu_custom_call.1} parent=1 // pred_check_branch
      %5495 = sbr.rel (0) target = $region49
    $region48: #{tpu_custom_call.1} parent=1 // pred_region
      %5496 = dma.done [#allocation7], 1024
    $region49: #{tpu_custom_call.1} parent=1 // pred_fallthru
      _
    %5497 = vsyncpa [#allocation6], 1
    %5498 = vsyncpa [#allocation9], 1
    %5499 = vsyncpa [#allocation12], 1
    %5500 = vsyncpa [#allocation7], 1
  %5501 = vsyncmov [#allocation4]
  %s5502 = vpop.sfrf %5501
  %p5503 = scmp.eq.s32.totalorder %s5502, 0
  %p5504 = pneg %p5503
  %5506 = shalt.err (%p5504)
  %s5507 = scalar_lea.sflag [#allocation4], 1
  %5508 = vsyncmov %s5507
  %s5509 = vpop.sfrf %5508
  %p5510 = scmp.eq.s32.totalorder %s5509, 0
  %p5511 = pneg %p5510
  %5513 = shalt.err (%p5511)

</llo_original>
